<compile_context>
chip_gen: v7x
topology: tpu7x:2x2x1
jax: 0.10.0
libtpu: 0.0.40
codegen_flags: <defaults>
</compile_context>

<pallas_src>
import numpy as np
import jax
import jax.numpy as jnp
from jax import lax
from jax.experimental import pallas as pl
from jax.experimental.pallas import tpu as pltpu

# ---- model hyperparameters (small, consistent with the module) ----
B = 2            # batch
S = 8            # sequence length
D = 32           # d_model
H = 4            # nhead
DH = D // H      # head dim
DFF = 64         # dim_feedforward
NUM_LAYERS = 2
EPS = 1e-5
N = S * B        # folded row count (rows ordered (s, b))
NEG = -1e30      # additive mask value for cross-batch score entries


def _layer_norm(x, w, b):
    # x: (N, D); w, b: (1, D)  — all f32
    mu = jnp.mean(x, axis=-1, keepdims=True)
    ms = jnp.mean(x * x, axis=-1, keepdims=True)
    var = ms - mu * mu
    return (x - mu) * lax.rsqrt(var + EPS) * w + b


def encoder_kernel(
    x_ref,        # (S, B, D)   f32
    mask_ref,     # (N, N)      f32 additive same-batch mask (0 / -1e30)
    wqkv_ref,     # (L, D, 3D)  bf16  pre-transposed in_proj weight
    bqkv_ref,     # (L, 1, 3D)  f32
    wo_ref,       # (L, D, D)   bf16  pre-transposed out_proj weight
    bo_ref,       # (L, 1, D)   f32
    w1_ref,       # (L, D, DFF) bf16  pre-transposed linear1 weight
    b1_ref,       # (L, 1, DFF) f32
    w2_ref,       # (L, DFF, D) bf16  pre-transposed linear2 weight
    b2_ref,       # (L, 1, D)   f32
    n1w_ref,      # (L, 1, D)   f32
    n1b_ref,      # (L, 1, D)   f32
    n2w_ref,      # (L, 1, D)   f32
    n2b_ref,      # (L, 1, D)   f32
    out_ref,      # (S, B, D)
):
    scale = 1.0 / (DH ** 0.5)
    x = x_ref[...].astype(jnp.float32).reshape(N, D)          # rows ordered (s, b)
    mask = mask_ref[...]                                      # (N, N) f32

    for l in range(NUM_LAYERS):                               # fused layer loop (unrolled, L=2)
        # ---- multi-head self-attention ----
        # single QKV projection: bf16 MXU operands, f32 accumulate
        qkv = jnp.dot(x.astype(jnp.bfloat16), wqkv_ref[l],
                      preferred_element_type=jnp.float32) + bqkv_ref[l]   # (N, 3D) f32
        qkv_b = qkv.astype(jnp.bfloat16)                                  # one cast per layer

        ctx_heads = []
        for h in range(H):
            lo = h * DH
            qh = qkv_b[:, 0 * D + lo: 0 * D + lo + DH]        # (N, DH) bf16 lane slices
            kh = qkv_b[:, 1 * D + lo: 1 * D + lo + DH]
            vh = qkv_b[:, 2 * D + lo: 2 * D + lo + DH]

            # full (N, N) scores; cross-batch pairs masked to -1e30 -> exp underflows to 0,
            # so each row softmaxes exactly over its own batch's S keys.
            scores = lax.dot_general(
                qh, kh, (((1,), (1,)), ((), ())),
                preferred_element_type=jnp.float32) * scale + mask        # (N, N) f32
            m = jnp.max(scores, axis=-1, keepdims=True)
            e = jnp.exp(scores - m)
            inv = pl.reciprocal(jnp.sum(e, axis=-1, keepdims=True), approx=True)
            p = (e * inv).astype(jnp.bfloat16)
            ctx_heads.append(jnp.dot(p, vh,
                                     preferred_element_type=jnp.float32)) # (N, DH) f32

        # heads lane-contiguous -> ONE output projection (K = D = 32)
        ctx = jnp.concatenate(ctx_heads, axis=-1)                         # (N, D) f32
        attn = jnp.dot(ctx.astype(jnp.bfloat16), wo_ref[l],
                       preferred_element_type=jnp.float32) + bo_ref[l]

        # residual + norm1 (post-norm, PyTorch default)
        x = _layer_norm(x + attn, n1w_ref[l], n1b_ref[l])

        # ---- feed-forward: linear -> ReLU -> linear ----
        ff = jnp.dot(x.astype(jnp.bfloat16), w1_ref[l],
                     preferred_element_type=jnp.float32) + b1_ref[l]
        ff = jnp.maximum(ff, 0.0)
        ff = jnp.dot(ff.astype(jnp.bfloat16), w2_ref[l],
                     preferred_element_type=jnp.float32) + b2_ref[l]

        # residual + norm2
        x = _layer_norm(x + ff, n2w_ref[l], n2b_ref[l])

    # single lane-contiguous store of the whole (S, B, D) slab
    out_ref[...] = x.reshape(S, B, D).astype(out_ref.dtype)


def _full_spec(shape):
    zeros = (0,) * len(shape)
    return pl.BlockSpec(shape, lambda i, _z=zeros: _z)


def _batch_mask():
    # rows of the folded activation are ordered (s, b)  ->  batch id = row % B
    bid = np.arange(N) % B
    m = np.where(bid[:, None] == bid[None, :], 0.0, NEG).astype(np.float32)
    return jnp.asarray(m)


def transformer_encoder(x_sbd, params):
    """x_sbd: (S, B, D) — PyTorch nn.TransformerEncoder default layout.
    No edge transposes: the kernel consumes/produces (S, B, D) directly."""
    mask = _batch_mask()
    args = (x_sbd, mask) + tuple(params)
    in_specs = [_full_spec(a.shape) for a in args]

    return pl.pallas_call(
        encoder_kernel,
        out_shape=jax.ShapeDtypeStruct((S, B, D), x_sbd.dtype),
        grid_spec=pltpu.PrefetchScalarGridSpec(
            num_scalar_prefetch=0,
            grid=(1,),                                        # single grid step: whole problem
            in_specs=in_specs,
            out_specs=_full_spec((S, B, D)),
        ),
        compiler_params=pltpu.CompilerParams(
            dimension_semantics=("arbitrary",)),               # tiny workload, one TC
    )(*args)


def init_params(key):
    """One set of layer params (PyTorch layout), pre-transposed + bf16-cast for the kernel
    and stacked NUM_LAYERS times (deep-copied layers share identical initial values)."""
    ks = jax.random.split(key, 8)
    scale = 0.05
    wqkv = scale * jax.random.normal(ks[0], (3 * D, D), jnp.float32)   # in_proj_weight
    bqkv = scale * jax.random.normal(ks[1], (1, 3 * D), jnp.float32)
    wo = scale * jax.random.normal(ks[2], (D, D), jnp.float32)         # out_proj.weight
    bo = scale * jax.random.normal(ks[3], (1, D), jnp.float32)
    w1 = scale * jax.random.normal(ks[4], (DFF, D), jnp.float32)       # linear1.weight
    b1 = scale * jax.random.normal(ks[5], (1, DFF), jnp.float32)
    w2 = scale * jax.random.normal(ks[6], (D, DFF), jnp.float32)       # linear2.weight
    b2 = scale * jax.random.normal(ks[7], (1, D), jnp.float32)
    n1w = jnp.ones((1, D), jnp.float32)
    n1b = jnp.zeros((1, D), jnp.float32)
    n2w = jnp.ones((1, D), jnp.float32)
    n2b = jnp.zeros((1, D), jnp.float32)

    # pre-transpose once (loop-invariant) + bf16-cast the MXU weights once
    single = (
        wqkv.T.astype(jnp.bfloat16), bqkv,
        wo.T.astype(jnp.bfloat16), bo,
        w1.T.astype(jnp.bfloat16), b1,
        w2.T.astype(jnp.bfloat16), b2,
        n1w, n1b, n2w, n2b,
    )
    # stack per layer (identical values, as produced by copy.deepcopy at init)
    return tuple(jnp.stack([p] * NUM_LAYERS, axis=0) for p in single)


if __name__ == "__main__":
    key = jax.random.PRNGKey(0)
    k_x, k_p = jax.random.split(key)
    src = jax.random.normal(k_x, (S, B, D), jnp.float32)   # (seq, batch, d_model)
    params = init_params(k_p)

    out = transformer_encoder(src, params)
    out = jax.block_until_ready(out)
    assert out.shape == (S, B, D)
    assert bool(jnp.all(jnp.isfinite(out)))
    print("KERNEL_OK")
</pallas_src>

<mosaic_0001>
module attributes {stable_mosaic.version = 11 : i64} {
  func.func @encoder_kernel(%arg0: i32, %arg1: memref<8x2x32xf32, #tpu.memory_space<vmem>>, %arg2: memref<16x16xf32, #tpu.memory_space<vmem>>, %arg3: memref<2x32x96xbf16, #tpu.memory_space<vmem>>, %arg4: memref<2x1x96xf32, #tpu.memory_space<vmem>>, %arg5: memref<2x32x32xbf16, #tpu.memory_space<vmem>>, %arg6: memref<2x1x32xf32, #tpu.memory_space<vmem>>, %arg7: memref<2x32x64xbf16, #tpu.memory_space<vmem>>, %arg8: memref<2x1x64xf32, #tpu.memory_space<vmem>>, %arg9: memref<2x64x32xbf16, #tpu.memory_space<vmem>>, %arg10: memref<2x1x32xf32, #tpu.memory_space<vmem>>, %arg11: memref<2x1x32xf32, #tpu.memory_space<vmem>>, %arg12: memref<2x1x32xf32, #tpu.memory_space<vmem>>, %arg13: memref<2x1x32xf32, #tpu.memory_space<vmem>>, %arg14: memref<2x1x32xf32, #tpu.memory_space<vmem>>, %arg15: memref<8x2x32xf32, #tpu.memory_space<vmem>>) attributes {dimension_semantics = [#tpu.dimension_semantics<arbitrary>], iteration_bounds = array<i64: 1>, scalar_prefetch = 0 : i64, scratch_operands = 0 : i64, tpu.core_type = #tpu.core_type<tc>, window_params = [{pipeline_mode = #tpu.pipeline_mode<synchronous>, transform_indices = @transform_0, window_bounds = array<i64: 8, 2, 32>}, {pipeline_mode = #tpu.pipeline_mode<synchronous>, transform_indices = @transform_1, window_bounds = array<i64: 16, 16>}, {pipeline_mode = #tpu.pipeline_mode<synchronous>, transform_indices = @transform_2, window_bounds = array<i64: 2, 32, 96>}, {pipeline_mode = #tpu.pipeline_mode<synchronous>, transform_indices = @transform_3, window_bounds = array<i64: 2, 1, 96>}, {pipeline_mode = #tpu.pipeline_mode<synchronous>, transform_indices = @transform_4, window_bounds = array<i64: 2, 32, 32>}, {pipeline_mode = #tpu.pipeline_mode<synchronous>, transform_indices = @transform_5, window_bounds = array<i64: 2, 1, 32>}, {pipeline_mode = #tpu.pipeline_mode<synchronous>, transform_indices = @transform_6, window_bounds = array<i64: 2, 32, 64>}, {pipeline_mode = #tpu.pipeline_mode<synchronous>, transform_indices = @transform_7, window_bounds = array<i64: 2, 1, 64>}, {pipeline_mode = #tpu.pipeline_mode<synchronous>, transform_indices = @transform_8, window_bounds = array<i64: 2, 64, 32>}, {pipeline_mode = #tpu.pipeline_mode<synchronous>, transform_indices = @transform_9, window_bounds = array<i64: 2, 1, 32>}, {pipeline_mode = #tpu.pipeline_mode<synchronous>, transform_indices = @transform_10, window_bounds = array<i64: 2, 1, 32>}, {pipeline_mode = #tpu.pipeline_mode<synchronous>, transform_indices = @transform_11, window_bounds = array<i64: 2, 1, 32>}, {pipeline_mode = #tpu.pipeline_mode<synchronous>, transform_indices = @transform_12, window_bounds = array<i64: 2, 1, 32>}, {pipeline_mode = #tpu.pipeline_mode<synchronous>, transform_indices = @transform_13, window_bounds = array<i64: 2, 1, 32>}, {pipeline_mode = #tpu.pipeline_mode<synchronous>, transform_indices = @transform_14, window_bounds = array<i64: 8, 2, 32>}]} {
    %c0 = arith.constant 0 : index
    %c0_0 = arith.constant 0 : index
    %c0_1 = arith.constant 0 : index
    %0 = vector.load %arg1[%c0, %c0_0, %c0_1] : memref<8x2x32xf32, #tpu.memory_space<vmem>>, vector<8x2x32xf32>
    %1 = vector.shape_cast %0 : vector<8x2x32xf32> to vector<16x32xf32>
    %c0_2 = arith.constant 0 : index
    %c0_3 = arith.constant 0 : index
    %2 = vector.load %arg2[%c0_2, %c0_3] : memref<16x16xf32, #tpu.memory_space<vmem>>, vector<16x16xf32>
    %3 = arith.truncf %1 : vector<16x32xf32> to vector<16x32xbf16>
    %c0_4 = arith.constant 0 : index
    %c0_5 = arith.constant 0 : index
    %c0_6 = arith.constant 0 : index
    %4 = vector.load %arg3[%c0_4, %c0_5, %c0_6] : memref<2x32x96xbf16, #tpu.memory_space<vmem>>, vector<1x32x96xbf16>
    %5 = vector.shape_cast %4 : vector<1x32x96xbf16> to vector<32x96xbf16>
    %cst = arith.constant dense<0.000000e+00> : vector<16x96xf32>
    %6 = tpu.matmul %3, %5, %cst {dimension_numbers = #tpu.dot_dimension_numbers<[1], [0], [0], [1], [0, 0, 1, 1], [], []>} : vector<16x32xbf16>, vector<32x96xbf16>, vector<16x96xf32> -> vector<16x96xf32>
    %c0_7 = arith.constant 0 : index
    %c0_8 = arith.constant 0 : index
    %c0_9 = arith.constant 0 : index
    %7 = vector.load %arg4[%c0_7, %c0_8, %c0_9] : memref<2x1x96xf32, #tpu.memory_space<vmem>>, vector<1x1x96xf32>
    %8 = vector.shape_cast %7 : vector<1x1x96xf32> to vector<1x96xf32>
    %9 = vector.broadcast %8 : vector<1x96xf32> to vector<16x96xf32>
    %10 = arith.addf %6, %9 : vector<16x96xf32>
    %11 = arith.truncf %10 : vector<16x96xf32> to vector<16x96xbf16>
    %12 = vector.extract_strided_slice %11 {offsets = [0, 0], sizes = [16, 8], strides = [1, 1]} : vector<16x96xbf16> to vector<16x8xbf16>
    %13 = vector.extract_strided_slice %11 {offsets = [0, 32], sizes = [16, 8], strides = [1, 1]} : vector<16x96xbf16> to vector<16x8xbf16>
    %14 = vector.extract_strided_slice %11 {offsets = [0, 64], sizes = [16, 8], strides = [1, 1]} : vector<16x96xbf16> to vector<16x8xbf16>
    %cst_10 = arith.constant dense<0.000000e+00> : vector<16x16xf32>
    %15 = tpu.matmul %12, %13, %cst_10 {dimension_numbers = #tpu.dot_dimension_numbers<[1], [1], [0], [0], [0, 0, 1, 0], [], []>} : vector<16x8xbf16>, vector<16x8xbf16>, vector<16x16xf32> -> vector<16x16xf32>
    %cst_11 = arith.constant 0.353553385 : f32
    %16 = vector.broadcast %cst_11 : f32 to vector<16x16xf32>
    %17 = arith.mulf %15, %16 : vector<16x16xf32>
    %18 = arith.addf %17, %2 : vector<16x16xf32>
    %cst_12 = arith.constant dense<0xFF800000> : vector<16xf32>
    %19 = vector.multi_reduction <maximumf>, %18, %cst_12 [1] : vector<16x16xf32> to vector<16xf32>
    %20 = vector.shape_cast %19 : vector<16xf32> to vector<16x1xf32>
    %21 = vector.broadcast %20 : vector<16x1xf32> to vector<16x16xf32>
    %22 = arith.subf %18, %21 : vector<16x16xf32>
    %23 = math.exp %22 : vector<16x16xf32>
    %cst_13 = arith.constant dense<0.000000e+00> : vector<16xf32>
    %24 = vector.multi_reduction <add>, %23, %cst_13 [1] : vector<16x16xf32> to vector<16xf32>
    %25 = vector.shape_cast %24 : vector<16xf32> to vector<16x1xf32>
    %26 = tpu.reciprocal %25 {approx = true} : vector<16x1xf32> -> vector<16x1xf32>
    %27 = vector.broadcast %26 : vector<16x1xf32> to vector<16x16xf32>
    %28 = arith.mulf %23, %27 : vector<16x16xf32>
    %29 = arith.truncf %28 : vector<16x16xf32> to vector<16x16xbf16>
    %cst_14 = arith.constant dense<0.000000e+00> : vector<16x8xf32>
    %30 = tpu.matmul %29, %14, %cst_14 {dimension_numbers = #tpu.dot_dimension_numbers<[1], [0], [0], [1], [0, 0, 1, 1], [], []>} : vector<16x16xbf16>, vector<16x8xbf16>, vector<16x8xf32> -> vector<16x8xf32>
    %31 = vector.extract_strided_slice %11 {offsets = [0, 8], sizes = [16, 8], strides = [1, 1]} : vector<16x96xbf16> to vector<16x8xbf16>
    %32 = vector.extract_strided_slice %11 {offsets = [0, 40], sizes = [16, 8], strides = [1, 1]} : vector<16x96xbf16> to vector<16x8xbf16>
    %33 = vector.extract_strided_slice %11 {offsets = [0, 72], sizes = [16, 8], strides = [1, 1]} : vector<16x96xbf16> to vector<16x8xbf16>
    %cst_15 = arith.constant dense<0.000000e+00> : vector<16x16xf32>
    %34 = tpu.matmul %31, %32, %cst_15 {dimension_numbers = #tpu.dot_dimension_numbers<[1], [1], [0], [0], [0, 0, 1, 0], [], []>} : vector<16x8xbf16>, vector<16x8xbf16>, vector<16x16xf32> -> vector<16x16xf32>
    %cst_16 = arith.constant 0.353553385 : f32
    %35 = vector.broadcast %cst_16 : f32 to vector<16x16xf32>
    %36 = arith.mulf %34, %35 : vector<16x16xf32>
    %37 = arith.addf %36, %2 : vector<16x16xf32>
    %cst_17 = arith.constant dense<0xFF800000> : vector<16xf32>
    %38 = vector.multi_reduction <maximumf>, %37, %cst_17 [1] : vector<16x16xf32> to vector<16xf32>
    %39 = vector.shape_cast %38 : vector<16xf32> to vector<16x1xf32>
    %40 = vector.broadcast %39 : vector<16x1xf32> to vector<16x16xf32>
    %41 = arith.subf %37, %40 : vector<16x16xf32>
    %42 = math.exp %41 : vector<16x16xf32>
    %cst_18 = arith.constant dense<0.000000e+00> : vector<16xf32>
    %43 = vector.multi_reduction <add>, %42, %cst_18 [1] : vector<16x16xf32> to vector<16xf32>
    %44 = vector.shape_cast %43 : vector<16xf32> to vector<16x1xf32>
    %45 = tpu.reciprocal %44 {approx = true} : vector<16x1xf32> -> vector<16x1xf32>
    %46 = vector.broadcast %45 : vector<16x1xf32> to vector<16x16xf32>
    %47 = arith.mulf %42, %46 : vector<16x16xf32>
    %48 = arith.truncf %47 : vector<16x16xf32> to vector<16x16xbf16>
    %cst_19 = arith.constant dense<0.000000e+00> : vector<16x8xf32>
    %49 = tpu.matmul %48, %33, %cst_19 {dimension_numbers = #tpu.dot_dimension_numbers<[1], [0], [0], [1], [0, 0, 1, 1], [], []>} : vector<16x16xbf16>, vector<16x8xbf16>, vector<16x8xf32> -> vector<16x8xf32>
    %50 = vector.extract_strided_slice %11 {offsets = [0, 16], sizes = [16, 8], strides = [1, 1]} : vector<16x96xbf16> to vector<16x8xbf16>
    %51 = vector.extract_strided_slice %11 {offsets = [0, 48], sizes = [16, 8], strides = [1, 1]} : vector<16x96xbf16> to vector<16x8xbf16>
    %52 = vector.extract_strided_slice %11 {offsets = [0, 80], sizes = [16, 8], strides = [1, 1]} : vector<16x96xbf16> to vector<16x8xbf16>
    %cst_20 = arith.constant dense<0.000000e+00> : vector<16x16xf32>
    %53 = tpu.matmul %50, %51, %cst_20 {dimension_numbers = #tpu.dot_dimension_numbers<[1], [1], [0], [0], [0, 0, 1, 0], [], []>} : vector<16x8xbf16>, vector<16x8xbf16>, vector<16x16xf32> -> vector<16x16xf32>
    %cst_21 = arith.constant 0.353553385 : f32
    %54 = vector.broadcast %cst_21 : f32 to vector<16x16xf32>
    %55 = arith.mulf %53, %54 : vector<16x16xf32>
    %56 = arith.addf %55, %2 : vector<16x16xf32>
    %cst_22 = arith.constant dense<0xFF800000> : vector<16xf32>
    %57 = vector.multi_reduction <maximumf>, %56, %cst_22 [1] : vector<16x16xf32> to vector<16xf32>
    %58 = vector.shape_cast %57 : vector<16xf32> to vector<16x1xf32>
    %59 = vector.broadcast %58 : vector<16x1xf32> to vector<16x16xf32>
    %60 = arith.subf %56, %59 : vector<16x16xf32>
    %61 = math.exp %60 : vector<16x16xf32>
    %cst_23 = arith.constant dense<0.000000e+00> : vector<16xf32>
    %62 = vector.multi_reduction <add>, %61, %cst_23 [1] : vector<16x16xf32> to vector<16xf32>
    %63 = vector.shape_cast %62 : vector<16xf32> to vector<16x1xf32>
    %64 = tpu.reciprocal %63 {approx = true} : vector<16x1xf32> -> vector<16x1xf32>
    %65 = vector.broadcast %64 : vector<16x1xf32> to vector<16x16xf32>
    %66 = arith.mulf %61, %65 : vector<16x16xf32>
    %67 = arith.truncf %66 : vector<16x16xf32> to vector<16x16xbf16>
    %cst_24 = arith.constant dense<0.000000e+00> : vector<16x8xf32>
    %68 = tpu.matmul %67, %52, %cst_24 {dimension_numbers = #tpu.dot_dimension_numbers<[1], [0], [0], [1], [0, 0, 1, 1], [], []>} : vector<16x16xbf16>, vector<16x8xbf16>, vector<16x8xf32> -> vector<16x8xf32>
    %69 = vector.extract_strided_slice %11 {offsets = [0, 24], sizes = [16, 8], strides = [1, 1]} : vector<16x96xbf16> to vector<16x8xbf16>
    %70 = vector.extract_strided_slice %11 {offsets = [0, 56], sizes = [16, 8], strides = [1, 1]} : vector<16x96xbf16> to vector<16x8xbf16>
    %71 = vector.extract_strided_slice %11 {offsets = [0, 88], sizes = [16, 8], strides = [1, 1]} : vector<16x96xbf16> to vector<16x8xbf16>
    %cst_25 = arith.constant dense<0.000000e+00> : vector<16x16xf32>
    %72 = tpu.matmul %69, %70, %cst_25 {dimension_numbers = #tpu.dot_dimension_numbers<[1], [1], [0], [0], [0, 0, 1, 0], [], []>} : vector<16x8xbf16>, vector<16x8xbf16>, vector<16x16xf32> -> vector<16x16xf32>
    %cst_26 = arith.constant 0.353553385 : f32
    %73 = vector.broadcast %cst_26 : f32 to vector<16x16xf32>
    %74 = arith.mulf %72, %73 : vector<16x16xf32>
    %75 = arith.addf %74, %2 : vector<16x16xf32>
    %cst_27 = arith.constant dense<0xFF800000> : vector<16xf32>
    %76 = vector.multi_reduction <maximumf>, %75, %cst_27 [1] : vector<16x16xf32> to vector<16xf32>
    %77 = vector.shape_cast %76 : vector<16xf32> to vector<16x1xf32>
    %78 = vector.broadcast %77 : vector<16x1xf32> to vector<16x16xf32>
    %79 = arith.subf %75, %78 : vector<16x16xf32>
    %80 = math.exp %79 : vector<16x16xf32>
    %cst_28 = arith.constant dense<0.000000e+00> : vector<16xf32>
    %81 = vector.multi_reduction <add>, %80, %cst_28 [1] : vector<16x16xf32> to vector<16xf32>
    %82 = vector.shape_cast %81 : vector<16xf32> to vector<16x1xf32>
    %83 = tpu.reciprocal %82 {approx = true} : vector<16x1xf32> -> vector<16x1xf32>
    %84 = vector.broadcast %83 : vector<16x1xf32> to vector<16x16xf32>
    %85 = arith.mulf %80, %84 : vector<16x16xf32>
    %86 = arith.truncf %85 : vector<16x16xf32> to vector<16x16xbf16>
    %cst_29 = arith.constant dense<0.000000e+00> : vector<16x8xf32>
    %87 = tpu.matmul %86, %71, %cst_29 {dimension_numbers = #tpu.dot_dimension_numbers<[1], [0], [0], [1], [0, 0, 1, 1], [], []>} : vector<16x16xbf16>, vector<16x8xbf16>, vector<16x8xf32> -> vector<16x8xf32>
    %88 = tpu.concatenate %30, %49, %68, %87 in 1 : vector<16x8xf32>, vector<16x8xf32>, vector<16x8xf32>, vector<16x8xf32> -> vector<16x32xf32>
    %89 = arith.truncf %88 : vector<16x32xf32> to vector<16x32xbf16>
    %c0_30 = arith.constant 0 : index
    %c0_31 = arith.constant 0 : index
    %c0_32 = arith.constant 0 : index
    %90 = vector.load %arg5[%c0_30, %c0_31, %c0_32] : memref<2x32x32xbf16, #tpu.memory_space<vmem>>, vector<1x32x32xbf16>
    %91 = vector.shape_cast %90 : vector<1x32x32xbf16> to vector<32x32xbf16>
    %cst_33 = arith.constant dense<0.000000e+00> : vector<16x32xf32>
    %92 = tpu.matmul %89, %91, %cst_33 {dimension_numbers = #tpu.dot_dimension_numbers<[1], [0], [0], [1], [0, 0, 1, 1], [], []>} : vector<16x32xbf16>, vector<32x32xbf16>, vector<16x32xf32> -> vector<16x32xf32>
    %c0_34 = arith.constant 0 : index
    %c0_35 = arith.constant 0 : index
    %c0_36 = arith.constant 0 : index
    %93 = vector.load %arg6[%c0_34, %c0_35, %c0_36] : memref<2x1x32xf32, #tpu.memory_space<vmem>>, vector<1x1x32xf32>
    %94 = vector.shape_cast %93 : vector<1x1x32xf32> to vector<1x32xf32>
    %95 = vector.broadcast %94 : vector<1x32xf32> to vector<16x32xf32>
    %96 = arith.addf %92, %95 : vector<16x32xf32>
    %97 = arith.addf %1, %96 : vector<16x32xf32>
    %c0_37 = arith.constant 0 : index
    %c0_38 = arith.constant 0 : index
    %c0_39 = arith.constant 0 : index
    %98 = vector.load %arg11[%c0_37, %c0_38, %c0_39] : memref<2x1x32xf32, #tpu.memory_space<vmem>>, vector<1x1x32xf32>
    %99 = vector.shape_cast %98 : vector<1x1x32xf32> to vector<1x32xf32>
    %c0_40 = arith.constant 0 : index
    %c0_41 = arith.constant 0 : index
    %c0_42 = arith.constant 0 : index
    %100 = vector.load %arg12[%c0_40, %c0_41, %c0_42] : memref<2x1x32xf32, #tpu.memory_space<vmem>>, vector<1x1x32xf32>
    %101 = vector.shape_cast %100 : vector<1x1x32xf32> to vector<1x32xf32>
    %cst_43 = arith.constant dense<0.000000e+00> : vector<16xf32>
    %102 = vector.multi_reduction <add>, %97, %cst_43 [1] : vector<16x32xf32> to vector<16xf32>
    %103 = vector.shape_cast %102 : vector<16xf32> to vector<16x1xf32>
    %cst_44 = arith.constant 3.200000e+01 : f32
    %104 = vector.broadcast %cst_44 : f32 to vector<16x1xf32>
    %105 = arith.divf %103, %104 : vector<16x1xf32>
    %106 = arith.mulf %97, %97 : vector<16x32xf32>
    %cst_45 = arith.constant dense<0.000000e+00> : vector<16xf32>
    %107 = vector.multi_reduction <add>, %106, %cst_45 [1] : vector<16x32xf32> to vector<16xf32>
    %108 = vector.shape_cast %107 : vector<16xf32> to vector<16x1xf32>
    %cst_46 = arith.constant 3.200000e+01 : f32
    %109 = vector.broadcast %cst_46 : f32 to vector<16x1xf32>
    %110 = arith.divf %108, %109 : vector<16x1xf32>
    %111 = arith.mulf %105, %105 : vector<16x1xf32>
    %112 = arith.subf %110, %111 : vector<16x1xf32>
    %113 = vector.broadcast %105 : vector<16x1xf32> to vector<16x32xf32>
    %114 = arith.subf %97, %113 : vector<16x32xf32>
    %cst_47 = arith.constant 9.99999974E-6 : f32
    %115 = vector.broadcast %cst_47 : f32 to vector<16x1xf32>
    %116 = arith.addf %112, %115 : vector<16x1xf32>
    %117 = math.rsqrt %116 : vector<16x1xf32>
    %118 = vector.broadcast %117 : vector<16x1xf32> to vector<16x32xf32>
    %119 = arith.mulf %114, %118 : vector<16x32xf32>
    %120 = vector.broadcast %99 : vector<1x32xf32> to vector<16x32xf32>
    %121 = arith.mulf %119, %120 : vector<16x32xf32>
    %122 = vector.broadcast %101 : vector<1x32xf32> to vector<16x32xf32>
    %123 = arith.addf %121, %122 : vector<16x32xf32>
    %124 = arith.truncf %123 : vector<16x32xf32> to vector<16x32xbf16>
    %c0_48 = arith.constant 0 : index
    %c0_49 = arith.constant 0 : index
    %c0_50 = arith.constant 0 : index
    %125 = vector.load %arg7[%c0_48, %c0_49, %c0_50] : memref<2x32x64xbf16, #tpu.memory_space<vmem>>, vector<1x32x64xbf16>
    %126 = vector.shape_cast %125 : vector<1x32x64xbf16> to vector<32x64xbf16>
    %cst_51 = arith.constant dense<0.000000e+00> : vector<16x64xf32>
    %127 = tpu.matmul %124, %126, %cst_51 {dimension_numbers = #tpu.dot_dimension_numbers<[1], [0], [0], [1], [0, 0, 1, 1], [], []>} : vector<16x32xbf16>, vector<32x64xbf16>, vector<16x64xf32> -> vector<16x64xf32>
    %c0_52 = arith.constant 0 : index
    %c0_53 = arith.constant 0 : index
    %c0_54 = arith.constant 0 : index
    %128 = vector.load %arg8[%c0_52, %c0_53, %c0_54] : memref<2x1x64xf32, #tpu.memory_space<vmem>>, vector<1x1x64xf32>
    %129 = vector.shape_cast %128 : vector<1x1x64xf32> to vector<1x64xf32>
    %130 = vector.broadcast %129 : vector<1x64xf32> to vector<16x64xf32>
    %131 = arith.addf %127, %130 : vector<16x64xf32>
    %cst_55 = arith.constant 0.000000e+00 : f32
    %132 = vector.broadcast %cst_55 : f32 to vector<16x64xf32>
    %133 = arith.maximumf %131, %132 : vector<16x64xf32>
    %134 = arith.truncf %133 : vector<16x64xf32> to vector<16x64xbf16>
    %c0_56 = arith.constant 0 : index
    %c0_57 = arith.constant 0 : index
    %c0_58 = arith.constant 0 : index
    %135 = vector.load %arg9[%c0_56, %c0_57, %c0_58] : memref<2x64x32xbf16, #tpu.memory_space<vmem>>, vector<1x64x32xbf16>
    %136 = vector.shape_cast %135 : vector<1x64x32xbf16> to vector<64x32xbf16>
    %cst_59 = arith.constant dense<0.000000e+00> : vector<16x32xf32>
    %137 = tpu.matmul %134, %136, %cst_59 {dimension_numbers = #tpu.dot_dimension_numbers<[1], [0], [0], [1], [0, 0, 1, 1], [], []>} : vector<16x64xbf16>, vector<64x32xbf16>, vector<16x32xf32> -> vector<16x32xf32>
    %c0_60 = arith.constant 0 : index
    %c0_61 = arith.constant 0 : index
    %c0_62 = arith.constant 0 : index
    %138 = vector.load %arg10[%c0_60, %c0_61, %c0_62] : memref<2x1x32xf32, #tpu.memory_space<vmem>>, vector<1x1x32xf32>
    %139 = vector.shape_cast %138 : vector<1x1x32xf32> to vector<1x32xf32>
    %140 = vector.broadcast %139 : vector<1x32xf32> to vector<16x32xf32>
    %141 = arith.addf %137, %140 : vector<16x32xf32>
    %142 = arith.addf %123, %141 : vector<16x32xf32>
    %c0_63 = arith.constant 0 : index
    %c0_64 = arith.constant 0 : index
    %c0_65 = arith.constant 0 : index
    %143 = vector.load %arg13[%c0_63, %c0_64, %c0_65] : memref<2x1x32xf32, #tpu.memory_space<vmem>>, vector<1x1x32xf32>
    %144 = vector.shape_cast %143 : vector<1x1x32xf32> to vector<1x32xf32>
    %c0_66 = arith.constant 0 : index
    %c0_67 = arith.constant 0 : index
    %c0_68 = arith.constant 0 : index
    %145 = vector.load %arg14[%c0_66, %c0_67, %c0_68] : memref<2x1x32xf32, #tpu.memory_space<vmem>>, vector<1x1x32xf32>
    %146 = vector.shape_cast %145 : vector<1x1x32xf32> to vector<1x32xf32>
    %cst_69 = arith.constant dense<0.000000e+00> : vector<16xf32>
    %147 = vector.multi_reduction <add>, %142, %cst_69 [1] : vector<16x32xf32> to vector<16xf32>
    %148 = vector.shape_cast %147 : vector<16xf32> to vector<16x1xf32>
    %cst_70 = arith.constant 3.200000e+01 : f32
    %149 = vector.broadcast %cst_70 : f32 to vector<16x1xf32>
    %150 = arith.divf %148, %149 : vector<16x1xf32>
    %151 = arith.mulf %142, %142 : vector<16x32xf32>
    %cst_71 = arith.constant dense<0.000000e+00> : vector<16xf32>
    %152 = vector.multi_reduction <add>, %151, %cst_71 [1] : vector<16x32xf32> to vector<16xf32>
    %153 = vector.shape_cast %152 : vector<16xf32> to vector<16x1xf32>
    %cst_72 = arith.constant 3.200000e+01 : f32
    %154 = vector.broadcast %cst_72 : f32 to vector<16x1xf32>
    %155 = arith.divf %153, %154 : vector<16x1xf32>
    %156 = arith.mulf %150, %150 : vector<16x1xf32>
    %157 = arith.subf %155, %156 : vector<16x1xf32>
    %158 = vector.broadcast %150 : vector<16x1xf32> to vector<16x32xf32>
    %159 = arith.subf %142, %158 : vector<16x32xf32>
    %cst_73 = arith.constant 9.99999974E-6 : f32
    %160 = vector.broadcast %cst_73 : f32 to vector<16x1xf32>
    %161 = arith.addf %157, %160 : vector<16x1xf32>
    %162 = math.rsqrt %161 : vector<16x1xf32>
    %163 = vector.broadcast %162 : vector<16x1xf32> to vector<16x32xf32>
    %164 = arith.mulf %159, %163 : vector<16x32xf32>
    %165 = vector.broadcast %144 : vector<1x32xf32> to vector<16x32xf32>
    %166 = arith.mulf %164, %165 : vector<16x32xf32>
    %167 = vector.broadcast %146 : vector<1x32xf32> to vector<16x32xf32>
    %168 = arith.addf %166, %167 : vector<16x32xf32>
    %169 = arith.truncf %168 : vector<16x32xf32> to vector<16x32xbf16>
    %c1 = arith.constant 1 : index
    %c0_74 = arith.constant 0 : index
    %c0_75 = arith.constant 0 : index
    %170 = vector.load %arg3[%c1, %c0_74, %c0_75] : memref<2x32x96xbf16, #tpu.memory_space<vmem>>, vector<1x32x96xbf16>
    %171 = vector.shape_cast %170 : vector<1x32x96xbf16> to vector<32x96xbf16>
    %cst_76 = arith.constant dense<0.000000e+00> : vector<16x96xf32>
    %172 = tpu.matmul %169, %171, %cst_76 {dimension_numbers = #tpu.dot_dimension_numbers<[1], [0], [0], [1], [0, 0, 1, 1], [], []>} : vector<16x32xbf16>, vector<32x96xbf16>, vector<16x96xf32> -> vector<16x96xf32>
    %c1_77 = arith.constant 1 : index
    %c0_78 = arith.constant 0 : index
    %c0_79 = arith.constant 0 : index
    %173 = vector.load %arg4[%c1_77, %c0_78, %c0_79] : memref<2x1x96xf32, #tpu.memory_space<vmem>>, vector<1x1x96xf32>
    %174 = vector.shape_cast %173 : vector<1x1x96xf32> to vector<1x96xf32>
    %175 = vector.broadcast %174 : vector<1x96xf32> to vector<16x96xf32>
    %176 = arith.addf %172, %175 : vector<16x96xf32>
    %177 = arith.truncf %176 : vector<16x96xf32> to vector<16x96xbf16>
    %178 = vector.extract_strided_slice %177 {offsets = [0, 0], sizes = [16, 8], strides = [1, 1]} : vector<16x96xbf16> to vector<16x8xbf16>
    %179 = vector.extract_strided_slice %177 {offsets = [0, 32], sizes = [16, 8], strides = [1, 1]} : vector<16x96xbf16> to vector<16x8xbf16>
    %180 = vector.extract_strided_slice %177 {offsets = [0, 64], sizes = [16, 8], strides = [1, 1]} : vector<16x96xbf16> to vector<16x8xbf16>
    %cst_80 = arith.constant dense<0.000000e+00> : vector<16x16xf32>
    %181 = tpu.matmul %178, %179, %cst_80 {dimension_numbers = #tpu.dot_dimension_numbers<[1], [1], [0], [0], [0, 0, 1, 0], [], []>} : vector<16x8xbf16>, vector<16x8xbf16>, vector<16x16xf32> -> vector<16x16xf32>
    %cst_81 = arith.constant 0.353553385 : f32
    %182 = vector.broadcast %cst_81 : f32 to vector<16x16xf32>
    %183 = arith.mulf %181, %182 : vector<16x16xf32>
    %184 = arith.addf %183, %2 : vector<16x16xf32>
    %cst_82 = arith.constant dense<0xFF800000> : vector<16xf32>
    %185 = vector.multi_reduction <maximumf>, %184, %cst_82 [1] : vector<16x16xf32> to vector<16xf32>
    %186 = vector.shape_cast %185 : vector<16xf32> to vector<16x1xf32>
    %187 = vector.broadcast %186 : vector<16x1xf32> to vector<16x16xf32>
    %188 = arith.subf %184, %187 : vector<16x16xf32>
    %189 = math.exp %188 : vector<16x16xf32>
    %cst_83 = arith.constant dense<0.000000e+00> : vector<16xf32>
    %190 = vector.multi_reduction <add>, %189, %cst_83 [1] : vector<16x16xf32> to vector<16xf32>
    %191 = vector.shape_cast %190 : vector<16xf32> to vector<16x1xf32>
    %192 = tpu.reciprocal %191 {approx = true} : vector<16x1xf32> -> vector<16x1xf32>
    %193 = vector.broadcast %192 : vector<16x1xf32> to vector<16x16xf32>
    %194 = arith.mulf %189, %193 : vector<16x16xf32>
    %195 = arith.truncf %194 : vector<16x16xf32> to vector<16x16xbf16>
    %cst_84 = arith.constant dense<0.000000e+00> : vector<16x8xf32>
    %196 = tpu.matmul %195, %180, %cst_84 {dimension_numbers = #tpu.dot_dimension_numbers<[1], [0], [0], [1], [0, 0, 1, 1], [], []>} : vector<16x16xbf16>, vector<16x8xbf16>, vector<16x8xf32> -> vector<16x8xf32>
    %197 = vector.extract_strided_slice %177 {offsets = [0, 8], sizes = [16, 8], strides = [1, 1]} : vector<16x96xbf16> to vector<16x8xbf16>
    %198 = vector.extract_strided_slice %177 {offsets = [0, 40], sizes = [16, 8], strides = [1, 1]} : vector<16x96xbf16> to vector<16x8xbf16>
    %199 = vector.extract_strided_slice %177 {offsets = [0, 72], sizes = [16, 8], strides = [1, 1]} : vector<16x96xbf16> to vector<16x8xbf16>
    %cst_85 = arith.constant dense<0.000000e+00> : vector<16x16xf32>
    %200 = tpu.matmul %197, %198, %cst_85 {dimension_numbers = #tpu.dot_dimension_numbers<[1], [1], [0], [0], [0, 0, 1, 0], [], []>} : vector<16x8xbf16>, vector<16x8xbf16>, vector<16x16xf32> -> vector<16x16xf32>
    %cst_86 = arith.constant 0.353553385 : f32
    %201 = vector.broadcast %cst_86 : f32 to vector<16x16xf32>
    %202 = arith.mulf %200, %201 : vector<16x16xf32>
    %203 = arith.addf %202, %2 : vector<16x16xf32>
    %cst_87 = arith.constant dense<0xFF800000> : vector<16xf32>
    %204 = vector.multi_reduction <maximumf>, %203, %cst_87 [1] : vector<16x16xf32> to vector<16xf32>
    %205 = vector.shape_cast %204 : vector<16xf32> to vector<16x1xf32>
    %206 = vector.broadcast %205 : vector<16x1xf32> to vector<16x16xf32>
    %207 = arith.subf %203, %206 : vector<16x16xf32>
    %208 = math.exp %207 : vector<16x16xf32>
    %cst_88 = arith.constant dense<0.000000e+00> : vector<16xf32>
    %209 = vector.multi_reduction <add>, %208, %cst_88 [1] : vector<16x16xf32> to vector<16xf32>
    %210 = vector.shape_cast %209 : vector<16xf32> to vector<16x1xf32>
    %211 = tpu.reciprocal %210 {approx = true} : vector<16x1xf32> -> vector<16x1xf32>
    %212 = vector.broadcast %211 : vector<16x1xf32> to vector<16x16xf32>
    %213 = arith.mulf %208, %212 : vector<16x16xf32>
    %214 = arith.truncf %213 : vector<16x16xf32> to vector<16x16xbf16>
    %cst_89 = arith.constant dense<0.000000e+00> : vector<16x8xf32>
    %215 = tpu.matmul %214, %199, %cst_89 {dimension_numbers = #tpu.dot_dimension_numbers<[1], [0], [0], [1], [0, 0, 1, 1], [], []>} : vector<16x16xbf16>, vector<16x8xbf16>, vector<16x8xf32> -> vector<16x8xf32>
    %216 = vector.extract_strided_slice %177 {offsets = [0, 16], sizes = [16, 8], strides = [1, 1]} : vector<16x96xbf16> to vector<16x8xbf16>
    %217 = vector.extract_strided_slice %177 {offsets = [0, 48], sizes = [16, 8], strides = [1, 1]} : vector<16x96xbf16> to vector<16x8xbf16>
    %218 = vector.extract_strided_slice %177 {offsets = [0, 80], sizes = [16, 8], strides = [1, 1]} : vector<16x96xbf16> to vector<16x8xbf16>
    %cst_90 = arith.constant dense<0.000000e+00> : vector<16x16xf32>
    %219 = tpu.matmul %216, %217, %cst_90 {dimension_numbers = #tpu.dot_dimension_numbers<[1], [1], [0], [0], [0, 0, 1, 0], [], []>} : vector<16x8xbf16>, vector<16x8xbf16>, vector<16x16xf32> -> vector<16x16xf32>
    %cst_91 = arith.constant 0.353553385 : f32
    %220 = vector.broadcast %cst_91 : f32 to vector<16x16xf32>
    %221 = arith.mulf %219, %220 : vector<16x16xf32>
    %222 = arith.addf %221, %2 : vector<16x16xf32>
    %cst_92 = arith.constant dense<0xFF800000> : vector<16xf32>
    %223 = vector.multi_reduction <maximumf>, %222, %cst_92 [1] : vector<16x16xf32> to vector<16xf32>
    %224 = vector.shape_cast %223 : vector<16xf32> to vector<16x1xf32>
    %225 = vector.broadcast %224 : vector<16x1xf32> to vector<16x16xf32>
    %226 = arith.subf %222, %225 : vector<16x16xf32>
    %227 = math.exp %226 : vector<16x16xf32>
    %cst_93 = arith.constant dense<0.000000e+00> : vector<16xf32>
    %228 = vector.multi_reduction <add>, %227, %cst_93 [1] : vector<16x16xf32> to vector<16xf32>
    %229 = vector.shape_cast %228 : vector<16xf32> to vector<16x1xf32>
    %230 = tpu.reciprocal %229 {approx = true} : vector<16x1xf32> -> vector<16x1xf32>
    %231 = vector.broadcast %230 : vector<16x1xf32> to vector<16x16xf32>
    %232 = arith.mulf %227, %231 : vector<16x16xf32>
    %233 = arith.truncf %232 : vector<16x16xf32> to vector<16x16xbf16>
    %cst_94 = arith.constant dense<0.000000e+00> : vector<16x8xf32>
    %234 = tpu.matmul %233, %218, %cst_94 {dimension_numbers = #tpu.dot_dimension_numbers<[1], [0], [0], [1], [0, 0, 1, 1], [], []>} : vector<16x16xbf16>, vector<16x8xbf16>, vector<16x8xf32> -> vector<16x8xf32>
    %235 = vector.extract_strided_slice %177 {offsets = [0, 24], sizes = [16, 8], strides = [1, 1]} : vector<16x96xbf16> to vector<16x8xbf16>
    %236 = vector.extract_strided_slice %177 {offsets = [0, 56], sizes = [16, 8], strides = [1, 1]} : vector<16x96xbf16> to vector<16x8xbf16>
    %237 = vector.extract_strided_slice %177 {offsets = [0, 88], sizes = [16, 8], strides = [1, 1]} : vector<16x96xbf16> to vector<16x8xbf16>
    %cst_95 = arith.constant dense<0.000000e+00> : vector<16x16xf32>
    %238 = tpu.matmul %235, %236, %cst_95 {dimension_numbers = #tpu.dot_dimension_numbers<[1], [1], [0], [0], [0, 0, 1, 0], [], []>} : vector<16x8xbf16>, vector<16x8xbf16>, vector<16x16xf32> -> vector<16x16xf32>
    %cst_96 = arith.constant 0.353553385 : f32
    %239 = vector.broadcast %cst_96 : f32 to vector<16x16xf32>
    %240 = arith.mulf %238, %239 : vector<16x16xf32>
    %241 = arith.addf %240, %2 : vector<16x16xf32>
    %cst_97 = arith.constant dense<0xFF800000> : vector<16xf32>
    %242 = vector.multi_reduction <maximumf>, %241, %cst_97 [1] : vector<16x16xf32> to vector<16xf32>
    %243 = vector.shape_cast %242 : vector<16xf32> to vector<16x1xf32>
    %244 = vector.broadcast %243 : vector<16x1xf32> to vector<16x16xf32>
    %245 = arith.subf %241, %244 : vector<16x16xf32>
    %246 = math.exp %245 : vector<16x16xf32>
    %cst_98 = arith.constant dense<0.000000e+00> : vector<16xf32>
    %247 = vector.multi_reduction <add>, %246, %cst_98 [1] : vector<16x16xf32> to vector<16xf32>
    %248 = vector.shape_cast %247 : vector<16xf32> to vector<16x1xf32>
    %249 = tpu.reciprocal %248 {approx = true} : vector<16x1xf32> -> vector<16x1xf32>
    %250 = vector.broadcast %249 : vector<16x1xf32> to vector<16x16xf32>
    %251 = arith.mulf %246, %250 : vector<16x16xf32>
    %252 = arith.truncf %251 : vector<16x16xf32> to vector<16x16xbf16>
    %cst_99 = arith.constant dense<0.000000e+00> : vector<16x8xf32>
    %253 = tpu.matmul %252, %237, %cst_99 {dimension_numbers = #tpu.dot_dimension_numbers<[1], [0], [0], [1], [0, 0, 1, 1], [], []>} : vector<16x16xbf16>, vector<16x8xbf16>, vector<16x8xf32> -> vector<16x8xf32>
    %254 = tpu.concatenate %196, %215, %234, %253 in 1 : vector<16x8xf32>, vector<16x8xf32>, vector<16x8xf32>, vector<16x8xf32> -> vector<16x32xf32>
    %255 = arith.truncf %254 : vector<16x32xf32> to vector<16x32xbf16>
    %c1_100 = arith.constant 1 : index
    %c0_101 = arith.constant 0 : index
    %c0_102 = arith.constant 0 : index
    %256 = vector.load %arg5[%c1_100, %c0_101, %c0_102] : memref<2x32x32xbf16, #tpu.memory_space<vmem>>, vector<1x32x32xbf16>
    %257 = vector.shape_cast %256 : vector<1x32x32xbf16> to vector<32x32xbf16>
    %cst_103 = arith.constant dense<0.000000e+00> : vector<16x32xf32>
    %258 = tpu.matmul %255, %257, %cst_103 {dimension_numbers = #tpu.dot_dimension_numbers<[1], [0], [0], [1], [0, 0, 1, 1], [], []>} : vector<16x32xbf16>, vector<32x32xbf16>, vector<16x32xf32> -> vector<16x32xf32>
    %c1_104 = arith.constant 1 : index
    %c0_105 = arith.constant 0 : index
    %c0_106 = arith.constant 0 : index
    %259 = vector.load %arg6[%c1_104, %c0_105, %c0_106] : memref<2x1x32xf32, #tpu.memory_space<vmem>>, vector<1x1x32xf32>
    %260 = vector.shape_cast %259 : vector<1x1x32xf32> to vector<1x32xf32>
    %261 = vector.broadcast %260 : vector<1x32xf32> to vector<16x32xf32>
    %262 = arith.addf %258, %261 : vector<16x32xf32>
    %263 = arith.addf %168, %262 : vector<16x32xf32>
    %c1_107 = arith.constant 1 : index
    %c0_108 = arith.constant 0 : index
    %c0_109 = arith.constant 0 : index
    %264 = vector.load %arg11[%c1_107, %c0_108, %c0_109] : memref<2x1x32xf32, #tpu.memory_space<vmem>>, vector<1x1x32xf32>
    %265 = vector.shape_cast %264 : vector<1x1x32xf32> to vector<1x32xf32>
    %c1_110 = arith.constant 1 : index
    %c0_111 = arith.constant 0 : index
    %c0_112 = arith.constant 0 : index
    %266 = vector.load %arg12[%c1_110, %c0_111, %c0_112] : memref<2x1x32xf32, #tpu.memory_space<vmem>>, vector<1x1x32xf32>
    %267 = vector.shape_cast %266 : vector<1x1x32xf32> to vector<1x32xf32>
    %cst_113 = arith.constant dense<0.000000e+00> : vector<16xf32>
    %268 = vector.multi_reduction <add>, %263, %cst_113 [1] : vector<16x32xf32> to vector<16xf32>
    %269 = vector.shape_cast %268 : vector<16xf32> to vector<16x1xf32>
    %cst_114 = arith.constant 3.200000e+01 : f32
    %270 = vector.broadcast %cst_114 : f32 to vector<16x1xf32>
    %271 = arith.divf %269, %270 : vector<16x1xf32>
    %272 = arith.mulf %263, %263 : vector<16x32xf32>
    %cst_115 = arith.constant dense<0.000000e+00> : vector<16xf32>
    %273 = vector.multi_reduction <add>, %272, %cst_115 [1] : vector<16x32xf32> to vector<16xf32>
    %274 = vector.shape_cast %273 : vector<16xf32> to vector<16x1xf32>
    %cst_116 = arith.constant 3.200000e+01 : f32
    %275 = vector.broadcast %cst_116 : f32 to vector<16x1xf32>
    %276 = arith.divf %274, %275 : vector<16x1xf32>
    %277 = arith.mulf %271, %271 : vector<16x1xf32>
    %278 = arith.subf %276, %277 : vector<16x1xf32>
    %279 = vector.broadcast %271 : vector<16x1xf32> to vector<16x32xf32>
    %280 = arith.subf %263, %279 : vector<16x32xf32>
    %cst_117 = arith.constant 9.99999974E-6 : f32
    %281 = vector.broadcast %cst_117 : f32 to vector<16x1xf32>
    %282 = arith.addf %278, %281 : vector<16x1xf32>
    %283 = math.rsqrt %282 : vector<16x1xf32>
    %284 = vector.broadcast %283 : vector<16x1xf32> to vector<16x32xf32>
    %285 = arith.mulf %280, %284 : vector<16x32xf32>
    %286 = vector.broadcast %265 : vector<1x32xf32> to vector<16x32xf32>
    %287 = arith.mulf %285, %286 : vector<16x32xf32>
    %288 = vector.broadcast %267 : vector<1x32xf32> to vector<16x32xf32>
    %289 = arith.addf %287, %288 : vector<16x32xf32>
    %290 = arith.truncf %289 : vector<16x32xf32> to vector<16x32xbf16>
    %c1_118 = arith.constant 1 : index
    %c0_119 = arith.constant 0 : index
    %c0_120 = arith.constant 0 : index
    %291 = vector.load %arg7[%c1_118, %c0_119, %c0_120] : memref<2x32x64xbf16, #tpu.memory_space<vmem>>, vector<1x32x64xbf16>
    %292 = vector.shape_cast %291 : vector<1x32x64xbf16> to vector<32x64xbf16>
    %cst_121 = arith.constant dense<0.000000e+00> : vector<16x64xf32>
    %293 = tpu.matmul %290, %292, %cst_121 {dimension_numbers = #tpu.dot_dimension_numbers<[1], [0], [0], [1], [0, 0, 1, 1], [], []>} : vector<16x32xbf16>, vector<32x64xbf16>, vector<16x64xf32> -> vector<16x64xf32>
    %c1_122 = arith.constant 1 : index
    %c0_123 = arith.constant 0 : index
    %c0_124 = arith.constant 0 : index
    %294 = vector.load %arg8[%c1_122, %c0_123, %c0_124] : memref<2x1x64xf32, #tpu.memory_space<vmem>>, vector<1x1x64xf32>
    %295 = vector.shape_cast %294 : vector<1x1x64xf32> to vector<1x64xf32>
    %296 = vector.broadcast %295 : vector<1x64xf32> to vector<16x64xf32>
    %297 = arith.addf %293, %296 : vector<16x64xf32>
    %cst_125 = arith.constant 0.000000e+00 : f32
    %298 = vector.broadcast %cst_125 : f32 to vector<16x64xf32>
    %299 = arith.maximumf %297, %298 : vector<16x64xf32>
    %300 = arith.truncf %299 : vector<16x64xf32> to vector<16x64xbf16>
    %c1_126 = arith.constant 1 : index
    %c0_127 = arith.constant 0 : index
    %c0_128 = arith.constant 0 : index
    %301 = vector.load %arg9[%c1_126, %c0_127, %c0_128] : memref<2x64x32xbf16, #tpu.memory_space<vmem>>, vector<1x64x32xbf16>
    %302 = vector.shape_cast %301 : vector<1x64x32xbf16> to vector<64x32xbf16>
    %cst_129 = arith.constant dense<0.000000e+00> : vector<16x32xf32>
    %303 = tpu.matmul %300, %302, %cst_129 {dimension_numbers = #tpu.dot_dimension_numbers<[1], [0], [0], [1], [0, 0, 1, 1], [], []>} : vector<16x64xbf16>, vector<64x32xbf16>, vector<16x32xf32> -> vector<16x32xf32>
    %c1_130 = arith.constant 1 : index
    %c0_131 = arith.constant 0 : index
    %c0_132 = arith.constant 0 : index
    %304 = vector.load %arg10[%c1_130, %c0_131, %c0_132] : memref<2x1x32xf32, #tpu.memory_space<vmem>>, vector<1x1x32xf32>
    %305 = vector.shape_cast %304 : vector<1x1x32xf32> to vector<1x32xf32>
    %306 = vector.broadcast %305 : vector<1x32xf32> to vector<16x32xf32>
    %307 = arith.addf %303, %306 : vector<16x32xf32>
    %308 = arith.addf %289, %307 : vector<16x32xf32>
    %c1_133 = arith.constant 1 : index
    %c0_134 = arith.constant 0 : index
    %c0_135 = arith.constant 0 : index
    %309 = vector.load %arg13[%c1_133, %c0_134, %c0_135] : memref<2x1x32xf32, #tpu.memory_space<vmem>>, vector<1x1x32xf32>
    %310 = vector.shape_cast %309 : vector<1x1x32xf32> to vector<1x32xf32>
    %c1_136 = arith.constant 1 : index
    %c0_137 = arith.constant 0 : index
    %c0_138 = arith.constant 0 : index
    %311 = vector.load %arg14[%c1_136, %c0_137, %c0_138] : memref<2x1x32xf32, #tpu.memory_space<vmem>>, vector<1x1x32xf32>
    %312 = vector.shape_cast %311 : vector<1x1x32xf32> to vector<1x32xf32>
    %cst_139 = arith.constant dense<0.000000e+00> : vector<16xf32>
    %313 = vector.multi_reduction <add>, %308, %cst_139 [1] : vector<16x32xf32> to vector<16xf32>
    %314 = vector.shape_cast %313 : vector<16xf32> to vector<16x1xf32>
    %cst_140 = arith.constant 3.200000e+01 : f32
    %315 = vector.broadcast %cst_140 : f32 to vector<16x1xf32>
    %316 = arith.divf %314, %315 : vector<16x1xf32>
    %317 = arith.mulf %308, %308 : vector<16x32xf32>
    %cst_141 = arith.constant dense<0.000000e+00> : vector<16xf32>
    %318 = vector.multi_reduction <add>, %317, %cst_141 [1] : vector<16x32xf32> to vector<16xf32>
    %319 = vector.shape_cast %318 : vector<16xf32> to vector<16x1xf32>
    %cst_142 = arith.constant 3.200000e+01 : f32
    %320 = vector.broadcast %cst_142 : f32 to vector<16x1xf32>
    %321 = arith.divf %319, %320 : vector<16x1xf32>
    %322 = arith.mulf %316, %316 : vector<16x1xf32>
    %323 = arith.subf %321, %322 : vector<16x1xf32>
    %324 = vector.broadcast %316 : vector<16x1xf32> to vector<16x32xf32>
    %325 = arith.subf %308, %324 : vector<16x32xf32>
    %cst_143 = arith.constant 9.99999974E-6 : f32
    %326 = vector.broadcast %cst_143 : f32 to vector<16x1xf32>
    %327 = arith.addf %323, %326 : vector<16x1xf32>
    %328 = math.rsqrt %327 : vector<16x1xf32>
    %329 = vector.broadcast %328 : vector<16x1xf32> to vector<16x32xf32>
    %330 = arith.mulf %325, %329 : vector<16x32xf32>
    %331 = vector.broadcast %310 : vector<1x32xf32> to vector<16x32xf32>
    %332 = arith.mulf %330, %331 : vector<16x32xf32>
    %333 = vector.broadcast %312 : vector<1x32xf32> to vector<16x32xf32>
    %334 = arith.addf %332, %333 : vector<16x32xf32>
    %335 = vector.shape_cast %334 : vector<16x32xf32> to vector<8x2x32xf32>
    %c0_144 = arith.constant 0 : index
    %c0_145 = arith.constant 0 : index
    %c0_146 = arith.constant 0 : index
    %336 = vector.load %arg15[%c0_144, %c0_145, %c0_146] : memref<8x2x32xf32, #tpu.memory_space<vmem>>, vector<8x2x32xf32>
    tpu.vector_store %arg15[%c0_144, %c0_145, %c0_146], %335 {strides = array<i32>} : memref<8x2x32xf32, #tpu.memory_space<vmem>>, vector<8x2x32xf32>,
    return
  }
  func.func @transform_0(%arg0: i32) -> (i32, i32, i32) {
    %c0_i32 = arith.constant 0 : i32
    %c0_i32_0 = arith.constant 0 : i32
    %c0_i32_1 = arith.constant 0 : i32
    %c0_i32_2 = arith.constant 0 : i32
    return %c0_i32, %c0_i32_0, %c0_i32_1 : i32, i32, i32
  }
  func.func @transform_1(%arg0: i32) -> (i32, i32) {
    %c0_i32 = arith.constant 0 : i32
    %c0_i32_0 = arith.constant 0 : i32
    %c0_i32_1 = arith.constant 0 : i32
    return %c0_i32, %c0_i32_0 : i32, i32
  }
  func.func @transform_2(%arg0: i32) -> (i32, i32, i32) {
    %c0_i32 = arith.constant 0 : i32
    %c0_i32_0 = arith.constant 0 : i32
    %c0_i32_1 = arith.constant 0 : i32
    %c0_i32_2 = arith.constant 0 : i32
    return %c0_i32, %c0_i32_0, %c0_i32_1 : i32, i32, i32
  }
  func.func @transform_3(%arg0: i32) -> (i32, i32, i32) {
    %c0_i32 = arith.constant 0 : i32
    %c0_i32_0 = arith.constant 0 : i32
    %c0_i32_1 = arith.constant 0 : i32
    %c0_i32_2 = arith.constant 0 : i32
    return %c0_i32, %c0_i32_0, %c0_i32_1 : i32, i32, i32
  }
  func.func @transform_4(%arg0: i32) -> (i32, i32, i32) {
    %c0_i32 = arith.constant 0 : i32
    %c0_i32_0 = arith.constant 0 : i32
    %c0_i32_1 = arith.constant 0 : i32
    %c0_i32_2 = arith.constant 0 : i32
    return %c0_i32, %c0_i32_0, %c0_i32_1 : i32, i32, i32
  }
  func.func @transform_5(%arg0: i32) -> (i32, i32, i32) {
    %c0_i32 = arith.constant 0 : i32
    %c0_i32_0 = arith.constant 0 : i32
    %c0_i32_1 = arith.constant 0 : i32
    %c0_i32_2 = arith.constant 0 : i32
    return %c0_i32, %c0_i32_0, %c0_i32_1 : i32, i32, i32
  }
  func.func @transform_6(%arg0: i32) -> (i32, i32, i32) {
    %c0_i32 = arith.constant 0 : i32
    %c0_i32_0 = arith.constant 0 : i32
    %c0_i32_1 = arith.constant 0 : i32
    %c0_i32_2 = arith.constant 0 : i32
    return %c0_i32, %c0_i32_0, %c0_i32_1 : i32, i32, i32
  }
  func.func @transform_7(%arg0: i32) -> (i32, i32, i32) {
    %c0_i32 = arith.constant 0 : i32
    %c0_i32_0 = arith.constant 0 : i32
    %c0_i32_1 = arith.constant 0 : i32
    %c0_i32_2 = arith.constant 0 : i32
    return %c0_i32, %c0_i32_0, %c0_i32_1 : i32, i32, i32
  }
  func.func @transform_8(%arg0: i32) -> (i32, i32, i32) {
    %c0_i32 = arith.constant 0 : i32
    %c0_i32_0 = arith.constant 0 : i32
    %c0_i32_1 = arith.constant 0 : i32
    %c0_i32_2 = arith.constant 0 : i32
    return %c0_i32, %c0_i32_0, %c0_i32_1 : i32, i32, i32
  }
  func.func @transform_9(%arg0: i32) -> (i32, i32, i32) {
    %c0_i32 = arith.constant 0 : i32
    %c0_i32_0 = arith.constant 0 : i32
    %c0_i32_1 = arith.constant 0 : i32
    %c0_i32_2 = arith.constant 0 : i32
    return %c0_i32, %c0_i32_0, %c0_i32_1 : i32, i32, i32
  }
  func.func @transform_10(%arg0: i32) -> (i32, i32, i32) {
    %c0_i32 = arith.constant 0 : i32
    %c0_i32_0 = arith.constant 0 : i32
    %c0_i32_1 = arith.constant 0 : i32
    %c0_i32_2 = arith.constant 0 : i32
    return %c0_i32, %c0_i32_0, %c0_i32_1 : i32, i32, i32
  }
  func.func @transform_11(%arg0: i32) -> (i32, i32, i32) {
    %c0_i32 = arith.constant 0 : i32
    %c0_i32_0 = arith.constant 0 : i32
    %c0_i32_1 = arith.constant 0 : i32
    %c0_i32_2 = arith.constant 0 : i32
    return %c0_i32, %c0_i32_0, %c0_i32_1 : i32, i32, i32
  }
  func.func @transform_12(%arg0: i32) -> (i32, i32, i32) {
    %c0_i32 = arith.constant 0 : i32
    %c0_i32_0 = arith.constant 0 : i32
    %c0_i32_1 = arith.constant 0 : i32
    %c0_i32_2 = arith.constant 0 : i32
    return %c0_i32, %c0_i32_0, %c0_i32_1 : i32, i32, i32
  }
  func.func @transform_13(%arg0: i32) -> (i32, i32, i32) {
    %c0_i32 = arith.constant 0 : i32
    %c0_i32_0 = arith.constant 0 : i32
    %c0_i32_1 = arith.constant 0 : i32
    %c0_i32_2 = arith.constant 0 : i32
    return %c0_i32, %c0_i32_0, %c0_i32_1 : i32, i32, i32
  }
  func.func @transform_14(%arg0: i32) -> (i32, i32, i32) {
    %c0_i32 = arith.constant 0 : i32
    %c0_i32_0 = arith.constant 0 : i32
    %c0_i32_1 = arith.constant 0 : i32
    %c0_i32_2 = arith.constant 0 : i32
    return %c0_i32, %c0_i32_0, %c0_i32_1 : i32, i32, i32
  }
}

</mosaic_0001>

<llo_original>
// kernel: tpu_custom_call.1
$region0: #{tpu_custom_call.1}
  #allocation0 [shape = 'u32[]', space=smem, size = 0x4, offset = 0x4, fixed_abs, tag = 'smem constant byte address 0x4 - core index']
  #allocation1 [shape = 'u32[144,128]{1,0:T(1,128)}', space=vmem, size = 0x12000, scoped, tag = 'internal scratch']
  %s0 = inlined_call_operand.hbm [shape: f32[8,2,32], index: 0, kind: input, shape index: {}]
  %s1 = inlined_call_operand.hbm [shape: f32[16,16], index: 1, kind: input, shape index: {}]
  %s2 = inlined_call_operand.vmem [shape: bf16[2,32,96], index: 2, kind: input, shape index: {}]
  %s3 = inlined_call_operand.vmem [shape: f32[2,1,96], index: 3, kind: input, shape index: {}]
  %s4 = inlined_call_operand.vmem [shape: bf16[2,32,32], index: 4, kind: input, shape index: {}]
  %s5 = inlined_call_operand.vmem [shape: f32[2,1,32], index: 5, kind: input, shape index: {}]
  %s6 = inlined_call_operand.vmem [shape: bf16[2,32,64], index: 6, kind: input, shape index: {}]
  %s7 = inlined_call_operand.vmem [shape: f32[2,1,64], index: 7, kind: input, shape index: {}]
  %s8 = inlined_call_operand.vmem [shape: bf16[2,64,32], index: 8, kind: input, shape index: {}]
  %s9 = inlined_call_operand.vmem [shape: f32[2,1,32], index: 9, kind: input, shape index: {}]
  %s10 = inlined_call_operand.vmem [shape: f32[2,1,32], index: 10, kind: input, shape index: {}]
  %s11 = inlined_call_operand.vmem [shape: f32[2,1,32], index: 11, kind: input, shape index: {}]
  %s12 = inlined_call_operand.vmem [shape: f32[2,1,32], index: 12, kind: input, shape index: {}]
  %s13 = inlined_call_operand.vmem [shape: f32[2,1,32], index: 13, kind: input, shape index: {}]
  %s14 = inlined_call_operand.hbm [shape: f32[8,2,32], index: 14, kind: output, shape index: {}]
  %s15 = sld [smem:[#allocation0]]
  $region74: #{tpu_custom_call.1} parent=0
    _
  %s17 = ssub.s32 1, %s15
  %s18 = scalar_select 0, %s17, %s15
  $region1: #{tpu_custom_call.1} parent=0
    #allocation2 [shape = 'u8[8192]{0}', space=vmem, size = 0x2000, scoped, tag = 'input window, operand 0, single buffered']
    #allocation3 [shape = 's32[1]{0}', space=sflag, size = 0x4, scoped, tag = 'scoped memory for tpu_custom_call.1']
    #allocation4 [shape = 's32[1]{0}', space=sflag, size = 0x4, scoped, tag = 'scoped memory for tpu_custom_call.1']
    #allocation5 [shape = 'u8[8192]{0}', space=vmem, size = 0x2000, scoped, tag = 'input window, operand 1, single buffered']
    #allocation6 [shape = 's32[1]{0}', space=sflag, size = 0x4, scoped, tag = 'scoped memory for tpu_custom_call.1']
    #allocation7 [shape = 'u8[8192]{0}', space=vmem, size = 0x2000, scoped, tag = 'output window, operand 0, single buffered']
    %19 = vsyncpa [#allocation3], 0
    %20 = vsyncpa [#allocation6], 0
    %21 = vsyncpa [#allocation4], 0
    // Predicated region
    $region2: #{tpu_custom_call.1} parent=1 // pred_check
      _
    $region3: #{tpu_custom_call.1} parent=1 // pred_check_branch
      %23 = sbr.rel (0) target = $region5
    $region4: #{tpu_custom_call.1} parent=1 // pred_region
      %s25 = ssub.s32 256, 256
      %26 = vsyncadd [#allocation3], %s25
      %s27 = sshll.u32 [#allocation2], 4
      %s28 = int_to_ptr.vmem [resolvable:$true] %s27
      %33 = dma.hbm_to_vmem [thread:$0]  %s0, 256, %s28, [#allocation3], 32, 32, 2
    $region5: #{tpu_custom_call.1} parent=1 // pred_fallthru
      _
    // Predicated region
    $region6: #{tpu_custom_call.1} parent=1 // pred_check
      _
    $region7: #{tpu_custom_call.1} parent=1 // pred_check_branch
      %35 = sbr.rel (0) target = $region9
    $region8: #{tpu_custom_call.1} parent=1 // pred_region
      %s37 = ssub.s32 256, 256
      %38 = vsyncadd [#allocation6], %s37
      %s39 = sshll.u32 [#allocation5], 4
      %s40 = int_to_ptr.vmem [resolvable:$true] %s39
      %45 = dma.hbm_to_vmem [thread:$0]  %s1, 256, %s40, [#allocation6], 128, 128, 8
    $region9: #{tpu_custom_call.1} parent=1 // pred_fallthru
      _
    // Predicated region
    $region10: #{tpu_custom_call.1} parent=1 // pred_check
      _
    $region11: #{tpu_custom_call.1} parent=1 // pred_check_branch
      %47 = sbr.rel (0) target = $region13
    $region12: #{tpu_custom_call.1} parent=1 // pred_region
      _
    $region13: #{tpu_custom_call.1} parent=1 // pred_fallthru
      _
    // Predicated region
    $region14: #{tpu_custom_call.1} parent=1 // pred_check
      _
    $region15: #{tpu_custom_call.1} parent=1 // pred_check_branch
      %49 = sbr.rel (0) target = $region17
    $region16: #{tpu_custom_call.1} parent=1 // pred_region
      _
    $region17: #{tpu_custom_call.1} parent=1 // pred_fallthru
      _
    // Predicated region
    $region18: #{tpu_custom_call.1} parent=1 // pred_check
      _
    $region19: #{tpu_custom_call.1} parent=1 // pred_check_branch
      %51 = sbr.rel (0) target = $region21
    $region20: #{tpu_custom_call.1} parent=1 // pred_region
      _
    $region21: #{tpu_custom_call.1} parent=1 // pred_fallthru
      _
    // Predicated region
    $region22: #{tpu_custom_call.1} parent=1 // pred_check
      _
    $region23: #{tpu_custom_call.1} parent=1 // pred_check_branch
      %53 = sbr.rel (0) target = $region25
    $region24: #{tpu_custom_call.1} parent=1 // pred_region
      _
    $region25: #{tpu_custom_call.1} parent=1 // pred_fallthru
      _
    // Predicated region
    $region26: #{tpu_custom_call.1} parent=1 // pred_check
      _
    $region27: #{tpu_custom_call.1} parent=1 // pred_check_branch
      %55 = sbr.rel (0) target = $region29
    $region28: #{tpu_custom_call.1} parent=1 // pred_region
      _
    $region29: #{tpu_custom_call.1} parent=1 // pred_fallthru
      _
    // Predicated region
    $region30: #{tpu_custom_call.1} parent=1 // pred_check
      _
    $region31: #{tpu_custom_call.1} parent=1 // pred_check_branch
      %57 = sbr.rel (0) target = $region33
    $region32: #{tpu_custom_call.1} parent=1 // pred_region
      _
    $region33: #{tpu_custom_call.1} parent=1 // pred_fallthru
      _
    // Predicated region
    $region34: #{tpu_custom_call.1} parent=1 // pred_check
      _
    $region35: #{tpu_custom_call.1} parent=1 // pred_check_branch
      %59 = sbr.rel (0) target = $region37
    $region36: #{tpu_custom_call.1} parent=1 // pred_region
      _
    $region37: #{tpu_custom_call.1} parent=1 // pred_fallthru
      _
    // Predicated region
    $region38: #{tpu_custom_call.1} parent=1 // pred_check
      _
    $region39: #{tpu_custom_call.1} parent=1 // pred_check_branch
      %61 = sbr.rel (0) target = $region41
    $region40: #{tpu_custom_call.1} parent=1 // pred_region
      _
    $region41: #{tpu_custom_call.1} parent=1 // pred_fallthru
      _
    // Predicated region
    $region42: #{tpu_custom_call.1} parent=1 // pred_check
      _
    $region43: #{tpu_custom_call.1} parent=1 // pred_check_branch
      %63 = sbr.rel (0) target = $region45
    $region44: #{tpu_custom_call.1} parent=1 // pred_region
      _
    $region45: #{tpu_custom_call.1} parent=1 // pred_fallthru
      _
    // Predicated region
    $region46: #{tpu_custom_call.1} parent=1 // pred_check
      _
    $region47: #{tpu_custom_call.1} parent=1 // pred_check_branch
      %65 = sbr.rel (0) target = $region49
    $region48: #{tpu_custom_call.1} parent=1 // pred_region
      _
    $region49: #{tpu_custom_call.1} parent=1 // pred_fallthru
      _
    // Predicated region
    $region50: #{tpu_custom_call.1} parent=1 // pred_check
      _
    $region51: #{tpu_custom_call.1} parent=1 // pred_check_branch
      %67 = sbr.rel (0) target = $region53
    $region52: #{tpu_custom_call.1} parent=1 // pred_region
      _
    $region53: #{tpu_custom_call.1} parent=1 // pred_fallthru
      _
    // Predicated region
    $region54: #{tpu_custom_call.1} parent=1 // pred_check
      _
    $region55: #{tpu_custom_call.1} parent=1 // pred_check_branch
      %69 = sbr.rel (0) target = $region57
    $region56: #{tpu_custom_call.1} parent=1 // pred_region
      _
    $region57: #{tpu_custom_call.1} parent=1 // pred_fallthru
      _
    // Predicated region
    $region58: #{tpu_custom_call.1} parent=1 // pred_check
      _
    $region59: #{tpu_custom_call.1} parent=1 // pred_check_branch
      %71 = sbr.rel (0) target = $region61
    $region60: #{tpu_custom_call.1} parent=1 // pred_region
      %72 = dma.done [#allocation3], 256
    $region61: #{tpu_custom_call.1} parent=1 // pred_fallthru
      _
    // Predicated region
    $region62: #{tpu_custom_call.1} parent=1 // pred_check
      _
    $region63: #{tpu_custom_call.1} parent=1 // pred_check_branch
      %74 = sbr.rel (0) target = $region65
    $region64: #{tpu_custom_call.1} parent=1 // pred_region
      %75 = dma.done [#allocation6], 256
    $region65: #{tpu_custom_call.1} parent=1 // pred_fallthru
      _
    %v77 = vld [vmem:[#allocation2] sm:$0x3]
    %v78 = vld [vmem:[#allocation2 + $0x2] sm:$0x3]
    %v79 = vld [vmem:[#allocation2 + $0x4] sm:$0x3]
    %v80 = vld [vmem:[#allocation2 + $0x6] sm:$0x3]
    %v81 = vld [vmem:[#allocation2 + $0x8] sm:$0x3]
    %v82 = vld [vmem:[#allocation2 + $0xa] sm:$0x3]
    %v83 = vld [vmem:[#allocation2 + $0xc] sm:$0x3]
    %v84 = vld [vmem:[#allocation2 + $0xe] sm:$0x3]
    %v85 = vld [vmem:[#allocation5] sm:$0xff]
    %v86 = vld [vmem:[#allocation5 + $0x8] sm:$0xff]
    %v95 = vcombine.low %v77, %v78
    %v96 = vcombine.low %v79, %v80
    %v98 = vunpack.c.l.s4 1983009808
    %v99 = vunpack.c.0.s8 %v98
    %v100 = vlaneseq
    %v101 = vshrl.u32 %v100, 7
    %v102 = vsub.s32 %v99, %v101
    %v103 = vrot.slane %v95, %v102
    %v105 = vunpack.c.l.s4 1983009808
    %v106 = vunpack.c.0.s8 %v105
    %v107 = vlaneseq
    %v108 = vshrl.u32 %v107, 7
    %v109 = vsub.s32 %v106, %v108
    %v110 = vrot.slane %v96, %v109
    %v111 = vcombine.low %v103, %v110
    %v112 = vcombine.low %v81, %v82
    %v113 = vcombine.low %v83, %v84
    %v115 = vunpack.c.l.s4 1983009808
    %v116 = vunpack.c.0.s8 %v115
    %v117 = vlaneseq
    %v118 = vshrl.u32 %v117, 7
    %v119 = vsub.s32 %v116, %v118
    %v120 = vrot.slane %v112, %v119
    %v122 = vunpack.c.l.s4 1983009808
    %v123 = vunpack.c.0.s8 %v122
    %v124 = vlaneseq
    %v125 = vshrl.u32 %v124, 7
    %v126 = vsub.s32 %v123, %v125
    %v127 = vrot.slane %v113, %v126
    %v128 = vcombine.low %v120, %v127
    %v131 = vpack.c.bf16 %v128, %v111
    %v132 = vld [vmem:[%s2] sm:$0xf]
    %v133 = vld [vmem:[%s2 + $0x4] sm:$0xf]
    %v134 = vld [vmem:[%s2 + $0x8] sm:$0xf]
    %v135 = vld [vmem:[%s2 + $0xc] sm:$0xf]
    %v136 = vld [vmem:[%s3] sm:$0x1]
    %v138 = vlaneseq
    %v139 = vshrl.u32 %v138, 7
    %v140 = vsub.s32 0, %v139
    %v141 = vrot.slane %v136, %v140
    %v147 = vunpack.c.l.b16 %v132
    %v148 = vunpack.c.l.b16 %v133
    %v149 = vunpack.c.l.b16 %v134
    %v150 = vunpack.c.l.b16 %v135
    %v151 = vpack.c.b16 %v148, %v147
    %v152 = vpack.c.b16 %v150, %v149
    %vm155 = vcmask 261120
    %v157 = vsel %vm155, %v131, 0
    %159 = vmatprep.subr.bf16.mxu0 0
    %160 = vmatpush1.bf16.msra.mxu0 %v151
    %161 = vmatprep.subr.bf16.mxu0 0
    %162 = vmatpush1.bf16.msra.mxu0 %v152
    %163 = vmatprep.subr.bf16.mxu0 0
    %164 = vmatpush1.bf16.msra.mxu0 0
    %165 = vmatprep.subr.bf16.mxu0 0
    %166 = vmatpush1.bf16.msra.mxu0 0
    %167 = vmatprep.subr.bf16.mxu0 0
    %168 = vmatpush1.bf16.msra.mxu0 0
    %169 = vmatprep.subr.bf16.mxu0 0
    %170 = vmatpush1.bf16.msra.mxu0 0
    %171 = vmatprep.subr.bf16.mxu0 0
    %172 = vmatpush1.bf16.msra.mxu0 0
    %173 = vmatprep.subr.bf16.mxu0 0
    %174 = vmatpush1.bf16.msra.mxu0 0
    %175 = vmatprep.subr.bf16.mxu0 0
    %176 = vmatpush1.bf16.msra.mxu0 0
    %177 = vmatprep.subr.bf16.mxu0 0
    %178 = vmatpush1.bf16.msra.mxu0 0
    %179 = vmatprep.subr.bf16.mxu0 0
    %180 = vmatpush1.bf16.msra.mxu0 0
    %181 = vmatprep.subr.bf16.mxu0 0
    %182 = vmatpush1.bf16.msra.mxu0 0
    %183 = vmatprep.subr.bf16.mxu0 0
    %184 = vmatpush1.bf16.msra.mxu0 0
    %185 = vmatprep.subr.bf16.mxu0 0
    %186 = vmatpush1.bf16.msra.mxu0 0
    %187 = vmatprep.subr.bf16.mxu0 0
    %188 = vmatpush1.bf16.msra.mxu0 0
    %189 = vmatprep.subr.bf16.mxu0 0
    %190 = vmatpush1.bf16.msra.mxu0 0
    %191 = vmatprep.mubr.bf16.mxu0 0
    %192 = vmatmul.mubr.bf16.gmra.mrb[0].mxu0 %v157
    %v193 = vpop.f32.mrb[0].mxu0
    %v194 = vadd.f32 %v141, %v193
    %v195 = vpop.f32.mrb[0].mxu0
    %v196 = vpop.f32.mrb[0].mxu0
    %v197 = vadd.f32 %v141, %v196
    %v198 = vpop.f32.mrb[0].mxu0
    %199 = vdwg.mxu0
    %v200 = vpack.c.bf16 %v197, %v194
    %202 = vrot.lane.b32.xlu0 %v200, 96
    %v203 = vpop.permute.xlu0 %202
    %vm204 = vcmask 64512
    %v206 = vsel %vm204, %v200, 0
    %v209 = vsel %vm204, %v203, 0
    %211 = vmatprep.subr.bf16.mxu0 0
    %212 = vmatpush1.bf16.xpose.msra.mxu0 %v209
    %213 = vmatprep.subr.bf16.mxu0 0
    %214 = vmatpush1.bf16.xpose.msra.mxu0 0
    %215 = vmatprep.subr.bf16.mxu0 0
    %216 = vmatpush1.bf16.xpose.msra.mxu0 0
    %217 = vmatprep.subr.bf16.mxu0 0
    %218 = vmatpush1.bf16.xpose.msra.mxu0 0
    %219 = vmatprep.subr.bf16.mxu0 0
    %220 = vmatpush1.bf16.xpose.msra.mxu0 0
    %221 = vmatprep.subr.bf16.mxu0 0
    %222 = vmatpush1.bf16.xpose.msra.mxu0 0
    %223 = vmatprep.subr.bf16.mxu0 0
    %224 = vmatpush1.bf16.xpose.msra.mxu0 0
    %225 = vmatprep.subr.bf16.mxu0 0
    %226 = vmatpush1.bf16.xpose.msra.mxu0 0
    %227 = vmatprep.subr.bf16.mxu0 0
    %228 = vmatpush1.bf16.xpose.msra.mxu0 0
    %229 = vmatprep.subr.bf16.mxu0 0
    %230 = vmatpush1.bf16.xpose.msra.mxu0 0
    %231 = vmatprep.subr.bf16.mxu0 0
    %232 = vmatpush1.bf16.xpose.msra.mxu0 0
    %233 = vmatprep.subr.bf16.mxu0 0
    %234 = vmatpush1.bf16.xpose.msra.mxu0 0
    %235 = vmatprep.subr.bf16.mxu0 0
    %236 = vmatpush1.bf16.xpose.msra.mxu0 0
    %237 = vmatprep.subr.bf16.mxu0 0
    %238 = vmatpush1.bf16.xpose.msra.mxu0 0
    %239 = vmatprep.subr.bf16.mxu0 0
    %240 = vmatpush1.bf16.xpose.msra.mxu0 0
    %241 = vmatprep.subr.bf16.mxu0 0
    %242 = vmatpush1.bf16.xpose.msra.mxu0 0
    %243 = vmatprep.mubr.bf16.mxu0 0
    %244 = vmatmul.mubr.bf16.gmra.mrb[0].mxu0 %v206
    %v245 = vpop.f32.mrb[0].mxu0
    %v246 = vadd.f32 0.0, %v245
    %v247 = vpop.f32.mrb[0].mxu0
    %v248 = vpop.f32.mrb[0].mxu0
    %v249 = vadd.f32 0.0, %v248
    %v250 = vpop.f32.mrb[0].mxu0
    %251 = vdwg.mxu0
    %v252 = vmul.f32 %v246, 0.35355338
    %v253 = vmul.f32 %v249, 0.35355338
    %v254 = vadd.f32 %v252, %v85
    %v255 = vadd.f32 %v253, %v86
    %vm256 = vcmask 130048
    %v257 = vsel %vm256, %v254, -inf
    %258 = vmax.xlane.f32.xlu0 %v257
    %v259 = vpop.xlane.xlu0 %258
    %v260 = vsel %vm256, %v255, -inf
    %261 = vmax.xlane.f32.xlu0 %v260
    %v262 = vpop.xlane.xlu0 %261
    %v263 = vsub.f32 %v254, %v259
    %v264 = vsub.f32 %v255, %v262
    %v265 = vmul.f32 %v263, 1.442695
    %v266 = vpow.pop %v265
    %v267 = vmul.f32 %v264, 1.442695
    %v268 = vpow.pop %v267
    %v269 = vsel %vm256, %v266, 0.0
    %270 = vadd.xlane.f32.xlu0 %v269
    %v271 = vpop.xlane.xlu0 %270
    %v272 = vsel %vm256, %v268, 0.0
    %273 = vadd.xlane.f32.xlu0 %v272
    %v274 = vpop.xlane.xlu0 %273
    %v275 = vrcp.pop %v271
    %v276 = vrcp.pop %v274
    %v277 = vmul.f32 %v266, %v275
    %v278 = vmul.f32 %v268, %v276
    %v279 = vpack.c.bf16 %v278, %v277
    %280 = vrot.lane.b32.xlu0 %v200, 64
    %v281 = vpop.permute.xlu0 %280
    %v284 = vsel %vm256, %v279, 0
    %286 = vmatprep.subr.bf16.mxu0 0
    %287 = vmatpush1.bf16.msra.mxu0 %v281
    %288 = vmatprep.subr.bf16.mxu0 0
    %289 = vmatpush1.bf16.msra.mxu0 0
    %290 = vmatprep.subr.bf16.mxu0 0
    %291 = vmatpush1.bf16.msra.mxu0 0
    %292 = vmatprep.subr.bf16.mxu0 0
    %293 = vmatpush1.bf16.msra.mxu0 0
    %294 = vmatprep.subr.bf16.mxu0 0
    %295 = vmatpush1.bf16.msra.mxu0 0
    %296 = vmatprep.subr.bf16.mxu0 0
    %297 = vmatpush1.bf16.msra.mxu0 0
    %298 = vmatprep.subr.bf16.mxu0 0
    %299 = vmatpush1.bf16.msra.mxu0 0
    %300 = vmatprep.subr.bf16.mxu0 0
    %301 = vmatpush1.bf16.msra.mxu0 0
    %302 = vmatprep.subr.bf16.mxu0 0
    %303 = vmatpush1.bf16.msra.mxu0 0
    %304 = vmatprep.subr.bf16.mxu0 0
    %305 = vmatpush1.bf16.msra.mxu0 0
    %306 = vmatprep.subr.bf16.mxu0 0
    %307 = vmatpush1.bf16.msra.mxu0 0
    %308 = vmatprep.subr.bf16.mxu0 0
    %309 = vmatpush1.bf16.msra.mxu0 0
    %310 = vmatprep.subr.bf16.mxu0 0
    %311 = vmatpush1.bf16.msra.mxu0 0
    %312 = vmatprep.subr.bf16.mxu0 0
    %313 = vmatpush1.bf16.msra.mxu0 0
    %314 = vmatprep.subr.bf16.mxu0 0
    %315 = vmatpush1.bf16.msra.mxu0 0
    %316 = vmatprep.subr.bf16.mxu0 0
    %317 = vmatpush1.bf16.msra.mxu0 0
    %318 = vmatprep.mubr.bf16.mxu0 0
    %319 = vmatmul.mubr.bf16.gmra.mrb[0].mxu0 %v284
    %v320 = vpop.f32.mrb[0].mxu0
    %v321 = vadd.f32 0.0, %v320
    %v322 = vpop.f32.mrb[0].mxu0
    %v323 = vpop.f32.mrb[0].mxu0
    %v324 = vadd.f32 0.0, %v323
    %v325 = vpop.f32.mrb[0].mxu0
    %326 = vdwg.mxu0
    %327 = vrot.lane.b32.xlu0 %v200, 120
    %v328 = vpop.permute.xlu0 %327
    %329 = vrot.lane.b32.xlu0 %v200, 88
    %v330 = vpop.permute.xlu0 %329
    %v332 = vsel %vm204, %v328, 0
    %v335 = vsel %vm204, %v330, 0
    %337 = vmatprep.subr.bf16.mxu0 0
    %338 = vmatpush1.bf16.xpose.msra.mxu0 %v335
    %339 = vmatprep.subr.bf16.mxu0 0
    %340 = vmatpush1.bf16.xpose.msra.mxu0 0
    %341 = vmatprep.subr.bf16.mxu0 0
    %342 = vmatpush1.bf16.xpose.msra.mxu0 0
    %343 = vmatprep.subr.bf16.mxu0 0
    %344 = vmatpush1.bf16.xpose.msra.mxu0 0
    %345 = vmatprep.subr.bf16.mxu0 0
    %346 = vmatpush1.bf16.xpose.msra.mxu0 0
    %347 = vmatprep.subr.bf16.mxu0 0
    %348 = vmatpush1.bf16.xpose.msra.mxu0 0
    %349 = vmatprep.subr.bf16.mxu0 0
    %350 = vmatpush1.bf16.xpose.msra.mxu0 0
    %351 = vmatprep.subr.bf16.mxu0 0
    %352 = vmatpush1.bf16.xpose.msra.mxu0 0
    %353 = vmatprep.subr.bf16.mxu0 0
    %354 = vmatpush1.bf16.xpose.msra.mxu0 0
    %355 = vmatprep.subr.bf16.mxu0 0
    %356 = vmatpush1.bf16.xpose.msra.mxu0 0
    %357 = vmatprep.subr.bf16.mxu0 0
    %358 = vmatpush1.bf16.xpose.msra.mxu0 0
    %359 = vmatprep.subr.bf16.mxu0 0
    %360 = vmatpush1.bf16.xpose.msra.mxu0 0
    %361 = vmatprep.subr.bf16.mxu0 0
    %362 = vmatpush1.bf16.xpose.msra.mxu0 0
    %363 = vmatprep.subr.bf16.mxu0 0
    %364 = vmatpush1.bf16.xpose.msra.mxu0 0
    %365 = vmatprep.subr.bf16.mxu0 0
    %366 = vmatpush1.bf16.xpose.msra.mxu0 0
    %367 = vmatprep.subr.bf16.mxu0 0
    %368 = vmatpush1.bf16.xpose.msra.mxu0 0
    %369 = vmatprep.mubr.bf16.mxu0 0
    %370 = vmatmul.mubr.bf16.gmra.mrb[0].mxu0 %v332
    %v371 = vpop.f32.mrb[0].mxu0
    %v372 = vadd.f32 0.0, %v371
    %v373 = vpop.f32.mrb[0].mxu0
    %v374 = vpop.f32.mrb[0].mxu0
    %v375 = vadd.f32 0.0, %v374
    %v376 = vpop.f32.mrb[0].mxu0
    %377 = vdwg.mxu0
    %v378 = vmul.f32 %v372, 0.35355338
    %v379 = vmul.f32 %v375, 0.35355338
    %v380 = vadd.f32 %v378, %v85
    %v381 = vadd.f32 %v379, %v86
    %v382 = vsel %vm256, %v380, -inf
    %383 = vmax.xlane.f32.xlu0 %v382
    %v384 = vpop.xlane.xlu0 %383
    %v385 = vsel %vm256, %v381, -inf
    %386 = vmax.xlane.f32.xlu0 %v385
    %v387 = vpop.xlane.xlu0 %386
    %v388 = vsub.f32 %v380, %v384
    %v389 = vsub.f32 %v381, %v387
    %v390 = vmul.f32 %v388, 1.442695
    %v391 = vpow.pop %v390
    %v392 = vmul.f32 %v389, 1.442695
    %v393 = vpow.pop %v392
    %v394 = vsel %vm256, %v391, 0.0
    %395 = vadd.xlane.f32.xlu0 %v394
    %v396 = vpop.xlane.xlu0 %395
    %v397 = vsel %vm256, %v393, 0.0
    %398 = vadd.xlane.f32.xlu0 %v397
    %v399 = vpop.xlane.xlu0 %398
    %v400 = vrcp.pop %v396
    %v401 = vrcp.pop %v399
    %v402 = vmul.f32 %v391, %v400
    %v403 = vmul.f32 %v393, %v401
    %v404 = vpack.c.bf16 %v403, %v402
    %405 = vrot.lane.b32.xlu0 %v200, 56
    %v406 = vpop.permute.xlu0 %405
    %v409 = vsel %vm256, %v404, 0
    %411 = vmatprep.subr.bf16.mxu0 0
    %412 = vmatpush1.bf16.msra.mxu0 %v406
    %413 = vmatprep.subr.bf16.mxu0 0
    %414 = vmatpush1.bf16.msra.mxu0 0
    %415 = vmatprep.subr.bf16.mxu0 0
    %416 = vmatpush1.bf16.msra.mxu0 0
    %417 = vmatprep.subr.bf16.mxu0 0
    %418 = vmatpush1.bf16.msra.mxu0 0
    %419 = vmatprep.subr.bf16.mxu0 0
    %420 = vmatpush1.bf16.msra.mxu0 0
    %421 = vmatprep.subr.bf16.mxu0 0
    %422 = vmatpush1.bf16.msra.mxu0 0
    %423 = vmatprep.subr.bf16.mxu0 0
    %424 = vmatpush1.bf16.msra.mxu0 0
    %425 = vmatprep.subr.bf16.mxu0 0
    %426 = vmatpush1.bf16.msra.mxu0 0
    %427 = vmatprep.subr.bf16.mxu0 0
    %428 = vmatpush1.bf16.msra.mxu0 0
    %429 = vmatprep.subr.bf16.mxu0 0
    %430 = vmatpush1.bf16.msra.mxu0 0
    %431 = vmatprep.subr.bf16.mxu0 0
    %432 = vmatpush1.bf16.msra.mxu0 0
    %433 = vmatprep.subr.bf16.mxu0 0
    %434 = vmatpush1.bf16.msra.mxu0 0
    %435 = vmatprep.subr.bf16.mxu0 0
    %436 = vmatpush1.bf16.msra.mxu0 0
    %437 = vmatprep.subr.bf16.mxu0 0
    %438 = vmatpush1.bf16.msra.mxu0 0
    %439 = vmatprep.subr.bf16.mxu0 0
    %440 = vmatpush1.bf16.msra.mxu0 0
    %441 = vmatprep.subr.bf16.mxu0 0
    %442 = vmatpush1.bf16.msra.mxu0 0
    %443 = vmatprep.mubr.bf16.mxu0 0
    %444 = vmatmul.mubr.bf16.gmra.mrb[0].mxu0 %v409
    %v445 = vpop.f32.mrb[0].mxu0
    %v446 = vadd.f32 0.0, %v445
    %v447 = vpop.f32.mrb[0].mxu0
    %v448 = vpop.f32.mrb[0].mxu0
    %v449 = vadd.f32 0.0, %v448
    %v450 = vpop.f32.mrb[0].mxu0
    %451 = vdwg.mxu0
    %452 = vrot.lane.b32.xlu0 %v200, 112
    %v453 = vpop.permute.xlu0 %452
    %454 = vrot.lane.b32.xlu0 %v200, 80
    %v455 = vpop.permute.xlu0 %454
    %v457 = vsel %vm204, %v453, 0
    %v460 = vsel %vm204, %v455, 0
    %462 = vmatprep.subr.bf16.mxu0 0
    %463 = vmatpush1.bf16.xpose.msra.mxu0 %v460
    %464 = vmatprep.subr.bf16.mxu0 0
    %465 = vmatpush1.bf16.xpose.msra.mxu0 0
    %466 = vmatprep.subr.bf16.mxu0 0
    %467 = vmatpush1.bf16.xpose.msra.mxu0 0
    %468 = vmatprep.subr.bf16.mxu0 0
    %469 = vmatpush1.bf16.xpose.msra.mxu0 0
    %470 = vmatprep.subr.bf16.mxu0 0
    %471 = vmatpush1.bf16.xpose.msra.mxu0 0
    %472 = vmatprep.subr.bf16.mxu0 0
    %473 = vmatpush1.bf16.xpose.msra.mxu0 0
    %474 = vmatprep.subr.bf16.mxu0 0
    %475 = vmatpush1.bf16.xpose.msra.mxu0 0
    %476 = vmatprep.subr.bf16.mxu0 0
    %477 = vmatpush1.bf16.xpose.msra.mxu0 0
    %478 = vmatprep.subr.bf16.mxu0 0
    %479 = vmatpush1.bf16.xpose.msra.mxu0 0
    %480 = vmatprep.subr.bf16.mxu0 0
    %481 = vmatpush1.bf16.xpose.msra.mxu0 0
    %482 = vmatprep.subr.bf16.mxu0 0
    %483 = vmatpush1.bf16.xpose.msra.mxu0 0
    %484 = vmatprep.subr.bf16.mxu0 0
    %485 = vmatpush1.bf16.xpose.msra.mxu0 0
    %486 = vmatprep.subr.bf16.mxu0 0
    %487 = vmatpush1.bf16.xpose.msra.mxu0 0
    %488 = vmatprep.subr.bf16.mxu0 0
    %489 = vmatpush1.bf16.xpose.msra.mxu0 0
    %490 = vmatprep.subr.bf16.mxu0 0
    %491 = vmatpush1.bf16.xpose.msra.mxu0 0
    %492 = vmatprep.subr.bf16.mxu0 0
    %493 = vmatpush1.bf16.xpose.msra.mxu0 0
    %494 = vmatprep.mubr.bf16.mxu0 0
    %495 = vmatmul.mubr.bf16.gmra.mrb[0].mxu0 %v457
    %v496 = vpop.f32.mrb[0].mxu0
    %v497 = vadd.f32 0.0, %v496
    %v498 = vpop.f32.mrb[0].mxu0
    %v499 = vpop.f32.mrb[0].mxu0
    %v500 = vadd.f32 0.0, %v499
    %v501 = vpop.f32.mrb[0].mxu0
    %502 = vdwg.mxu0
    %v503 = vmul.f32 %v497, 0.35355338
    %v504 = vmul.f32 %v500, 0.35355338
    %v505 = vadd.f32 %v503, %v85
    %v506 = vadd.f32 %v504, %v86
    %v507 = vsel %vm256, %v505, -inf
    %508 = vmax.xlane.f32.xlu0 %v507
    %v509 = vpop.xlane.xlu0 %508
    %v510 = vsel %vm256, %v506, -inf
    %511 = vmax.xlane.f32.xlu0 %v510
    %v512 = vpop.xlane.xlu0 %511
    %v513 = vsub.f32 %v505, %v509
    %v514 = vsub.f32 %v506, %v512
    %v515 = vmul.f32 %v513, 1.442695
    %v516 = vpow.pop %v515
    %v517 = vmul.f32 %v514, 1.442695
    %v518 = vpow.pop %v517
    %v519 = vsel %vm256, %v516, 0.0
    %520 = vadd.xlane.f32.xlu0 %v519
    %v521 = vpop.xlane.xlu0 %520
    %v522 = vsel %vm256, %v518, 0.0
    %523 = vadd.xlane.f32.xlu0 %v522
    %v524 = vpop.xlane.xlu0 %523
    %v525 = vrcp.pop %v521
    %v526 = vrcp.pop %v524
    %v527 = vmul.f32 %v516, %v525
    %v528 = vmul.f32 %v518, %v526
    %v529 = vpack.c.bf16 %v528, %v527
    %530 = vrot.lane.b32.xlu0 %v200, 48
    %v531 = vpop.permute.xlu0 %530
    %v534 = vsel %vm256, %v529, 0
    %536 = vmatprep.subr.bf16.mxu0 0
    %537 = vmatpush1.bf16.msra.mxu0 %v531
    %538 = vmatprep.subr.bf16.mxu0 0
    %539 = vmatpush1.bf16.msra.mxu0 0
    %540 = vmatprep.subr.bf16.mxu0 0
    %541 = vmatpush1.bf16.msra.mxu0 0
    %542 = vmatprep.subr.bf16.mxu0 0
    %543 = vmatpush1.bf16.msra.mxu0 0
    %544 = vmatprep.subr.bf16.mxu0 0
    %545 = vmatpush1.bf16.msra.mxu0 0
    %546 = vmatprep.subr.bf16.mxu0 0
    %547 = vmatpush1.bf16.msra.mxu0 0
    %548 = vmatprep.subr.bf16.mxu0 0
    %549 = vmatpush1.bf16.msra.mxu0 0
    %550 = vmatprep.subr.bf16.mxu0 0
    %551 = vmatpush1.bf16.msra.mxu0 0
    %552 = vmatprep.subr.bf16.mxu0 0
    %553 = vmatpush1.bf16.msra.mxu0 0
    %554 = vmatprep.subr.bf16.mxu0 0
    %555 = vmatpush1.bf16.msra.mxu0 0
    %556 = vmatprep.subr.bf16.mxu0 0
    %557 = vmatpush1.bf16.msra.mxu0 0
    %558 = vmatprep.subr.bf16.mxu0 0
    %559 = vmatpush1.bf16.msra.mxu0 0
    %560 = vmatprep.subr.bf16.mxu0 0
    %561 = vmatpush1.bf16.msra.mxu0 0
    %562 = vmatprep.subr.bf16.mxu0 0
    %563 = vmatpush1.bf16.msra.mxu0 0
    %564 = vmatprep.subr.bf16.mxu0 0
    %565 = vmatpush1.bf16.msra.mxu0 0
    %566 = vmatprep.subr.bf16.mxu0 0
    %567 = vmatpush1.bf16.msra.mxu0 0
    %568 = vmatprep.mubr.bf16.mxu0 0
    %569 = vmatmul.mubr.bf16.gmra.mrb[0].mxu0 %v534
    %v570 = vpop.f32.mrb[0].mxu0
    %v571 = vadd.f32 0.0, %v570
    %v572 = vpop.f32.mrb[0].mxu0
    %v573 = vpop.f32.mrb[0].mxu0
    %v574 = vadd.f32 0.0, %v573
    %v575 = vpop.f32.mrb[0].mxu0
    %576 = vdwg.mxu0
    %577 = vrot.lane.b32.xlu0 %v200, 104
    %v578 = vpop.permute.xlu0 %577
    %579 = vrot.lane.b32.xlu0 %v200, 72
    %v580 = vpop.permute.xlu0 %579
    %v582 = vsel %vm204, %v578, 0
    %v585 = vsel %vm204, %v580, 0
    %587 = vmatprep.subr.bf16.mxu0 0
    %588 = vmatpush1.bf16.xpose.msra.mxu0 %v585
    %589 = vmatprep.subr.bf16.mxu0 0
    %590 = vmatpush1.bf16.xpose.msra.mxu0 0
    %591 = vmatprep.subr.bf16.mxu0 0
    %592 = vmatpush1.bf16.xpose.msra.mxu0 0
    %593 = vmatprep.subr.bf16.mxu0 0
    %594 = vmatpush1.bf16.xpose.msra.mxu0 0
    %595 = vmatprep.subr.bf16.mxu0 0
    %596 = vmatpush1.bf16.xpose.msra.mxu0 0
    %597 = vmatprep.subr.bf16.mxu0 0
    %598 = vmatpush1.bf16.xpose.msra.mxu0 0
    %599 = vmatprep.subr.bf16.mxu0 0
    %600 = vmatpush1.bf16.xpose.msra.mxu0 0
    %601 = vmatprep.subr.bf16.mxu0 0
    %602 = vmatpush1.bf16.xpose.msra.mxu0 0
    %603 = vmatprep.subr.bf16.mxu0 0
    %604 = vmatpush1.bf16.xpose.msra.mxu0 0
    %605 = vmatprep.subr.bf16.mxu0 0
    %606 = vmatpush1.bf16.xpose.msra.mxu0 0
    %607 = vmatprep.subr.bf16.mxu0 0
    %608 = vmatpush1.bf16.xpose.msra.mxu0 0
    %609 = vmatprep.subr.bf16.mxu0 0
    %610 = vmatpush1.bf16.xpose.msra.mxu0 0
    %611 = vmatprep.subr.bf16.mxu0 0
    %612 = vmatpush1.bf16.xpose.msra.mxu0 0
    %613 = vmatprep.subr.bf16.mxu0 0
    %614 = vmatpush1.bf16.xpose.msra.mxu0 0
    %615 = vmatprep.subr.bf16.mxu0 0
    %616 = vmatpush1.bf16.xpose.msra.mxu0 0
    %617 = vmatprep.subr.bf16.mxu0 0
    %618 = vmatpush1.bf16.xpose.msra.mxu0 0
    %619 = vmatprep.mubr.bf16.mxu0 0
    %620 = vmatmul.mubr.bf16.gmra.mrb[0].mxu0 %v582
    %v621 = vpop.f32.mrb[0].mxu0
    %v622 = vadd.f32 0.0, %v621
    %v623 = vpop.f32.mrb[0].mxu0
    %v624 = vpop.f32.mrb[0].mxu0
    %v625 = vadd.f32 0.0, %v624
    %v626 = vpop.f32.mrb[0].mxu0
    %627 = vdwg.mxu0
    %v628 = vmul.f32 %v622, 0.35355338
    %v629 = vmul.f32 %v625, 0.35355338
    %v630 = vadd.f32 %v628, %v85
    %v631 = vadd.f32 %v629, %v86
    %v632 = vsel %vm256, %v630, -inf
    %633 = vmax.xlane.f32.xlu0 %v632
    %v634 = vpop.xlane.xlu0 %633
    %v635 = vsel %vm256, %v631, -inf
    %636 = vmax.xlane.f32.xlu0 %v635
    %v637 = vpop.xlane.xlu0 %636
    %v638 = vsub.f32 %v630, %v634
    %v639 = vsub.f32 %v631, %v637
    %v640 = vmul.f32 %v638, 1.442695
    %v641 = vpow.pop %v640
    %v642 = vmul.f32 %v639, 1.442695
    %v643 = vpow.pop %v642
    %v644 = vsel %vm256, %v641, 0.0
    %645 = vadd.xlane.f32.xlu0 %v644
    %v646 = vpop.xlane.xlu0 %645
    %v647 = vsel %vm256, %v643, 0.0
    %648 = vadd.xlane.f32.xlu0 %v647
    %v649 = vpop.xlane.xlu0 %648
    %v650 = vrcp.pop %v646
    %v651 = vrcp.pop %v649
    %v652 = vmul.f32 %v641, %v650
    %v653 = vmul.f32 %v643, %v651
    %v654 = vpack.c.bf16 %v653, %v652
    %655 = vrot.lane.b32.xlu0 %v200, 40
    %v656 = vpop.permute.xlu0 %655
    %v659 = vsel %vm256, %v654, 0
    %661 = vmatprep.subr.bf16.mxu0 0
    %662 = vmatpush1.bf16.msra.mxu0 %v656
    %663 = vmatprep.subr.bf16.mxu0 0
    %664 = vmatpush1.bf16.msra.mxu0 0
    %665 = vmatprep.subr.bf16.mxu0 0
    %666 = vmatpush1.bf16.msra.mxu0 0
    %667 = vmatprep.subr.bf16.mxu0 0
    %668 = vmatpush1.bf16.msra.mxu0 0
    %669 = vmatprep.subr.bf16.mxu0 0
    %670 = vmatpush1.bf16.msra.mxu0 0
    %671 = vmatprep.subr.bf16.mxu0 0
    %672 = vmatpush1.bf16.msra.mxu0 0
    %673 = vmatprep.subr.bf16.mxu0 0
    %674 = vmatpush1.bf16.msra.mxu0 0
    %675 = vmatprep.subr.bf16.mxu0 0
    %676 = vmatpush1.bf16.msra.mxu0 0
    %677 = vmatprep.subr.bf16.mxu0 0
    %678 = vmatpush1.bf16.msra.mxu0 0
    %679 = vmatprep.subr.bf16.mxu0 0
    %680 = vmatpush1.bf16.msra.mxu0 0
    %681 = vmatprep.subr.bf16.mxu0 0
    %682 = vmatpush1.bf16.msra.mxu0 0
    %683 = vmatprep.subr.bf16.mxu0 0
    %684 = vmatpush1.bf16.msra.mxu0 0
    %685 = vmatprep.subr.bf16.mxu0 0
    %686 = vmatpush1.bf16.msra.mxu0 0
    %687 = vmatprep.subr.bf16.mxu0 0
    %688 = vmatpush1.bf16.msra.mxu0 0
    %689 = vmatprep.subr.bf16.mxu0 0
    %690 = vmatpush1.bf16.msra.mxu0 0
    %691 = vmatprep.subr.bf16.mxu0 0
    %692 = vmatpush1.bf16.msra.mxu0 0
    %693 = vmatprep.mubr.bf16.mxu0 0
    %694 = vmatmul.mubr.bf16.gmra.mrb[0].mxu0 %v659
    %v695 = vpop.f32.mrb[0].mxu0
    %v696 = vadd.f32 0.0, %v695
    %v697 = vpop.f32.mrb[0].mxu0
    %v698 = vpop.f32.mrb[0].mxu0
    %v699 = vadd.f32 0.0, %v698
    %v700 = vpop.f32.mrb[0].mxu0
    %701 = vdwg.mxu0
    %704 = vrot.lane.b32.xlu0 %v446, 8
    %v705 = vpop.permute.xlu0 %704
    %706 = vrot.lane.b32.xlu0 %v449, 8
    %v707 = vpop.permute.xlu0 %706
    %712 = vrot.lane.b32.xlu0 %v571, 16
    %v713 = vpop.permute.xlu0 %712
    %714 = vrot.lane.b32.xlu0 %v574, 16
    %v715 = vpop.permute.xlu0 %714
    %720 = vrot.lane.b32.xlu0 %v696, 24
    %v721 = vpop.permute.xlu0 %720
    %722 = vrot.lane.b32.xlu0 %v699, 24
    %v723 = vpop.permute.xlu0 %722
    %v726 = vsel %vm204, %v321, %v705
    %v727 = vsel %vm204, %v324, %v707
    %v728 = vsel %vm256, %v726, %v713
    %v729 = vsel %vm256, %v727, %v715
    %vm730 = vcmask 195584
    %v731 = vsel %vm730, %v728, %v721
    %v732 = vsel %vm730, %v729, %v723
    %v733 = vpack.c.bf16 %v732, %v731
    %v734 = vld [vmem:[%s4] sm:$0xf]
    %v735 = vld [vmem:[%s4 + $0x4] sm:$0xf]
    %v736 = vld [vmem:[%s4 + $0x8] sm:$0xf]
    %v737 = vld [vmem:[%s4 + $0xc] sm:$0xf]
    %v738 = vld [vmem:[%s5] sm:$0x1]
    %v740 = vlaneseq
    %v741 = vshrl.u32 %v740, 7
    %v742 = vsub.s32 0, %v741
    %v743 = vrot.slane %v738, %v742
    %v749 = vunpack.c.l.b16 %v734
    %v750 = vunpack.c.l.b16 %v735
    %v751 = vunpack.c.l.b16 %v736
    %v752 = vunpack.c.l.b16 %v737
    %v753 = vpack.c.b16 %v750, %v749
    %v754 = vpack.c.b16 %v752, %v751
    %v758 = vsel %vm155, %v733, 0
    %760 = vmatprep.subr.bf16.mxu0 0
    %761 = vmatpush1.bf16.msra.mxu0 %v753
    %762 = vmatprep.subr.bf16.mxu0 0
    %763 = vmatpush1.bf16.msra.mxu0 %v754
    %764 = vmatprep.subr.bf16.mxu0 0
    %765 = vmatpush1.bf16.msra.mxu0 0
    %766 = vmatprep.subr.bf16.mxu0 0
    %767 = vmatpush1.bf16.msra.mxu0 0
    %768 = vmatprep.subr.bf16.mxu0 0
    %769 = vmatpush1.bf16.msra.mxu0 0
    %770 = vmatprep.subr.bf16.mxu0 0
    %771 = vmatpush1.bf16.msra.mxu0 0
    %772 = vmatprep.subr.bf16.mxu0 0
    %773 = vmatpush1.bf16.msra.mxu0 0
    %774 = vmatprep.subr.bf16.mxu0 0
    %775 = vmatpush1.bf16.msra.mxu0 0
    %776 = vmatprep.subr.bf16.mxu0 0
    %777 = vmatpush1.bf16.msra.mxu0 0
    %778 = vmatprep.subr.bf16.mxu0 0
    %779 = vmatpush1.bf16.msra.mxu0 0
    %780 = vmatprep.subr.bf16.mxu0 0
    %781 = vmatpush1.bf16.msra.mxu0 0
    %782 = vmatprep.subr.bf16.mxu0 0
    %783 = vmatpush1.bf16.msra.mxu0 0
    %784 = vmatprep.subr.bf16.mxu0 0
    %785 = vmatpush1.bf16.msra.mxu0 0
    %786 = vmatprep.subr.bf16.mxu0 0
    %787 = vmatpush1.bf16.msra.mxu0 0
    %788 = vmatprep.subr.bf16.mxu0 0
    %789 = vmatpush1.bf16.msra.mxu0 0
    %790 = vmatprep.subr.bf16.mxu0 0
    %791 = vmatpush1.bf16.msra.mxu0 0
    %792 = vmatprep.mubr.bf16.mxu0 0
    %793 = vmatmul.mubr.bf16.gmra.mrb[0].mxu0 %v758
    %v794 = vpop.f32.mrb[0].mxu0
    %v795 = vadd.f32 %v743, %v794
    %v796 = vpop.f32.mrb[0].mxu0
    %v797 = vpop.f32.mrb[0].mxu0
    %v798 = vadd.f32 %v743, %v797
    %v799 = vpop.f32.mrb[0].mxu0
    %800 = vdwg.mxu0
    %v803 = vcombine.high %v795, %v795
    %v805 = vunpack.c.l.s4 1983009808
    %v806 = vunpack.c.0.s8 %v805
    %v807 = vlaneseq
    %v808 = vshrl.u32 %v807, 7
    %v809 = vsub.s32 %v806, %v808
    %v810 = vrot.slane %v795, %v809
    %v812 = vunpack.c.l.s4 1983009808
    %v813 = vunpack.c.0.s8 %v812
    %v814 = vlaneseq
    %v815 = vshrl.u32 %v814, 7
    %v816 = vsub.s32 %v813, %v815
    %v817 = vrot.slane %v803, %v816
    %v818 = vcombine.high %v810, %v810
    %v819 = vcombine.high %v817, %v817
    %v820 = vcombine.high %v798, %v798
    %v822 = vunpack.c.l.s4 1983009808
    %v823 = vunpack.c.0.s8 %v822
    %v824 = vlaneseq
    %v825 = vshrl.u32 %v824, 7
    %v826 = vsub.s32 %v823, %v825
    %v827 = vrot.slane %v798, %v826
    %v829 = vunpack.c.l.s4 1983009808
    %v830 = vunpack.c.0.s8 %v829
    %v831 = vlaneseq
    %v832 = vshrl.u32 %v831, 7
    %v833 = vsub.s32 %v830, %v832
    %v834 = vrot.slane %v820, %v833
    %v835 = vcombine.high %v827, %v827
    %v836 = vcombine.high %v834, %v834
    %v845 = vadd.f32 %v77, %v810
    %v846 = vadd.f32 %v78, %v818
    %v847 = vadd.f32 %v79, %v817
    %v848 = vadd.f32 %v80, %v819
    %v849 = vadd.f32 %v81, %v827
    %v850 = vadd.f32 %v82, %v835
    %v851 = vadd.f32 %v83, %v834
    %v852 = vadd.f32 %v84, %v836
    %v853 = vld [vmem:[%s10] sm:$0x1]
    %v854 = vld [vmem:[%s11] sm:$0x1]
    %v863 = vcombine.low %v845, %v846
    %v864 = vcombine.low %v847, %v848
    %v866 = vunpack.c.l.s4 1983009808
    %v867 = vunpack.c.0.s8 %v866
    %v868 = vlaneseq
    %v869 = vshrl.u32 %v868, 7
    %v870 = vsub.s32 %v867, %v869
    %v871 = vrot.slane %v863, %v870
    %v873 = vunpack.c.l.s4 1983009808
    %v874 = vunpack.c.0.s8 %v873
    %v875 = vlaneseq
    %v876 = vshrl.u32 %v875, 7
    %v877 = vsub.s32 %v874, %v876
    %v878 = vrot.slane %v864, %v877
    %v879 = vcombine.low %v871, %v878
    %v880 = vcombine.low %v849, %v850
    %v881 = vcombine.low %v851, %v852
    %v883 = vunpack.c.l.s4 1983009808
    %v884 = vunpack.c.0.s8 %v883
    %v885 = vlaneseq
    %v886 = vshrl.u32 %v885, 7
    %v887 = vsub.s32 %v884, %v886
    %v888 = vrot.slane %v880, %v887
    %v890 = vunpack.c.l.s4 1983009808
    %v891 = vunpack.c.0.s8 %v890
    %v892 = vlaneseq
    %v893 = vshrl.u32 %v892, 7
    %v894 = vsub.s32 %v891, %v893
    %v895 = vrot.slane %v881, %v894
    %v896 = vcombine.low %v888, %v895
    %v899 = vsel %vm155, %v879, 0.0
    %900 = vadd.xlane.f32.xlu0 %v899
    %v901 = vpop.xlane.xlu0 %900
    %v902 = vsel %vm155, %v896, 0.0
    %903 = vadd.xlane.f32.xlu0 %v902
    %v904 = vpop.xlane.xlu0 %903
    %v905 = vrcp.pop 32.0
    %v906 = vmul.f32 %v901, %v905
    %v907 = vmul.f32 %v904, %v905
    %v908 = vmul.f32 %v845, %v845
    %v909 = vmul.f32 %v846, %v846
    %v910 = vmul.f32 %v847, %v847
    %v911 = vmul.f32 %v848, %v848
    %v912 = vmul.f32 %v849, %v849
    %v913 = vmul.f32 %v850, %v850
    %v914 = vmul.f32 %v851, %v851
    %v915 = vmul.f32 %v852, %v852
    %v924 = vcombine.low %v908, %v909
    %v925 = vcombine.low %v910, %v911
    %v927 = vunpack.c.l.s4 1983009808
    %v928 = vunpack.c.0.s8 %v927
    %v929 = vlaneseq
    %v930 = vshrl.u32 %v929, 7
    %v931 = vsub.s32 %v928, %v930
    %v932 = vrot.slane %v924, %v931
    %v934 = vunpack.c.l.s4 1983009808
    %v935 = vunpack.c.0.s8 %v934
    %v936 = vlaneseq
    %v937 = vshrl.u32 %v936, 7
    %v938 = vsub.s32 %v935, %v937
    %v939 = vrot.slane %v925, %v938
    %v940 = vcombine.low %v932, %v939
    %v941 = vcombine.low %v912, %v913
    %v942 = vcombine.low %v914, %v915
    %v944 = vunpack.c.l.s4 1983009808
    %v945 = vunpack.c.0.s8 %v944
    %v946 = vlaneseq
    %v947 = vshrl.u32 %v946, 7
    %v948 = vsub.s32 %v945, %v947
    %v949 = vrot.slane %v941, %v948
    %v951 = vunpack.c.l.s4 1983009808
    %v952 = vunpack.c.0.s8 %v951
    %v953 = vlaneseq
    %v954 = vshrl.u32 %v953, 7
    %v955 = vsub.s32 %v952, %v954
    %v956 = vrot.slane %v942, %v955
    %v957 = vcombine.low %v949, %v956
    %v960 = vsel %vm155, %v940, 0.0
    %961 = vadd.xlane.f32.xlu0 %v960
    %v962 = vpop.xlane.xlu0 %961
    %v963 = vsel %vm155, %v957, 0.0
    %964 = vadd.xlane.f32.xlu0 %v963
    %v965 = vpop.xlane.xlu0 %964
    %v966 = vmul.f32 %v962, %v905
    %v967 = vmul.f32 %v965, %v905
    %v968 = vmul.f32 %v906, %v906
    %v969 = vmul.f32 %v907, %v907
    %v970 = vsub.f32 %v966, %v968
    %v971 = vsub.f32 %v967, %v969
    %v975 = vunpack.c.l.s4 269488144
    %v976 = vunpack.c.0.s8 %v975
    %v977 = vlaneseq
    %v978 = vshrl.u32 %v977, 7
    %v979 = vsub.s32 %v976, %v978
    %v980 = vrot.slane %v906, %v979
    %v982 = vunpack.c.l.s4 842150450
    %v983 = vunpack.c.0.s8 %v982
    %v984 = vlaneseq
    %v985 = vshrl.u32 %v984, 7
    %v986 = vsub.s32 %v983, %v985
    %v987 = vrot.slane %v906, %v986
    %v989 = vunpack.c.l.s4 1414812756
    %v990 = vunpack.c.0.s8 %v989
    %v991 = vlaneseq
    %v992 = vshrl.u32 %v991, 7
    %v993 = vsub.s32 %v990, %v992
    %v994 = vrot.slane %v906, %v993
    %v996 = vunpack.c.l.s4 1987475062
    %v997 = vunpack.c.0.s8 %v996
    %v998 = vlaneseq
    %v999 = vshrl.u32 %v998, 7
    %v1000 = vsub.s32 %v997, %v999
    %v1001 = vrot.slane %v906, %v1000
    %v1003 = vunpack.c.l.s4 269488144
    %v1004 = vunpack.c.0.s8 %v1003
    %v1005 = vlaneseq
    %v1006 = vshrl.u32 %v1005, 7
    %v1007 = vsub.s32 %v1004, %v1006
    %v1008 = vrot.slane %v907, %v1007
    %v1010 = vunpack.c.l.s4 842150450
    %v1011 = vunpack.c.0.s8 %v1010
    %v1012 = vlaneseq
    %v1013 = vshrl.u32 %v1012, 7
    %v1014 = vsub.s32 %v1011, %v1013
    %v1015 = vrot.slane %v907, %v1014
    %v1017 = vunpack.c.l.s4 1414812756
    %v1018 = vunpack.c.0.s8 %v1017
    %v1019 = vlaneseq
    %v1020 = vshrl.u32 %v1019, 7
    %v1021 = vsub.s32 %v1018, %v1020
    %v1022 = vrot.slane %v907, %v1021
    %v1024 = vunpack.c.l.s4 1987475062
    %v1025 = vunpack.c.0.s8 %v1024
    %v1026 = vlaneseq
    %v1027 = vshrl.u32 %v1026, 7
    %v1028 = vsub.s32 %v1025, %v1027
    %v1029 = vrot.slane %v907, %v1028
    %v1038 = vsub.f32 %v845, %v980
    %v1039 = vsub.f32 %v846, %v987
    %v1040 = vsub.f32 %v847, %v994
    %v1041 = vsub.f32 %v848, %v1001
    %v1042 = vsub.f32 %v849, %v1008
    %v1043 = vsub.f32 %v850, %v1015
    %v1044 = vsub.f32 %v851, %v1022
    %v1045 = vsub.f32 %v852, %v1029
    %v1046 = vadd.f32 %v970, 1e-05
    %v1047 = vadd.f32 %v971, 1e-05
    %v1048 = vrsqrt.pop %v1046
    %v1049 = vrsqrt.pop %v1047
    %v1053 = vunpack.c.l.s4 269488144
    %v1054 = vunpack.c.0.s8 %v1053
    %v1055 = vlaneseq
    %v1056 = vshrl.u32 %v1055, 7
    %v1057 = vsub.s32 %v1054, %v1056
    %v1058 = vrot.slane %v1048, %v1057
    %v1060 = vunpack.c.l.s4 842150450
    %v1061 = vunpack.c.0.s8 %v1060
    %v1062 = vlaneseq
    %v1063 = vshrl.u32 %v1062, 7
    %v1064 = vsub.s32 %v1061, %v1063
    %v1065 = vrot.slane %v1048, %v1064
    %v1067 = vunpack.c.l.s4 1414812756
    %v1068 = vunpack.c.0.s8 %v1067
    %v1069 = vlaneseq
    %v1070 = vshrl.u32 %v1069, 7
    %v1071 = vsub.s32 %v1068, %v1070
    %v1072 = vrot.slane %v1048, %v1071
    %v1074 = vunpack.c.l.s4 1987475062
    %v1075 = vunpack.c.0.s8 %v1074
    %v1076 = vlaneseq
    %v1077 = vshrl.u32 %v1076, 7
    %v1078 = vsub.s32 %v1075, %v1077
    %v1079 = vrot.slane %v1048, %v1078
    %v1081 = vunpack.c.l.s4 269488144
    %v1082 = vunpack.c.0.s8 %v1081
    %v1083 = vlaneseq
    %v1084 = vshrl.u32 %v1083, 7
    %v1085 = vsub.s32 %v1082, %v1084
    %v1086 = vrot.slane %v1049, %v1085
    %v1088 = vunpack.c.l.s4 842150450
    %v1089 = vunpack.c.0.s8 %v1088
    %v1090 = vlaneseq
    %v1091 = vshrl.u32 %v1090, 7
    %v1092 = vsub.s32 %v1089, %v1091
    %v1093 = vrot.slane %v1049, %v1092
    %v1095 = vunpack.c.l.s4 1414812756
    %v1096 = vunpack.c.0.s8 %v1095
    %v1097 = vlaneseq
    %v1098 = vshrl.u32 %v1097, 7
    %v1099 = vsub.s32 %v1096, %v1098
    %v1100 = vrot.slane %v1049, %v1099
    %v1102 = vunpack.c.l.s4 1987475062
    %v1103 = vunpack.c.0.s8 %v1102
    %v1104 = vlaneseq
    %v1105 = vshrl.u32 %v1104, 7
    %v1106 = vsub.s32 %v1103, %v1105
    %v1107 = vrot.slane %v1049, %v1106
    %v1116 = vmul.f32 %v1038, %v1058
    %v1117 = vmul.f32 %v1039, %v1065
    %v1118 = vmul.f32 %v1040, %v1072
    %v1119 = vmul.f32 %v1041, %v1079
    %v1120 = vmul.f32 %v1042, %v1086
    %v1121 = vmul.f32 %v1043, %v1093
    %v1122 = vmul.f32 %v1044, %v1100
    %v1123 = vmul.f32 %v1045, %v1107
    %v1125 = vlaneseq
    %v1126 = vshrl.u32 %v1125, 7
    %v1127 = vsub.s32 0, %v1126
    %v1128 = vrot.slane %v853, %v1127
    %v1129 = vcombine.high %v1128, %v1128
    %v1131 = vunpack.c.l.s4 1983009808
    %v1132 = vunpack.c.0.s8 %v1131
    %v1133 = vlaneseq
    %v1134 = vshrl.u32 %v1133, 7
    %v1135 = vsub.s32 %v1132, %v1134
    %v1136 = vrot.slane %v1128, %v1135
    %v1138 = vunpack.c.l.s4 1983009808
    %v1139 = vunpack.c.0.s8 %v1138
    %v1140 = vlaneseq
    %v1141 = vshrl.u32 %v1140, 7
    %v1142 = vsub.s32 %v1139, %v1141
    %v1143 = vrot.slane %v1129, %v1142
    %v1144 = vcombine.high %v1136, %v1136
    %v1145 = vcombine.high %v1143, %v1143
    %v1150 = vmul.f32 %v1116, %v1136
    %v1151 = vmul.f32 %v1117, %v1144
    %v1152 = vmul.f32 %v1118, %v1143
    %v1153 = vmul.f32 %v1119, %v1145
    %v1154 = vmul.f32 %v1120, %v1136
    %v1155 = vmul.f32 %v1121, %v1144
    %v1156 = vmul.f32 %v1122, %v1143
    %v1157 = vmul.f32 %v1123, %v1145
    %v1159 = vlaneseq
    %v1160 = vshrl.u32 %v1159, 7
    %v1161 = vsub.s32 0, %v1160
    %v1162 = vrot.slane %v854, %v1161
    %v1163 = vcombine.high %v1162, %v1162
    %v1165 = vunpack.c.l.s4 1983009808
    %v1166 = vunpack.c.0.s8 %v1165
    %v1167 = vlaneseq
    %v1168 = vshrl.u32 %v1167, 7
    %v1169 = vsub.s32 %v1166, %v1168
    %v1170 = vrot.slane %v1162, %v1169
    %v1172 = vunpack.c.l.s4 1983009808
    %v1173 = vunpack.c.0.s8 %v1172
    %v1174 = vlaneseq
    %v1175 = vshrl.u32 %v1174, 7
    %v1176 = vsub.s32 %v1173, %v1175
    %v1177 = vrot.slane %v1163, %v1176
    %v1178 = vcombine.high %v1170, %v1170
    %v1179 = vcombine.high %v1177, %v1177
    %v1184 = vadd.f32 %v1150, %v1170
    %v1185 = vadd.f32 %v1151, %v1178
    %v1186 = vadd.f32 %v1152, %v1177
    %v1187 = vadd.f32 %v1153, %v1179
    %v1188 = vadd.f32 %v1154, %v1170
    %v1189 = vadd.f32 %v1155, %v1178
    %v1190 = vadd.f32 %v1156, %v1177
    %v1191 = vadd.f32 %v1157, %v1179
    %v1200 = vcombine.low %v1184, %v1185
    %v1201 = vcombine.low %v1186, %v1187
    %v1203 = vunpack.c.l.s4 1983009808
    %v1204 = vunpack.c.0.s8 %v1203
    %v1205 = vlaneseq
    %v1206 = vshrl.u32 %v1205, 7
    %v1207 = vsub.s32 %v1204, %v1206
    %v1208 = vrot.slane %v1200, %v1207
    %v1210 = vunpack.c.l.s4 1983009808
    %v1211 = vunpack.c.0.s8 %v1210
    %v1212 = vlaneseq
    %v1213 = vshrl.u32 %v1212, 7
    %v1214 = vsub.s32 %v1211, %v1213
    %v1215 = vrot.slane %v1201, %v1214
    %v1216 = vcombine.low %v1208, %v1215
    %v1217 = vcombine.low %v1188, %v1189
    %v1218 = vcombine.low %v1190, %v1191
    %v1220 = vunpack.c.l.s4 1983009808
    %v1221 = vunpack.c.0.s8 %v1220
    %v1222 = vlaneseq
    %v1223 = vshrl.u32 %v1222, 7
    %v1224 = vsub.s32 %v1221, %v1223
    %v1225 = vrot.slane %v1217, %v1224
    %v1227 = vunpack.c.l.s4 1983009808
    %v1228 = vunpack.c.0.s8 %v1227
    %v1229 = vlaneseq
    %v1230 = vshrl.u32 %v1229, 7
    %v1231 = vsub.s32 %v1228, %v1230
    %v1232 = vrot.slane %v1218, %v1231
    %v1233 = vcombine.low %v1225, %v1232
    %v1236 = vpack.c.bf16 %v1233, %v1216
    %v1237 = vld [vmem:[%s6] sm:$0xf]
    %v1238 = vld [vmem:[%s6 + $0x4] sm:$0xf]
    %v1239 = vld [vmem:[%s6 + $0x8] sm:$0xf]
    %v1240 = vld [vmem:[%s6 + $0xc] sm:$0xf]
    %v1241 = vld [vmem:[%s7] sm:$0x1]
    %v1243 = vlaneseq
    %v1244 = vshrl.u32 %v1243, 7
    %v1245 = vsub.s32 0, %v1244
    %v1246 = vrot.slane %v1241, %v1245
    %v1252 = vunpack.c.l.b16 %v1237
    %v1253 = vunpack.c.l.b16 %v1238
    %v1254 = vunpack.c.l.b16 %v1239
    %v1255 = vunpack.c.l.b16 %v1240
    %v1256 = vpack.c.b16 %v1253, %v1252
    %v1257 = vpack.c.b16 %v1255, %v1254
    %v1261 = vsel %vm155, %v1236, 0
    %1263 = vmatprep.subr.bf16.mxu0 0
    %1264 = vmatpush1.bf16.msra.mxu0 %v1256
    %1265 = vmatprep.subr.bf16.mxu0 0
    %1266 = vmatpush1.bf16.msra.mxu0 %v1257
    %1267 = vmatprep.subr.bf16.mxu0 0
    %1268 = vmatpush1.bf16.msra.mxu0 0
    %1269 = vmatprep.subr.bf16.mxu0 0
    %1270 = vmatpush1.bf16.msra.mxu0 0
    %1271 = vmatprep.subr.bf16.mxu0 0
    %1272 = vmatpush1.bf16.msra.mxu0 0
    %1273 = vmatprep.subr.bf16.mxu0 0
    %1274 = vmatpush1.bf16.msra.mxu0 0
    %1275 = vmatprep.subr.bf16.mxu0 0
    %1276 = vmatpush1.bf16.msra.mxu0 0
    %1277 = vmatprep.subr.bf16.mxu0 0
    %1278 = vmatpush1.bf16.msra.mxu0 0
    %1279 = vmatprep.subr.bf16.mxu0 0
    %1280 = vmatpush1.bf16.msra.mxu0 0
    %1281 = vmatprep.subr.bf16.mxu0 0
    %1282 = vmatpush1.bf16.msra.mxu0 0
    %1283 = vmatprep.subr.bf16.mxu0 0
    %1284 = vmatpush1.bf16.msra.mxu0 0
    %1285 = vmatprep.subr.bf16.mxu0 0
    %1286 = vmatpush1.bf16.msra.mxu0 0
    %1287 = vmatprep.subr.bf16.mxu0 0
    %1288 = vmatpush1.bf16.msra.mxu0 0
    %1289 = vmatprep.subr.bf16.mxu0 0
    %1290 = vmatpush1.bf16.msra.mxu0 0
    %1291 = vmatprep.subr.bf16.mxu0 0
    %1292 = vmatpush1.bf16.msra.mxu0 0
    %1293 = vmatprep.subr.bf16.mxu0 0
    %1294 = vmatpush1.bf16.msra.mxu0 0
    %1295 = vmatprep.mubr.bf16.mxu0 0
    %1296 = vmatmul.mubr.bf16.gmra.mrb[0].mxu0 %v1261
    %v1297 = vpop.f32.mrb[0].mxu0
    %v1298 = vadd.f32 %v1246, %v1297
    %v1299 = vpop.f32.mrb[0].mxu0
    %v1300 = vpop.f32.mrb[0].mxu0
    %v1301 = vadd.f32 %v1246, %v1300
    %v1302 = vpop.f32.mrb[0].mxu0
    %1303 = vdwg.mxu0
    %v1304 = vmax.f32 %v1298, 0.0
    %v1305 = vmax.f32 %v1301, 0.0
    %v1306 = vpack.c.bf16 %v1305, %v1304
    %v1307 = vld [vmem:[%s8] sm:$0xf]
    %v1308 = vld [vmem:[%s8 + $0x4] sm:$0xf]
    %v1309 = vld [vmem:[%s8 + $0x8] sm:$0xf]
    %v1310 = vld [vmem:[%s8 + $0xc] sm:$0xf]
    %v1311 = vld [vmem:[%s8 + $0x10] sm:$0xf]
    %v1312 = vld [vmem:[%s8 + $0x14] sm:$0xf]
    %v1313 = vld [vmem:[%s8 + $0x18] sm:$0xf]
    %v1314 = vld [vmem:[%s8 + $0x1c] sm:$0xf]
    %v1315 = vld [vmem:[%s9] sm:$0x1]
    %v1317 = vlaneseq
    %v1318 = vshrl.u32 %v1317, 7
    %v1319 = vsub.s32 0, %v1318
    %v1320 = vrot.slane %v1315, %v1319
    %v1330 = vunpack.c.l.b16 %v1307
    %v1331 = vunpack.c.l.b16 %v1308
    %v1332 = vunpack.c.l.b16 %v1309
    %v1333 = vunpack.c.l.b16 %v1310
    %v1334 = vunpack.c.l.b16 %v1311
    %v1335 = vunpack.c.l.b16 %v1312
    %v1336 = vunpack.c.l.b16 %v1313
    %v1337 = vunpack.c.l.b16 %v1314
    %v1338 = vpack.c.b16 %v1331, %v1330
    %v1339 = vpack.c.b16 %v1333, %v1332
    %v1340 = vpack.c.b16 %v1335, %v1334
    %v1341 = vpack.c.b16 %v1337, %v1336
    %vm1346 = vcmask 523264
    %v1348 = vsel %vm1346, %v1306, 0
    %1350 = vmatprep.subr.bf16.mxu0 0
    %1351 = vmatpush1.bf16.msra.mxu0 %v1338
    %1352 = vmatprep.subr.bf16.mxu0 0
    %1353 = vmatpush1.bf16.msra.mxu0 %v1339
    %1354 = vmatprep.subr.bf16.mxu0 0
    %1355 = vmatpush1.bf16.msra.mxu0 %v1340
    %1356 = vmatprep.subr.bf16.mxu0 0
    %1357 = vmatpush1.bf16.msra.mxu0 %v1341
    %1358 = vmatprep.subr.bf16.mxu0 0
    %1359 = vmatpush1.bf16.msra.mxu0 0
    %1360 = vmatprep.subr.bf16.mxu0 0
    %1361 = vmatpush1.bf16.msra.mxu0 0
    %1362 = vmatprep.subr.bf16.mxu0 0
    %1363 = vmatpush1.bf16.msra.mxu0 0
    %1364 = vmatprep.subr.bf16.mxu0 0
    %1365 = vmatpush1.bf16.msra.mxu0 0
    %1366 = vmatprep.subr.bf16.mxu0 0
    %1367 = vmatpush1.bf16.msra.mxu0 0
    %1368 = vmatprep.subr.bf16.mxu0 0
    %1369 = vmatpush1.bf16.msra.mxu0 0
    %1370 = vmatprep.subr.bf16.mxu0 0
    %1371 = vmatpush1.bf16.msra.mxu0 0
    %1372 = vmatprep.subr.bf16.mxu0 0
    %1373 = vmatpush1.bf16.msra.mxu0 0
    %1374 = vmatprep.subr.bf16.mxu0 0
    %1375 = vmatpush1.bf16.msra.mxu0 0
    %1376 = vmatprep.subr.bf16.mxu0 0
    %1377 = vmatpush1.bf16.msra.mxu0 0
    %1378 = vmatprep.subr.bf16.mxu0 0
    %1379 = vmatpush1.bf16.msra.mxu0 0
    %1380 = vmatprep.subr.bf16.mxu0 0
    %1381 = vmatpush1.bf16.msra.mxu0 0
    %1382 = vmatprep.mubr.bf16.mxu0 0
    %1383 = vmatmul.mubr.bf16.gmra.mrb[0].mxu0 %v1348
    %v1384 = vpop.f32.mrb[0].mxu0
    %v1385 = vadd.f32 %v1320, %v1384
    %v1386 = vpop.f32.mrb[0].mxu0
    %v1387 = vpop.f32.mrb[0].mxu0
    %v1388 = vadd.f32 %v1320, %v1387
    %v1389 = vpop.f32.mrb[0].mxu0
    %1390 = vdwg.mxu0
    %v1393 = vcombine.high %v1385, %v1385
    %v1395 = vunpack.c.l.s4 1983009808
    %v1396 = vunpack.c.0.s8 %v1395
    %v1397 = vlaneseq
    %v1398 = vshrl.u32 %v1397, 7
    %v1399 = vsub.s32 %v1396, %v1398
    %v1400 = vrot.slane %v1385, %v1399
    %v1402 = vunpack.c.l.s4 1983009808
    %v1403 = vunpack.c.0.s8 %v1402
    %v1404 = vlaneseq
    %v1405 = vshrl.u32 %v1404, 7
    %v1406 = vsub.s32 %v1403, %v1405
    %v1407 = vrot.slane %v1393, %v1406
    %v1408 = vcombine.high %v1400, %v1400
    %v1409 = vcombine.high %v1407, %v1407
    %v1410 = vcombine.high %v1388, %v1388
    %v1412 = vunpack.c.l.s4 1983009808
    %v1413 = vunpack.c.0.s8 %v1412
    %v1414 = vlaneseq
    %v1415 = vshrl.u32 %v1414, 7
    %v1416 = vsub.s32 %v1413, %v1415
    %v1417 = vrot.slane %v1388, %v1416
    %v1419 = vunpack.c.l.s4 1983009808
    %v1420 = vunpack.c.0.s8 %v1419
    %v1421 = vlaneseq
    %v1422 = vshrl.u32 %v1421, 7
    %v1423 = vsub.s32 %v1420, %v1422
    %v1424 = vrot.slane %v1410, %v1423
    %v1425 = vcombine.high %v1417, %v1417
    %v1426 = vcombine.high %v1424, %v1424
    %v1435 = vadd.f32 %v1184, %v1400
    %v1436 = vadd.f32 %v1185, %v1408
    %v1437 = vadd.f32 %v1186, %v1407
    %v1438 = vadd.f32 %v1187, %v1409
    %v1439 = vadd.f32 %v1188, %v1417
    %v1440 = vadd.f32 %v1189, %v1425
    %v1441 = vadd.f32 %v1190, %v1424
    %v1442 = vadd.f32 %v1191, %v1426
    %v1443 = vld [vmem:[%s12] sm:$0x1]
    %v1444 = vld [vmem:[%s13] sm:$0x1]
    %v1453 = vcombine.low %v1435, %v1436
    %v1454 = vcombine.low %v1437, %v1438
    %v1456 = vunpack.c.l.s4 1983009808
    %v1457 = vunpack.c.0.s8 %v1456
    %v1458 = vlaneseq
    %v1459 = vshrl.u32 %v1458, 7
    %v1460 = vsub.s32 %v1457, %v1459
    %v1461 = vrot.slane %v1453, %v1460
    %v1463 = vunpack.c.l.s4 1983009808
    %v1464 = vunpack.c.0.s8 %v1463
    %v1465 = vlaneseq
    %v1466 = vshrl.u32 %v1465, 7
    %v1467 = vsub.s32 %v1464, %v1466
    %v1468 = vrot.slane %v1454, %v1467
    %v1469 = vcombine.low %v1461, %v1468
    %v1470 = vcombine.low %v1439, %v1440
    %v1471 = vcombine.low %v1441, %v1442
    %v1473 = vunpack.c.l.s4 1983009808
    %v1474 = vunpack.c.0.s8 %v1473
    %v1475 = vlaneseq
    %v1476 = vshrl.u32 %v1475, 7
    %v1477 = vsub.s32 %v1474, %v1476
    %v1478 = vrot.slane %v1470, %v1477
    %v1480 = vunpack.c.l.s4 1983009808
    %v1481 = vunpack.c.0.s8 %v1480
    %v1482 = vlaneseq
    %v1483 = vshrl.u32 %v1482, 7
    %v1484 = vsub.s32 %v1481, %v1483
    %v1485 = vrot.slane %v1471, %v1484
    %v1486 = vcombine.low %v1478, %v1485
    %v1489 = vsel %vm155, %v1469, 0.0
    %1490 = vadd.xlane.f32.xlu0 %v1489
    %v1491 = vpop.xlane.xlu0 %1490
    %v1492 = vsel %vm155, %v1486, 0.0
    %1493 = vadd.xlane.f32.xlu0 %v1492
    %v1494 = vpop.xlane.xlu0 %1493
    %v1495 = vmul.f32 %v1491, %v905
    %v1496 = vmul.f32 %v1494, %v905
    %v1497 = vmul.f32 %v1435, %v1435
    %v1498 = vmul.f32 %v1436, %v1436
    %v1499 = vmul.f32 %v1437, %v1437
    %v1500 = vmul.f32 %v1438, %v1438
    %v1501 = vmul.f32 %v1439, %v1439
    %v1502 = vmul.f32 %v1440, %v1440
    %v1503 = vmul.f32 %v1441, %v1441
    %v1504 = vmul.f32 %v1442, %v1442
    %v1513 = vcombine.low %v1497, %v1498
    %v1514 = vcombine.low %v1499, %v1500
    %v1516 = vunpack.c.l.s4 1983009808
    %v1517 = vunpack.c.0.s8 %v1516
    %v1518 = vlaneseq
    %v1519 = vshrl.u32 %v1518, 7
    %v1520 = vsub.s32 %v1517, %v1519
    %v1521 = vrot.slane %v1513, %v1520
    %v1523 = vunpack.c.l.s4 1983009808
    %v1524 = vunpack.c.0.s8 %v1523
    %v1525 = vlaneseq
    %v1526 = vshrl.u32 %v1525, 7
    %v1527 = vsub.s32 %v1524, %v1526
    %v1528 = vrot.slane %v1514, %v1527
    %v1529 = vcombine.low %v1521, %v1528
    %v1530 = vcombine.low %v1501, %v1502
    %v1531 = vcombine.low %v1503, %v1504
    %v1533 = vunpack.c.l.s4 1983009808
    %v1534 = vunpack.c.0.s8 %v1533
    %v1535 = vlaneseq
    %v1536 = vshrl.u32 %v1535, 7
    %v1537 = vsub.s32 %v1534, %v1536
    %v1538 = vrot.slane %v1530, %v1537
    %v1540 = vunpack.c.l.s4 1983009808
    %v1541 = vunpack.c.0.s8 %v1540
    %v1542 = vlaneseq
    %v1543 = vshrl.u32 %v1542, 7
    %v1544 = vsub.s32 %v1541, %v1543
    %v1545 = vrot.slane %v1531, %v1544
    %v1546 = vcombine.low %v1538, %v1545
    %v1549 = vsel %vm155, %v1529, 0.0
    %1550 = vadd.xlane.f32.xlu0 %v1549
    %v1551 = vpop.xlane.xlu0 %1550
    %v1552 = vsel %vm155, %v1546, 0.0
    %1553 = vadd.xlane.f32.xlu0 %v1552
    %v1554 = vpop.xlane.xlu0 %1553
    %v1555 = vmul.f32 %v1551, %v905
    %v1556 = vmul.f32 %v1554, %v905
    %v1557 = vmul.f32 %v1495, %v1495
    %v1558 = vmul.f32 %v1496, %v1496
    %v1559 = vsub.f32 %v1555, %v1557
    %v1560 = vsub.f32 %v1556, %v1558
    %v1564 = vunpack.c.l.s4 269488144
    %v1565 = vunpack.c.0.s8 %v1564
    %v1566 = vlaneseq
    %v1567 = vshrl.u32 %v1566, 7
    %v1568 = vsub.s32 %v1565, %v1567
    %v1569 = vrot.slane %v1495, %v1568
    %v1571 = vunpack.c.l.s4 842150450
    %v1572 = vunpack.c.0.s8 %v1571
    %v1573 = vlaneseq
    %v1574 = vshrl.u32 %v1573, 7
    %v1575 = vsub.s32 %v1572, %v1574
    %v1576 = vrot.slane %v1495, %v1575
    %v1578 = vunpack.c.l.s4 1414812756
    %v1579 = vunpack.c.0.s8 %v1578
    %v1580 = vlaneseq
    %v1581 = vshrl.u32 %v1580, 7
    %v1582 = vsub.s32 %v1579, %v1581
    %v1583 = vrot.slane %v1495, %v1582
    %v1585 = vunpack.c.l.s4 1987475062
    %v1586 = vunpack.c.0.s8 %v1585
    %v1587 = vlaneseq
    %v1588 = vshrl.u32 %v1587, 7
    %v1589 = vsub.s32 %v1586, %v1588
    %v1590 = vrot.slane %v1495, %v1589
    %v1592 = vunpack.c.l.s4 269488144
    %v1593 = vunpack.c.0.s8 %v1592
    %v1594 = vlaneseq
    %v1595 = vshrl.u32 %v1594, 7
    %v1596 = vsub.s32 %v1593, %v1595
    %v1597 = vrot.slane %v1496, %v1596
    %v1599 = vunpack.c.l.s4 842150450
    %v1600 = vunpack.c.0.s8 %v1599
    %v1601 = vlaneseq
    %v1602 = vshrl.u32 %v1601, 7
    %v1603 = vsub.s32 %v1600, %v1602
    %v1604 = vrot.slane %v1496, %v1603
    %v1606 = vunpack.c.l.s4 1414812756
    %v1607 = vunpack.c.0.s8 %v1606
    %v1608 = vlaneseq
    %v1609 = vshrl.u32 %v1608, 7
    %v1610 = vsub.s32 %v1607, %v1609
    %v1611 = vrot.slane %v1496, %v1610
    %v1613 = vunpack.c.l.s4 1987475062
    %v1614 = vunpack.c.0.s8 %v1613
    %v1615 = vlaneseq
    %v1616 = vshrl.u32 %v1615, 7
    %v1617 = vsub.s32 %v1614, %v1616
    %v1618 = vrot.slane %v1496, %v1617
    %v1627 = vsub.f32 %v1435, %v1569
    %v1628 = vsub.f32 %v1436, %v1576
    %v1629 = vsub.f32 %v1437, %v1583
    %v1630 = vsub.f32 %v1438, %v1590
    %v1631 = vsub.f32 %v1439, %v1597
    %v1632 = vsub.f32 %v1440, %v1604
    %v1633 = vsub.f32 %v1441, %v1611
    %v1634 = vsub.f32 %v1442, %v1618
    %v1635 = vadd.f32 %v1559, 1e-05
    %v1636 = vadd.f32 %v1560, 1e-05
    %v1637 = vrsqrt.pop %v1635
    %v1638 = vrsqrt.pop %v1636
    %v1642 = vunpack.c.l.s4 269488144
    %v1643 = vunpack.c.0.s8 %v1642
    %v1644 = vlaneseq
    %v1645 = vshrl.u32 %v1644, 7
    %v1646 = vsub.s32 %v1643, %v1645
    %v1647 = vrot.slane %v1637, %v1646
    %v1649 = vunpack.c.l.s4 842150450
    %v1650 = vunpack.c.0.s8 %v1649
    %v1651 = vlaneseq
    %v1652 = vshrl.u32 %v1651, 7
    %v1653 = vsub.s32 %v1650, %v1652
    %v1654 = vrot.slane %v1637, %v1653
    %v1656 = vunpack.c.l.s4 1414812756
    %v1657 = vunpack.c.0.s8 %v1656
    %v1658 = vlaneseq
    %v1659 = vshrl.u32 %v1658, 7
    %v1660 = vsub.s32 %v1657, %v1659
    %v1661 = vrot.slane %v1637, %v1660
    %v1663 = vunpack.c.l.s4 1987475062
    %v1664 = vunpack.c.0.s8 %v1663
    %v1665 = vlaneseq
    %v1666 = vshrl.u32 %v1665, 7
    %v1667 = vsub.s32 %v1664, %v1666
    %v1668 = vrot.slane %v1637, %v1667
    %v1670 = vunpack.c.l.s4 269488144
    %v1671 = vunpack.c.0.s8 %v1670
    %v1672 = vlaneseq
    %v1673 = vshrl.u32 %v1672, 7
    %v1674 = vsub.s32 %v1671, %v1673
    %v1675 = vrot.slane %v1638, %v1674
    %v1677 = vunpack.c.l.s4 842150450
    %v1678 = vunpack.c.0.s8 %v1677
    %v1679 = vlaneseq
    %v1680 = vshrl.u32 %v1679, 7
    %v1681 = vsub.s32 %v1678, %v1680
    %v1682 = vrot.slane %v1638, %v1681
    %v1684 = vunpack.c.l.s4 1414812756
    %v1685 = vunpack.c.0.s8 %v1684
    %v1686 = vlaneseq
    %v1687 = vshrl.u32 %v1686, 7
    %v1688 = vsub.s32 %v1685, %v1687
    %v1689 = vrot.slane %v1638, %v1688
    %v1691 = vunpack.c.l.s4 1987475062
    %v1692 = vunpack.c.0.s8 %v1691
    %v1693 = vlaneseq
    %v1694 = vshrl.u32 %v1693, 7
    %v1695 = vsub.s32 %v1692, %v1694
    %v1696 = vrot.slane %v1638, %v1695
    %v1705 = vmul.f32 %v1627, %v1647
    %v1706 = vmul.f32 %v1628, %v1654
    %v1707 = vmul.f32 %v1629, %v1661
    %v1708 = vmul.f32 %v1630, %v1668
    %v1709 = vmul.f32 %v1631, %v1675
    %v1710 = vmul.f32 %v1632, %v1682
    %v1711 = vmul.f32 %v1633, %v1689
    %v1712 = vmul.f32 %v1634, %v1696
    %v1714 = vlaneseq
    %v1715 = vshrl.u32 %v1714, 7
    %v1716 = vsub.s32 0, %v1715
    %v1717 = vrot.slane %v1443, %v1716
    %v1718 = vcombine.high %v1717, %v1717
    %v1720 = vunpack.c.l.s4 1983009808
    %v1721 = vunpack.c.0.s8 %v1720
    %v1722 = vlaneseq
    %v1723 = vshrl.u32 %v1722, 7
    %v1724 = vsub.s32 %v1721, %v1723
    %v1725 = vrot.slane %v1717, %v1724
    %v1727 = vunpack.c.l.s4 1983009808
    %v1728 = vunpack.c.0.s8 %v1727
    %v1729 = vlaneseq
    %v1730 = vshrl.u32 %v1729, 7
    %v1731 = vsub.s32 %v1728, %v1730
    %v1732 = vrot.slane %v1718, %v1731
    %v1733 = vcombine.high %v1725, %v1725
    %v1734 = vcombine.high %v1732, %v1732
    %v1739 = vmul.f32 %v1705, %v1725
    %v1740 = vmul.f32 %v1706, %v1733
    %v1741 = vmul.f32 %v1707, %v1732
    %v1742 = vmul.f32 %v1708, %v1734
    %v1743 = vmul.f32 %v1709, %v1725
    %v1744 = vmul.f32 %v1710, %v1733
    %v1745 = vmul.f32 %v1711, %v1732
    %v1746 = vmul.f32 %v1712, %v1734
    %v1748 = vlaneseq
    %v1749 = vshrl.u32 %v1748, 7
    %v1750 = vsub.s32 0, %v1749
    %v1751 = vrot.slane %v1444, %v1750
    %v1752 = vcombine.high %v1751, %v1751
    %v1754 = vunpack.c.l.s4 1983009808
    %v1755 = vunpack.c.0.s8 %v1754
    %v1756 = vlaneseq
    %v1757 = vshrl.u32 %v1756, 7
    %v1758 = vsub.s32 %v1755, %v1757
    %v1759 = vrot.slane %v1751, %v1758
    %v1761 = vunpack.c.l.s4 1983009808
    %v1762 = vunpack.c.0.s8 %v1761
    %v1763 = vlaneseq
    %v1764 = vshrl.u32 %v1763, 7
    %v1765 = vsub.s32 %v1762, %v1764
    %v1766 = vrot.slane %v1752, %v1765
    %v1767 = vcombine.high %v1759, %v1759
    %v1768 = vcombine.high %v1766, %v1766
    %v1773 = vadd.f32 %v1739, %v1759
    %v1774 = vadd.f32 %v1740, %v1767
    %v1775 = vadd.f32 %v1741, %v1766
    %v1776 = vadd.f32 %v1742, %v1768
    %v1777 = vadd.f32 %v1743, %v1759
    %v1778 = vadd.f32 %v1744, %v1767
    %v1779 = vadd.f32 %v1745, %v1766
    %v1780 = vadd.f32 %v1746, %v1768
    %v1789 = vcombine.low %v1773, %v1774
    %v1790 = vcombine.low %v1775, %v1776
    %v1792 = vunpack.c.l.s4 1983009808
    %v1793 = vunpack.c.0.s8 %v1792
    %v1794 = vlaneseq
    %v1795 = vshrl.u32 %v1794, 7
    %v1796 = vsub.s32 %v1793, %v1795
    %v1797 = vrot.slane %v1789, %v1796
    %v1799 = vunpack.c.l.s4 1983009808
    %v1800 = vunpack.c.0.s8 %v1799
    %v1801 = vlaneseq
    %v1802 = vshrl.u32 %v1801, 7
    %v1803 = vsub.s32 %v1800, %v1802
    %v1804 = vrot.slane %v1790, %v1803
    %v1805 = vcombine.low %v1797, %v1804
    %v1806 = vcombine.low %v1777, %v1778
    %v1807 = vcombine.low %v1779, %v1780
    %v1809 = vunpack.c.l.s4 1983009808
    %v1810 = vunpack.c.0.s8 %v1809
    %v1811 = vlaneseq
    %v1812 = vshrl.u32 %v1811, 7
    %v1813 = vsub.s32 %v1810, %v1812
    %v1814 = vrot.slane %v1806, %v1813
    %v1816 = vunpack.c.l.s4 1983009808
    %v1817 = vunpack.c.0.s8 %v1816
    %v1818 = vlaneseq
    %v1819 = vshrl.u32 %v1818, 7
    %v1820 = vsub.s32 %v1817, %v1819
    %v1821 = vrot.slane %v1807, %v1820
    %v1822 = vcombine.low %v1814, %v1821
    %v1825 = vpack.c.bf16 %v1822, %v1805
    %s1826 = scalar_lea.vmem %s2, 16
    %v1827 = vld [vmem:[%s1826] sm:$0xf]
    %v1828 = vld [vmem:[%s1826 + $0x4] sm:$0xf]
    %v1829 = vld [vmem:[%s1826 + $0x8] sm:$0xf]
    %v1830 = vld [vmem:[%s1826 + $0xc] sm:$0xf]
    %s1831 = scalar_lea.vmem %s3, 1
    %v1832 = vld [vmem:[%s1831] sm:$0x1]
    %v1834 = vlaneseq
    %v1835 = vshrl.u32 %v1834, 7
    %v1836 = vsub.s32 0, %v1835
    %v1837 = vrot.slane %v1832, %v1836
    %v1843 = vunpack.c.l.b16 %v1827
    %v1844 = vunpack.c.l.b16 %v1828
    %v1845 = vunpack.c.l.b16 %v1829
    %v1846 = vunpack.c.l.b16 %v1830
    %v1847 = vpack.c.b16 %v1844, %v1843
    %v1848 = vpack.c.b16 %v1846, %v1845
    %v1852 = vsel %vm155, %v1825, 0
    %1854 = vmatprep.subr.bf16.mxu0 0
    %1855 = vmatpush1.bf16.msra.mxu0 %v1847
    %1856 = vmatprep.subr.bf16.mxu0 0
    %1857 = vmatpush1.bf16.msra.mxu0 %v1848
    %1858 = vmatprep.subr.bf16.mxu0 0
    %1859 = vmatpush1.bf16.msra.mxu0 0
    %1860 = vmatprep.subr.bf16.mxu0 0
    %1861 = vmatpush1.bf16.msra.mxu0 0
    %1862 = vmatprep.subr.bf16.mxu0 0
    %1863 = vmatpush1.bf16.msra.mxu0 0
    %1864 = vmatprep.subr.bf16.mxu0 0
    %1865 = vmatpush1.bf16.msra.mxu0 0
    %1866 = vmatprep.subr.bf16.mxu0 0
    %1867 = vmatpush1.bf16.msra.mxu0 0
    %1868 = vmatprep.subr.bf16.mxu0 0
    %1869 = vmatpush1.bf16.msra.mxu0 0
    %1870 = vmatprep.subr.bf16.mxu0 0
    %1871 = vmatpush1.bf16.msra.mxu0 0
    %1872 = vmatprep.subr.bf16.mxu0 0
    %1873 = vmatpush1.bf16.msra.mxu0 0
    %1874 = vmatprep.subr.bf16.mxu0 0
    %1875 = vmatpush1.bf16.msra.mxu0 0
    %1876 = vmatprep.subr.bf16.mxu0 0
    %1877 = vmatpush1.bf16.msra.mxu0 0
    %1878 = vmatprep.subr.bf16.mxu0 0
    %1879 = vmatpush1.bf16.msra.mxu0 0
    %1880 = vmatprep.subr.bf16.mxu0 0
    %1881 = vmatpush1.bf16.msra.mxu0 0
    %1882 = vmatprep.subr.bf16.mxu0 0
    %1883 = vmatpush1.bf16.msra.mxu0 0
    %1884 = vmatprep.subr.bf16.mxu0 0
    %1885 = vmatpush1.bf16.msra.mxu0 0
    %1886 = vmatprep.mubr.bf16.mxu0 0
    %1887 = vmatmul.mubr.bf16.gmra.mrb[0].mxu0 %v1852
    %v1888 = vpop.f32.mrb[0].mxu0
    %v1889 = vadd.f32 %v1837, %v1888
    %v1890 = vpop.f32.mrb[0].mxu0
    %v1891 = vpop.f32.mrb[0].mxu0
    %v1892 = vadd.f32 %v1837, %v1891
    %v1893 = vpop.f32.mrb[0].mxu0
    %1894 = vdwg.mxu0
    %v1895 = vpack.c.bf16 %v1892, %v1889
    %1897 = vrot.lane.b32.xlu0 %v1895, 96
    %v1898 = vpop.permute.xlu0 %1897
    %v1900 = vsel %vm204, %v1895, 0
    %v1903 = vsel %vm204, %v1898, 0
    %1905 = vmatprep.subr.bf16.mxu0 0
    %1906 = vmatpush1.bf16.xpose.msra.mxu0 %v1903
    %1907 = vmatprep.subr.bf16.mxu0 0
    %1908 = vmatpush1.bf16.xpose.msra.mxu0 0
    %1909 = vmatprep.subr.bf16.mxu0 0
    %1910 = vmatpush1.bf16.xpose.msra.mxu0 0
    %1911 = vmatprep.subr.bf16.mxu0 0
    %1912 = vmatpush1.bf16.xpose.msra.mxu0 0
    %1913 = vmatprep.subr.bf16.mxu0 0
    %1914 = vmatpush1.bf16.xpose.msra.mxu0 0
    %1915 = vmatprep.subr.bf16.mxu0 0
    %1916 = vmatpush1.bf16.xpose.msra.mxu0 0
    %1917 = vmatprep.subr.bf16.mxu0 0
    %1918 = vmatpush1.bf16.xpose.msra.mxu0 0
    %1919 = vmatprep.subr.bf16.mxu0 0
    %1920 = vmatpush1.bf16.xpose.msra.mxu0 0
    %1921 = vmatprep.subr.bf16.mxu0 0
    %1922 = vmatpush1.bf16.xpose.msra.mxu0 0
    %1923 = vmatprep.subr.bf16.mxu0 0
    %1924 = vmatpush1.bf16.xpose.msra.mxu0 0
    %1925 = vmatprep.subr.bf16.mxu0 0
    %1926 = vmatpush1.bf16.xpose.msra.mxu0 0
    %1927 = vmatprep.subr.bf16.mxu0 0
    %1928 = vmatpush1.bf16.xpose.msra.mxu0 0
    %1929 = vmatprep.subr.bf16.mxu0 0
    %1930 = vmatpush1.bf16.xpose.msra.mxu0 0
    %1931 = vmatprep.subr.bf16.mxu0 0
    %1932 = vmatpush1.bf16.xpose.msra.mxu0 0
    %1933 = vmatprep.subr.bf16.mxu0 0
    %1934 = vmatpush1.bf16.xpose.msra.mxu0 0
    %1935 = vmatprep.subr.bf16.mxu0 0
    %1936 = vmatpush1.bf16.xpose.msra.mxu0 0
    %1937 = vmatprep.mubr.bf16.mxu0 0
    %1938 = vmatmul.mubr.bf16.gmra.mrb[0].mxu0 %v1900
    %v1939 = vpop.f32.mrb[0].mxu0
    %v1940 = vadd.f32 0.0, %v1939
    %v1941 = vpop.f32.mrb[0].mxu0
    %v1942 = vpop.f32.mrb[0].mxu0
    %v1943 = vadd.f32 0.0, %v1942
    %v1944 = vpop.f32.mrb[0].mxu0
    %1945 = vdwg.mxu0
    %v1946 = vmul.f32 %v1940, 0.35355338
    %v1947 = vmul.f32 %v1943, 0.35355338
    %v1948 = vadd.f32 %v1946, %v85
    %v1949 = vadd.f32 %v1947, %v86
    %v1950 = vsel %vm256, %v1948, -inf
    %1951 = vmax.xlane.f32.xlu0 %v1950
    %v1952 = vpop.xlane.xlu0 %1951
    %v1953 = vsel %vm256, %v1949, -inf
    %1954 = vmax.xlane.f32.xlu0 %v1953
    %v1955 = vpop.xlane.xlu0 %1954
    %v1956 = vsub.f32 %v1948, %v1952
    %v1957 = vsub.f32 %v1949, %v1955
    %v1958 = vmul.f32 %v1956, 1.442695
    %v1959 = vpow.pop %v1958
    %v1960 = vmul.f32 %v1957, 1.442695
    %v1961 = vpow.pop %v1960
    %v1962 = vsel %vm256, %v1959, 0.0
    %1963 = vadd.xlane.f32.xlu0 %v1962
    %v1964 = vpop.xlane.xlu0 %1963
    %v1965 = vsel %vm256, %v1961, 0.0
    %1966 = vadd.xlane.f32.xlu0 %v1965
    %v1967 = vpop.xlane.xlu0 %1966
    %v1968 = vrcp.pop %v1964
    %v1969 = vrcp.pop %v1967
    %v1970 = vmul.f32 %v1959, %v1968
    %v1971 = vmul.f32 %v1961, %v1969
    %v1972 = vpack.c.bf16 %v1971, %v1970
    %1973 = vrot.lane.b32.xlu0 %v1895, 64
    %v1974 = vpop.permute.xlu0 %1973
    %v1977 = vsel %vm256, %v1972, 0
    %1979 = vmatprep.subr.bf16.mxu0 0
    %1980 = vmatpush1.bf16.msra.mxu0 %v1974
    %1981 = vmatprep.subr.bf16.mxu0 0
    %1982 = vmatpush1.bf16.msra.mxu0 0
    %1983 = vmatprep.subr.bf16.mxu0 0
    %1984 = vmatpush1.bf16.msra.mxu0 0
    %1985 = vmatprep.subr.bf16.mxu0 0
    %1986 = vmatpush1.bf16.msra.mxu0 0
    %1987 = vmatprep.subr.bf16.mxu0 0
    %1988 = vmatpush1.bf16.msra.mxu0 0
    %1989 = vmatprep.subr.bf16.mxu0 0
    %1990 = vmatpush1.bf16.msra.mxu0 0
    %1991 = vmatprep.subr.bf16.mxu0 0
    %1992 = vmatpush1.bf16.msra.mxu0 0
    %1993 = vmatprep.subr.bf16.mxu0 0
    %1994 = vmatpush1.bf16.msra.mxu0 0
    %1995 = vmatprep.subr.bf16.mxu0 0
    %1996 = vmatpush1.bf16.msra.mxu0 0
    %1997 = vmatprep.subr.bf16.mxu0 0
    %1998 = vmatpush1.bf16.msra.mxu0 0
    %1999 = vmatprep.subr.bf16.mxu0 0
    %2000 = vmatpush1.bf16.msra.mxu0 0
    %2001 = vmatprep.subr.bf16.mxu0 0
    %2002 = vmatpush1.bf16.msra.mxu0 0
    %2003 = vmatprep.subr.bf16.mxu0 0
    %2004 = vmatpush1.bf16.msra.mxu0 0
    %2005 = vmatprep.subr.bf16.mxu0 0
    %2006 = vmatpush1.bf16.msra.mxu0 0
    %2007 = vmatprep.subr.bf16.mxu0 0
    %2008 = vmatpush1.bf16.msra.mxu0 0
    %2009 = vmatprep.subr.bf16.mxu0 0
    %2010 = vmatpush1.bf16.msra.mxu0 0
    %2011 = vmatprep.mubr.bf16.mxu0 0
    %2012 = vmatmul.mubr.bf16.gmra.mrb[0].mxu0 %v1977
    %v2013 = vpop.f32.mrb[0].mxu0
    %v2014 = vadd.f32 0.0, %v2013
    %v2015 = vpop.f32.mrb[0].mxu0
    %v2016 = vpop.f32.mrb[0].mxu0
    %v2017 = vadd.f32 0.0, %v2016
    %v2018 = vpop.f32.mrb[0].mxu0
    %2019 = vdwg.mxu0
    %2020 = vrot.lane.b32.xlu0 %v1895, 120
    %v2021 = vpop.permute.xlu0 %2020
    %2022 = vrot.lane.b32.xlu0 %v1895, 88
    %v2023 = vpop.permute.xlu0 %2022
    %v2025 = vsel %vm204, %v2021, 0
    %v2028 = vsel %vm204, %v2023, 0
    %2030 = vmatprep.subr.bf16.mxu0 0
    %2031 = vmatpush1.bf16.xpose.msra.mxu0 %v2028
    %2032 = vmatprep.subr.bf16.mxu0 0
    %2033 = vmatpush1.bf16.xpose.msra.mxu0 0
    %2034 = vmatprep.subr.bf16.mxu0 0
    %2035 = vmatpush1.bf16.xpose.msra.mxu0 0
    %2036 = vmatprep.subr.bf16.mxu0 0
    %2037 = vmatpush1.bf16.xpose.msra.mxu0 0
    %2038 = vmatprep.subr.bf16.mxu0 0
    %2039 = vmatpush1.bf16.xpose.msra.mxu0 0
    %2040 = vmatprep.subr.bf16.mxu0 0
    %2041 = vmatpush1.bf16.xpose.msra.mxu0 0
    %2042 = vmatprep.subr.bf16.mxu0 0
    %2043 = vmatpush1.bf16.xpose.msra.mxu0 0
    %2044 = vmatprep.subr.bf16.mxu0 0
    %2045 = vmatpush1.bf16.xpose.msra.mxu0 0
    %2046 = vmatprep.subr.bf16.mxu0 0
    %2047 = vmatpush1.bf16.xpose.msra.mxu0 0
    %2048 = vmatprep.subr.bf16.mxu0 0
    %2049 = vmatpush1.bf16.xpose.msra.mxu0 0
    %2050 = vmatprep.subr.bf16.mxu0 0
    %2051 = vmatpush1.bf16.xpose.msra.mxu0 0
    %2052 = vmatprep.subr.bf16.mxu0 0
    %2053 = vmatpush1.bf16.xpose.msra.mxu0 0
    %2054 = vmatprep.subr.bf16.mxu0 0
    %2055 = vmatpush1.bf16.xpose.msra.mxu0 0
    %2056 = vmatprep.subr.bf16.mxu0 0
    %2057 = vmatpush1.bf16.xpose.msra.mxu0 0
    %2058 = vmatprep.subr.bf16.mxu0 0
    %2059 = vmatpush1.bf16.xpose.msra.mxu0 0
    %2060 = vmatprep.subr.bf16.mxu0 0
    %2061 = vmatpush1.bf16.xpose.msra.mxu0 0
    %2062 = vmatprep.mubr.bf16.mxu0 0
    %2063 = vmatmul.mubr.bf16.gmra.mrb[0].mxu0 %v2025
    %v2064 = vpop.f32.mrb[0].mxu0
    %v2065 = vadd.f32 0.0, %v2064
    %v2066 = vpop.f32.mrb[0].mxu0
    %v2067 = vpop.f32.mrb[0].mxu0
    %v2068 = vadd.f32 0.0, %v2067
    %v2069 = vpop.f32.mrb[0].mxu0
    %2070 = vdwg.mxu0
    %v2071 = vmul.f32 %v2065, 0.35355338
    %v2072 = vmul.f32 %v2068, 0.35355338
    %v2073 = vadd.f32 %v2071, %v85
    %v2074 = vadd.f32 %v2072, %v86
    %v2075 = vsel %vm256, %v2073, -inf
    %2076 = vmax.xlane.f32.xlu0 %v2075
    %v2077 = vpop.xlane.xlu0 %2076
    %v2078 = vsel %vm256, %v2074, -inf
    %2079 = vmax.xlane.f32.xlu0 %v2078
    %v2080 = vpop.xlane.xlu0 %2079
    %v2081 = vsub.f32 %v2073, %v2077
    %v2082 = vsub.f32 %v2074, %v2080
    %v2083 = vmul.f32 %v2081, 1.442695
    %v2084 = vpow.pop %v2083
    %v2085 = vmul.f32 %v2082, 1.442695
    %v2086 = vpow.pop %v2085
    %v2087 = vsel %vm256, %v2084, 0.0
    %2088 = vadd.xlane.f32.xlu0 %v2087
    %v2089 = vpop.xlane.xlu0 %2088
    %v2090 = vsel %vm256, %v2086, 0.0
    %2091 = vadd.xlane.f32.xlu0 %v2090
    %v2092 = vpop.xlane.xlu0 %2091
    %v2093 = vrcp.pop %v2089
    %v2094 = vrcp.pop %v2092
    %v2095 = vmul.f32 %v2084, %v2093
    %v2096 = vmul.f32 %v2086, %v2094
    %v2097 = vpack.c.bf16 %v2096, %v2095
    %2098 = vrot.lane.b32.xlu0 %v1895, 56
    %v2099 = vpop.permute.xlu0 %2098
    %v2102 = vsel %vm256, %v2097, 0
    %2104 = vmatprep.subr.bf16.mxu0 0
    %2105 = vmatpush1.bf16.msra.mxu0 %v2099
    %2106 = vmatprep.subr.bf16.mxu0 0
    %2107 = vmatpush1.bf16.msra.mxu0 0
    %2108 = vmatprep.subr.bf16.mxu0 0
    %2109 = vmatpush1.bf16.msra.mxu0 0
    %2110 = vmatprep.subr.bf16.mxu0 0
    %2111 = vmatpush1.bf16.msra.mxu0 0
    %2112 = vmatprep.subr.bf16.mxu0 0
    %2113 = vmatpush1.bf16.msra.mxu0 0
    %2114 = vmatprep.subr.bf16.mxu0 0
    %2115 = vmatpush1.bf16.msra.mxu0 0
    %2116 = vmatprep.subr.bf16.mxu0 0
    %2117 = vmatpush1.bf16.msra.mxu0 0
    %2118 = vmatprep.subr.bf16.mxu0 0
    %2119 = vmatpush1.bf16.msra.mxu0 0
    %2120 = vmatprep.subr.bf16.mxu0 0
    %2121 = vmatpush1.bf16.msra.mxu0 0
    %2122 = vmatprep.subr.bf16.mxu0 0
    %2123 = vmatpush1.bf16.msra.mxu0 0
    %2124 = vmatprep.subr.bf16.mxu0 0
    %2125 = vmatpush1.bf16.msra.mxu0 0
    %2126 = vmatprep.subr.bf16.mxu0 0
    %2127 = vmatpush1.bf16.msra.mxu0 0
    %2128 = vmatprep.subr.bf16.mxu0 0
    %2129 = vmatpush1.bf16.msra.mxu0 0
    %2130 = vmatprep.subr.bf16.mxu0 0
    %2131 = vmatpush1.bf16.msra.mxu0 0
    %2132 = vmatprep.subr.bf16.mxu0 0
    %2133 = vmatpush1.bf16.msra.mxu0 0
    %2134 = vmatprep.subr.bf16.mxu0 0
    %2135 = vmatpush1.bf16.msra.mxu0 0
    %2136 = vmatprep.mubr.bf16.mxu0 0
    %2137 = vmatmul.mubr.bf16.gmra.mrb[0].mxu0 %v2102
    %v2138 = vpop.f32.mrb[0].mxu0
    %v2139 = vadd.f32 0.0, %v2138
    %v2140 = vpop.f32.mrb[0].mxu0
    %v2141 = vpop.f32.mrb[0].mxu0
    %v2142 = vadd.f32 0.0, %v2141
    %v2143 = vpop.f32.mrb[0].mxu0
    %2144 = vdwg.mxu0
    %2145 = vrot.lane.b32.xlu0 %v1895, 112
    %v2146 = vpop.permute.xlu0 %2145
    %2147 = vrot.lane.b32.xlu0 %v1895, 80
    %v2148 = vpop.permute.xlu0 %2147
    %v2150 = vsel %vm204, %v2146, 0
    %v2153 = vsel %vm204, %v2148, 0
    %2155 = vmatprep.subr.bf16.mxu0 0
    %2156 = vmatpush1.bf16.xpose.msra.mxu0 %v2153
    %2157 = vmatprep.subr.bf16.mxu0 0
    %2158 = vmatpush1.bf16.xpose.msra.mxu0 0
    %2159 = vmatprep.subr.bf16.mxu0 0
    %2160 = vmatpush1.bf16.xpose.msra.mxu0 0
    %2161 = vmatprep.subr.bf16.mxu0 0
    %2162 = vmatpush1.bf16.xpose.msra.mxu0 0
    %2163 = vmatprep.subr.bf16.mxu0 0
    %2164 = vmatpush1.bf16.xpose.msra.mxu0 0
    %2165 = vmatprep.subr.bf16.mxu0 0
    %2166 = vmatpush1.bf16.xpose.msra.mxu0 0
    %2167 = vmatprep.subr.bf16.mxu0 0
    %2168 = vmatpush1.bf16.xpose.msra.mxu0 0
    %2169 = vmatprep.subr.bf16.mxu0 0
    %2170 = vmatpush1.bf16.xpose.msra.mxu0 0
    %2171 = vmatprep.subr.bf16.mxu0 0
    %2172 = vmatpush1.bf16.xpose.msra.mxu0 0
    %2173 = vmatprep.subr.bf16.mxu0 0
    %2174 = vmatpush1.bf16.xpose.msra.mxu0 0
    %2175 = vmatprep.subr.bf16.mxu0 0
    %2176 = vmatpush1.bf16.xpose.msra.mxu0 0
    %2177 = vmatprep.subr.bf16.mxu0 0
    %2178 = vmatpush1.bf16.xpose.msra.mxu0 0
    %2179 = vmatprep.subr.bf16.mxu0 0
    %2180 = vmatpush1.bf16.xpose.msra.mxu0 0
    %2181 = vmatprep.subr.bf16.mxu0 0
    %2182 = vmatpush1.bf16.xpose.msra.mxu0 0
    %2183 = vmatprep.subr.bf16.mxu0 0
    %2184 = vmatpush1.bf16.xpose.msra.mxu0 0
    %2185 = vmatprep.subr.bf16.mxu0 0
    %2186 = vmatpush1.bf16.xpose.msra.mxu0 0
    %2187 = vmatprep.mubr.bf16.mxu0 0
    %2188 = vmatmul.mubr.bf16.gmra.mrb[0].mxu0 %v2150
    %v2189 = vpop.f32.mrb[0].mxu0
    %v2190 = vadd.f32 0.0, %v2189
    %v2191 = vpop.f32.mrb[0].mxu0
    %v2192 = vpop.f32.mrb[0].mxu0
    %v2193 = vadd.f32 0.0, %v2192
    %v2194 = vpop.f32.mrb[0].mxu0
    %2195 = vdwg.mxu0
    %v2196 = vmul.f32 %v2190, 0.35355338
    %v2197 = vmul.f32 %v2193, 0.35355338
    %v2198 = vadd.f32 %v2196, %v85
    %v2199 = vadd.f32 %v2197, %v86
    %v2200 = vsel %vm256, %v2198, -inf
    %2201 = vmax.xlane.f32.xlu0 %v2200
    %v2202 = vpop.xlane.xlu0 %2201
    %v2203 = vsel %vm256, %v2199, -inf
    %2204 = vmax.xlane.f32.xlu0 %v2203
    %v2205 = vpop.xlane.xlu0 %2204
    %v2206 = vsub.f32 %v2198, %v2202
    %v2207 = vsub.f32 %v2199, %v2205
    %v2208 = vmul.f32 %v2206, 1.442695
    %v2209 = vpow.pop %v2208
    %v2210 = vmul.f32 %v2207, 1.442695
    %v2211 = vpow.pop %v2210
    %v2212 = vsel %vm256, %v2209, 0.0
    %2213 = vadd.xlane.f32.xlu0 %v2212
    %v2214 = vpop.xlane.xlu0 %2213
    %v2215 = vsel %vm256, %v2211, 0.0
    %2216 = vadd.xlane.f32.xlu0 %v2215
    %v2217 = vpop.xlane.xlu0 %2216
    %v2218 = vrcp.pop %v2214
    %v2219 = vrcp.pop %v2217
    %v2220 = vmul.f32 %v2209, %v2218
    %v2221 = vmul.f32 %v2211, %v2219
    %v2222 = vpack.c.bf16 %v2221, %v2220
    %2223 = vrot.lane.b32.xlu0 %v1895, 48
    %v2224 = vpop.permute.xlu0 %2223
    %v2227 = vsel %vm256, %v2222, 0
    %2229 = vmatprep.subr.bf16.mxu0 0
    %2230 = vmatpush1.bf16.msra.mxu0 %v2224
    %2231 = vmatprep.subr.bf16.mxu0 0
    %2232 = vmatpush1.bf16.msra.mxu0 0
    %2233 = vmatprep.subr.bf16.mxu0 0
    %2234 = vmatpush1.bf16.msra.mxu0 0
    %2235 = vmatprep.subr.bf16.mxu0 0
    %2236 = vmatpush1.bf16.msra.mxu0 0
    %2237 = vmatprep.subr.bf16.mxu0 0
    %2238 = vmatpush1.bf16.msra.mxu0 0
    %2239 = vmatprep.subr.bf16.mxu0 0
    %2240 = vmatpush1.bf16.msra.mxu0 0
    %2241 = vmatprep.subr.bf16.mxu0 0
    %2242 = vmatpush1.bf16.msra.mxu0 0
    %2243 = vmatprep.subr.bf16.mxu0 0
    %2244 = vmatpush1.bf16.msra.mxu0 0
    %2245 = vmatprep.subr.bf16.mxu0 0
    %2246 = vmatpush1.bf16.msra.mxu0 0
    %2247 = vmatprep.subr.bf16.mxu0 0
    %2248 = vmatpush1.bf16.msra.mxu0 0
    %2249 = vmatprep.subr.bf16.mxu0 0
    %2250 = vmatpush1.bf16.msra.mxu0 0
    %2251 = vmatprep.subr.bf16.mxu0 0
    %2252 = vmatpush1.bf16.msra.mxu0 0
    %2253 = vmatprep.subr.bf16.mxu0 0
    %2254 = vmatpush1.bf16.msra.mxu0 0
    %2255 = vmatprep.subr.bf16.mxu0 0
    %2256 = vmatpush1.bf16.msra.mxu0 0
    %2257 = vmatprep.subr.bf16.mxu0 0
    %2258 = vmatpush1.bf16.msra.mxu0 0
    %2259 = vmatprep.subr.bf16.mxu0 0
    %2260 = vmatpush1.bf16.msra.mxu0 0
    %2261 = vmatprep.mubr.bf16.mxu0 0
    %2262 = vmatmul.mubr.bf16.gmra.mrb[0].mxu0 %v2227
    %v2263 = vpop.f32.mrb[0].mxu0
    %v2264 = vadd.f32 0.0, %v2263
    %v2265 = vpop.f32.mrb[0].mxu0
    %v2266 = vpop.f32.mrb[0].mxu0
    %v2267 = vadd.f32 0.0, %v2266
    %v2268 = vpop.f32.mrb[0].mxu0
    %2269 = vdwg.mxu0
    %2270 = vrot.lane.b32.xlu0 %v1895, 104
    %v2271 = vpop.permute.xlu0 %2270
    %2272 = vrot.lane.b32.xlu0 %v1895, 72
    %v2273 = vpop.permute.xlu0 %2272
    %v2275 = vsel %vm204, %v2271, 0
    %v2278 = vsel %vm204, %v2273, 0
    %2280 = vmatprep.subr.bf16.mxu0 0
    %2281 = vmatpush1.bf16.xpose.msra.mxu0 %v2278
    %2282 = vmatprep.subr.bf16.mxu0 0
    %2283 = vmatpush1.bf16.xpose.msra.mxu0 0
    %2284 = vmatprep.subr.bf16.mxu0 0
    %2285 = vmatpush1.bf16.xpose.msra.mxu0 0
    %2286 = vmatprep.subr.bf16.mxu0 0
    %2287 = vmatpush1.bf16.xpose.msra.mxu0 0
    %2288 = vmatprep.subr.bf16.mxu0 0
    %2289 = vmatpush1.bf16.xpose.msra.mxu0 0
    %2290 = vmatprep.subr.bf16.mxu0 0
    %2291 = vmatpush1.bf16.xpose.msra.mxu0 0
    %2292 = vmatprep.subr.bf16.mxu0 0
    %2293 = vmatpush1.bf16.xpose.msra.mxu0 0
    %2294 = vmatprep.subr.bf16.mxu0 0
    %2295 = vmatpush1.bf16.xpose.msra.mxu0 0
    %2296 = vmatprep.subr.bf16.mxu0 0
    %2297 = vmatpush1.bf16.xpose.msra.mxu0 0
    %2298 = vmatprep.subr.bf16.mxu0 0
    %2299 = vmatpush1.bf16.xpose.msra.mxu0 0
    %2300 = vmatprep.subr.bf16.mxu0 0
    %2301 = vmatpush1.bf16.xpose.msra.mxu0 0
    %2302 = vmatprep.subr.bf16.mxu0 0
    %2303 = vmatpush1.bf16.xpose.msra.mxu0 0
    %2304 = vmatprep.subr.bf16.mxu0 0
    %2305 = vmatpush1.bf16.xpose.msra.mxu0 0
    %2306 = vmatprep.subr.bf16.mxu0 0
    %2307 = vmatpush1.bf16.xpose.msra.mxu0 0
    %2308 = vmatprep.subr.bf16.mxu0 0
    %2309 = vmatpush1.bf16.xpose.msra.mxu0 0
    %2310 = vmatprep.subr.bf16.mxu0 0
    %2311 = vmatpush1.bf16.xpose.msra.mxu0 0
    %2312 = vmatprep.mubr.bf16.mxu0 0
    %2313 = vmatmul.mubr.bf16.gmra.mrb[0].mxu0 %v2275
    %v2314 = vpop.f32.mrb[0].mxu0
    %v2315 = vadd.f32 0.0, %v2314
    %v2316 = vpop.f32.mrb[0].mxu0
    %v2317 = vpop.f32.mrb[0].mxu0
    %v2318 = vadd.f32 0.0, %v2317
    %v2319 = vpop.f32.mrb[0].mxu0
    %2320 = vdwg.mxu0
    %v2321 = vmul.f32 %v2315, 0.35355338
    %v2322 = vmul.f32 %v2318, 0.35355338
    %v2323 = vadd.f32 %v2321, %v85
    %v2324 = vadd.f32 %v2322, %v86
    %v2325 = vsel %vm256, %v2323, -inf
    %2326 = vmax.xlane.f32.xlu0 %v2325
    %v2327 = vpop.xlane.xlu0 %2326
    %v2328 = vsel %vm256, %v2324, -inf
    %2329 = vmax.xlane.f32.xlu0 %v2328
    %v2330 = vpop.xlane.xlu0 %2329
    %v2331 = vsub.f32 %v2323, %v2327
    %v2332 = vsub.f32 %v2324, %v2330
    %v2333 = vmul.f32 %v2331, 1.442695
    %v2334 = vpow.pop %v2333
    %v2335 = vmul.f32 %v2332, 1.442695
    %v2336 = vpow.pop %v2335
    %v2337 = vsel %vm256, %v2334, 0.0
    %2338 = vadd.xlane.f32.xlu0 %v2337
    %v2339 = vpop.xlane.xlu0 %2338
    %v2340 = vsel %vm256, %v2336, 0.0
    %2341 = vadd.xlane.f32.xlu0 %v2340
    %v2342 = vpop.xlane.xlu0 %2341
    %v2343 = vrcp.pop %v2339
    %v2344 = vrcp.pop %v2342
    %v2345 = vmul.f32 %v2334, %v2343
    %v2346 = vmul.f32 %v2336, %v2344
    %v2347 = vpack.c.bf16 %v2346, %v2345
    %2348 = vrot.lane.b32.xlu0 %v1895, 40
    %v2349 = vpop.permute.xlu0 %2348
    %v2352 = vsel %vm256, %v2347, 0
    %2354 = vmatprep.subr.bf16.mxu0 0
    %2355 = vmatpush1.bf16.msra.mxu0 %v2349
    %2356 = vmatprep.subr.bf16.mxu0 0
    %2357 = vmatpush1.bf16.msra.mxu0 0
    %2358 = vmatprep.subr.bf16.mxu0 0
    %2359 = vmatpush1.bf16.msra.mxu0 0
    %2360 = vmatprep.subr.bf16.mxu0 0
    %2361 = vmatpush1.bf16.msra.mxu0 0
    %2362 = vmatprep.subr.bf16.mxu0 0
    %2363 = vmatpush1.bf16.msra.mxu0 0
    %2364 = vmatprep.subr.bf16.mxu0 0
    %2365 = vmatpush1.bf16.msra.mxu0 0
    %2366 = vmatprep.subr.bf16.mxu0 0
    %2367 = vmatpush1.bf16.msra.mxu0 0
    %2368 = vmatprep.subr.bf16.mxu0 0
    %2369 = vmatpush1.bf16.msra.mxu0 0
    %2370 = vmatprep.subr.bf16.mxu0 0
    %2371 = vmatpush1.bf16.msra.mxu0 0
    %2372 = vmatprep.subr.bf16.mxu0 0
    %2373 = vmatpush1.bf16.msra.mxu0 0
    %2374 = vmatprep.subr.bf16.mxu0 0
    %2375 = vmatpush1.bf16.msra.mxu0 0
    %2376 = vmatprep.subr.bf16.mxu0 0
    %2377 = vmatpush1.bf16.msra.mxu0 0
    %2378 = vmatprep.subr.bf16.mxu0 0
    %2379 = vmatpush1.bf16.msra.mxu0 0
    %2380 = vmatprep.subr.bf16.mxu0 0
    %2381 = vmatpush1.bf16.msra.mxu0 0
    %2382 = vmatprep.subr.bf16.mxu0 0
    %2383 = vmatpush1.bf16.msra.mxu0 0
    %2384 = vmatprep.subr.bf16.mxu0 0
    %2385 = vmatpush1.bf16.msra.mxu0 0
    %2386 = vmatprep.mubr.bf16.mxu0 0
    %2387 = vmatmul.mubr.bf16.gmra.mrb[0].mxu0 %v2352
    %v2388 = vpop.f32.mrb[0].mxu0
    %v2389 = vadd.f32 0.0, %v2388
    %v2390 = vpop.f32.mrb[0].mxu0
    %v2391 = vpop.f32.mrb[0].mxu0
    %v2392 = vadd.f32 0.0, %v2391
    %v2393 = vpop.f32.mrb[0].mxu0
    %2394 = vdwg.mxu0
    %2397 = vrot.lane.b32.xlu0 %v2139, 8
    %v2398 = vpop.permute.xlu0 %2397
    %2399 = vrot.lane.b32.xlu0 %v2142, 8
    %v2400 = vpop.permute.xlu0 %2399
    %2405 = vrot.lane.b32.xlu0 %v2264, 16
    %v2406 = vpop.permute.xlu0 %2405
    %2407 = vrot.lane.b32.xlu0 %v2267, 16
    %v2408 = vpop.permute.xlu0 %2407
    %2413 = vrot.lane.b32.xlu0 %v2389, 24
    %v2414 = vpop.permute.xlu0 %2413
    %2415 = vrot.lane.b32.xlu0 %v2392, 24
    %v2416 = vpop.permute.xlu0 %2415
    %v2419 = vsel %vm204, %v2014, %v2398
    %v2420 = vsel %vm204, %v2017, %v2400
    %v2421 = vsel %vm256, %v2419, %v2406
    %v2422 = vsel %vm256, %v2420, %v2408
    %v2423 = vsel %vm730, %v2421, %v2414
    %v2424 = vsel %vm730, %v2422, %v2416
    %v2425 = vpack.c.bf16 %v2424, %v2423
    %s2426 = scalar_lea.vmem %s4, 16
    %v2427 = vld [vmem:[%s2426] sm:$0xf]
    %v2428 = vld [vmem:[%s2426 + $0x4] sm:$0xf]
    %v2429 = vld [vmem:[%s2426 + $0x8] sm:$0xf]
    %v2430 = vld [vmem:[%s2426 + $0xc] sm:$0xf]
    %s2431 = scalar_lea.vmem %s5, 1
    %v2432 = vld [vmem:[%s2431] sm:$0x1]
    %v2434 = vlaneseq
    %v2435 = vshrl.u32 %v2434, 7
    %v2436 = vsub.s32 0, %v2435
    %v2437 = vrot.slane %v2432, %v2436
    %v2443 = vunpack.c.l.b16 %v2427
    %v2444 = vunpack.c.l.b16 %v2428
    %v2445 = vunpack.c.l.b16 %v2429
    %v2446 = vunpack.c.l.b16 %v2430
    %v2447 = vpack.c.b16 %v2444, %v2443
    %v2448 = vpack.c.b16 %v2446, %v2445
    %v2452 = vsel %vm155, %v2425, 0
    %2454 = vmatprep.subr.bf16.mxu0 0
    %2455 = vmatpush1.bf16.msra.mxu0 %v2447
    %2456 = vmatprep.subr.bf16.mxu0 0
    %2457 = vmatpush1.bf16.msra.mxu0 %v2448
    %2458 = vmatprep.subr.bf16.mxu0 0
    %2459 = vmatpush1.bf16.msra.mxu0 0
    %2460 = vmatprep.subr.bf16.mxu0 0
    %2461 = vmatpush1.bf16.msra.mxu0 0
    %2462 = vmatprep.subr.bf16.mxu0 0
    %2463 = vmatpush1.bf16.msra.mxu0 0
    %2464 = vmatprep.subr.bf16.mxu0 0
    %2465 = vmatpush1.bf16.msra.mxu0 0
    %2466 = vmatprep.subr.bf16.mxu0 0
    %2467 = vmatpush1.bf16.msra.mxu0 0
    %2468 = vmatprep.subr.bf16.mxu0 0
    %2469 = vmatpush1.bf16.msra.mxu0 0
    %2470 = vmatprep.subr.bf16.mxu0 0
    %2471 = vmatpush1.bf16.msra.mxu0 0
    %2472 = vmatprep.subr.bf16.mxu0 0
    %2473 = vmatpush1.bf16.msra.mxu0 0
    %2474 = vmatprep.subr.bf16.mxu0 0
    %2475 = vmatpush1.bf16.msra.mxu0 0
    %2476 = vmatprep.subr.bf16.mxu0 0
    %2477 = vmatpush1.bf16.msra.mxu0 0
    %2478 = vmatprep.subr.bf16.mxu0 0
    %2479 = vmatpush1.bf16.msra.mxu0 0
    %2480 = vmatprep.subr.bf16.mxu0 0
    %2481 = vmatpush1.bf16.msra.mxu0 0
    %2482 = vmatprep.subr.bf16.mxu0 0
    %2483 = vmatpush1.bf16.msra.mxu0 0
    %2484 = vmatprep.subr.bf16.mxu0 0
    %2485 = vmatpush1.bf16.msra.mxu0 0
    %2486 = vmatprep.mubr.bf16.mxu0 0
    %2487 = vmatmul.mubr.bf16.gmra.mrb[0].mxu0 %v2452
    %v2488 = vpop.f32.mrb[0].mxu0
    %v2489 = vadd.f32 %v2437, %v2488
    %v2490 = vpop.f32.mrb[0].mxu0
    %v2491 = vpop.f32.mrb[0].mxu0
    %v2492 = vadd.f32 %v2437, %v2491
    %v2493 = vpop.f32.mrb[0].mxu0
    %2494 = vdwg.mxu0
    %v2497 = vcombine.high %v2489, %v2489
    %v2499 = vunpack.c.l.s4 1983009808
    %v2500 = vunpack.c.0.s8 %v2499
    %v2501 = vlaneseq
    %v2502 = vshrl.u32 %v2501, 7
    %v2503 = vsub.s32 %v2500, %v2502
    %v2504 = vrot.slane %v2489, %v2503
    %v2506 = vunpack.c.l.s4 1983009808
    %v2507 = vunpack.c.0.s8 %v2506
    %v2508 = vlaneseq
    %v2509 = vshrl.u32 %v2508, 7
    %v2510 = vsub.s32 %v2507, %v2509
    %v2511 = vrot.slane %v2497, %v2510
    %v2512 = vcombine.high %v2504, %v2504
    %v2513 = vcombine.high %v2511, %v2511
    %v2514 = vcombine.high %v2492, %v2492
    %v2516 = vunpack.c.l.s4 1983009808
    %v2517 = vunpack.c.0.s8 %v2516
    %v2518 = vlaneseq
    %v2519 = vshrl.u32 %v2518, 7
    %v2520 = vsub.s32 %v2517, %v2519
    %v2521 = vrot.slane %v2492, %v2520
    %v2523 = vunpack.c.l.s4 1983009808
    %v2524 = vunpack.c.0.s8 %v2523
    %v2525 = vlaneseq
    %v2526 = vshrl.u32 %v2525, 7
    %v2527 = vsub.s32 %v2524, %v2526
    %v2528 = vrot.slane %v2514, %v2527
    %v2529 = vcombine.high %v2521, %v2521
    %v2530 = vcombine.high %v2528, %v2528
    %v2539 = vadd.f32 %v1773, %v2504
    %v2540 = vadd.f32 %v1774, %v2512
    %v2541 = vadd.f32 %v1775, %v2511
    %v2542 = vadd.f32 %v1776, %v2513
    %v2543 = vadd.f32 %v1777, %v2521
    %v2544 = vadd.f32 %v1778, %v2529
    %v2545 = vadd.f32 %v1779, %v2528
    %v2546 = vadd.f32 %v1780, %v2530
    %s2547 = scalar_lea.vmem %s10, 1
    %v2548 = vld [vmem:[%s2547] sm:$0x1]
    %s2549 = scalar_lea.vmem %s11, 1
    %v2550 = vld [vmem:[%s2549] sm:$0x1]
    %v2559 = vcombine.low %v2539, %v2540
    %v2560 = vcombine.low %v2541, %v2542
    %v2562 = vunpack.c.l.s4 1983009808
    %v2563 = vunpack.c.0.s8 %v2562
    %v2564 = vlaneseq
    %v2565 = vshrl.u32 %v2564, 7
    %v2566 = vsub.s32 %v2563, %v2565
    %v2567 = vrot.slane %v2559, %v2566
    %v2569 = vunpack.c.l.s4 1983009808
    %v2570 = vunpack.c.0.s8 %v2569
    %v2571 = vlaneseq
    %v2572 = vshrl.u32 %v2571, 7
    %v2573 = vsub.s32 %v2570, %v2572
    %v2574 = vrot.slane %v2560, %v2573
    %v2575 = vcombine.low %v2567, %v2574
    %v2576 = vcombine.low %v2543, %v2544
    %v2577 = vcombine.low %v2545, %v2546
    %v2579 = vunpack.c.l.s4 1983009808
    %v2580 = vunpack.c.0.s8 %v2579
    %v2581 = vlaneseq
    %v2582 = vshrl.u32 %v2581, 7
    %v2583 = vsub.s32 %v2580, %v2582
    %v2584 = vrot.slane %v2576, %v2583
    %v2586 = vunpack.c.l.s4 1983009808
    %v2587 = vunpack.c.0.s8 %v2586
    %v2588 = vlaneseq
    %v2589 = vshrl.u32 %v2588, 7
    %v2590 = vsub.s32 %v2587, %v2589
    %v2591 = vrot.slane %v2577, %v2590
    %v2592 = vcombine.low %v2584, %v2591
    %v2595 = vsel %vm155, %v2575, 0.0
    %2596 = vadd.xlane.f32.xlu0 %v2595
    %v2597 = vpop.xlane.xlu0 %2596
    %v2598 = vsel %vm155, %v2592, 0.0
    %2599 = vadd.xlane.f32.xlu0 %v2598
    %v2600 = vpop.xlane.xlu0 %2599
    %v2601 = vmul.f32 %v2597, %v905
    %v2602 = vmul.f32 %v2600, %v905
    %v2603 = vmul.f32 %v2539, %v2539
    %v2604 = vmul.f32 %v2540, %v2540
    %v2605 = vmul.f32 %v2541, %v2541
    %v2606 = vmul.f32 %v2542, %v2542
    %v2607 = vmul.f32 %v2543, %v2543
    %v2608 = vmul.f32 %v2544, %v2544
    %v2609 = vmul.f32 %v2545, %v2545
    %v2610 = vmul.f32 %v2546, %v2546
    %v2619 = vcombine.low %v2603, %v2604
    %v2620 = vcombine.low %v2605, %v2606
    %v2622 = vunpack.c.l.s4 1983009808
    %v2623 = vunpack.c.0.s8 %v2622
    %v2624 = vlaneseq
    %v2625 = vshrl.u32 %v2624, 7
    %v2626 = vsub.s32 %v2623, %v2625
    %v2627 = vrot.slane %v2619, %v2626
    %v2629 = vunpack.c.l.s4 1983009808
    %v2630 = vunpack.c.0.s8 %v2629
    %v2631 = vlaneseq
    %v2632 = vshrl.u32 %v2631, 7
    %v2633 = vsub.s32 %v2630, %v2632
    %v2634 = vrot.slane %v2620, %v2633
    %v2635 = vcombine.low %v2627, %v2634
    %v2636 = vcombine.low %v2607, %v2608
    %v2637 = vcombine.low %v2609, %v2610
    %v2639 = vunpack.c.l.s4 1983009808
    %v2640 = vunpack.c.0.s8 %v2639
    %v2641 = vlaneseq
    %v2642 = vshrl.u32 %v2641, 7
    %v2643 = vsub.s32 %v2640, %v2642
    %v2644 = vrot.slane %v2636, %v2643
    %v2646 = vunpack.c.l.s4 1983009808
    %v2647 = vunpack.c.0.s8 %v2646
    %v2648 = vlaneseq
    %v2649 = vshrl.u32 %v2648, 7
    %v2650 = vsub.s32 %v2647, %v2649
    %v2651 = vrot.slane %v2637, %v2650
    %v2652 = vcombine.low %v2644, %v2651
    %v2655 = vsel %vm155, %v2635, 0.0
    %2656 = vadd.xlane.f32.xlu0 %v2655
    %v2657 = vpop.xlane.xlu0 %2656
    %v2658 = vsel %vm155, %v2652, 0.0
    %2659 = vadd.xlane.f32.xlu0 %v2658
    %v2660 = vpop.xlane.xlu0 %2659
    %v2661 = vmul.f32 %v2657, %v905
    %v2662 = vmul.f32 %v2660, %v905
    %v2663 = vmul.f32 %v2601, %v2601
    %v2664 = vmul.f32 %v2602, %v2602
    %v2665 = vsub.f32 %v2661, %v2663
    %v2666 = vsub.f32 %v2662, %v2664
    %v2670 = vunpack.c.l.s4 269488144
    %v2671 = vunpack.c.0.s8 %v2670
    %v2672 = vlaneseq
    %v2673 = vshrl.u32 %v2672, 7
    %v2674 = vsub.s32 %v2671, %v2673
    %v2675 = vrot.slane %v2601, %v2674
    %v2677 = vunpack.c.l.s4 842150450
    %v2678 = vunpack.c.0.s8 %v2677
    %v2679 = vlaneseq
    %v2680 = vshrl.u32 %v2679, 7
    %v2681 = vsub.s32 %v2678, %v2680
    %v2682 = vrot.slane %v2601, %v2681
    %v2684 = vunpack.c.l.s4 1414812756
    %v2685 = vunpack.c.0.s8 %v2684
    %v2686 = vlaneseq
    %v2687 = vshrl.u32 %v2686, 7
    %v2688 = vsub.s32 %v2685, %v2687
    %v2689 = vrot.slane %v2601, %v2688
    %v2691 = vunpack.c.l.s4 1987475062
    %v2692 = vunpack.c.0.s8 %v2691
    %v2693 = vlaneseq
    %v2694 = vshrl.u32 %v2693, 7
    %v2695 = vsub.s32 %v2692, %v2694
    %v2696 = vrot.slane %v2601, %v2695
    %v2698 = vunpack.c.l.s4 269488144
    %v2699 = vunpack.c.0.s8 %v2698
    %v2700 = vlaneseq
    %v2701 = vshrl.u32 %v2700, 7
    %v2702 = vsub.s32 %v2699, %v2701
    %v2703 = vrot.slane %v2602, %v2702
    %v2705 = vunpack.c.l.s4 842150450
    %v2706 = vunpack.c.0.s8 %v2705
    %v2707 = vlaneseq
    %v2708 = vshrl.u32 %v2707, 7
    %v2709 = vsub.s32 %v2706, %v2708
    %v2710 = vrot.slane %v2602, %v2709
    %v2712 = vunpack.c.l.s4 1414812756
    %v2713 = vunpack.c.0.s8 %v2712
    %v2714 = vlaneseq
    %v2715 = vshrl.u32 %v2714, 7
    %v2716 = vsub.s32 %v2713, %v2715
    %v2717 = vrot.slane %v2602, %v2716
    %v2719 = vunpack.c.l.s4 1987475062
    %v2720 = vunpack.c.0.s8 %v2719
    %v2721 = vlaneseq
    %v2722 = vshrl.u32 %v2721, 7
    %v2723 = vsub.s32 %v2720, %v2722
    %v2724 = vrot.slane %v2602, %v2723
    %v2733 = vsub.f32 %v2539, %v2675
    %v2734 = vsub.f32 %v2540, %v2682
    %v2735 = vsub.f32 %v2541, %v2689
    %v2736 = vsub.f32 %v2542, %v2696
    %v2737 = vsub.f32 %v2543, %v2703
    %v2738 = vsub.f32 %v2544, %v2710
    %v2739 = vsub.f32 %v2545, %v2717
    %v2740 = vsub.f32 %v2546, %v2724
    %v2741 = vadd.f32 %v2665, 1e-05
    %v2742 = vadd.f32 %v2666, 1e-05
    %v2743 = vrsqrt.pop %v2741
    %v2744 = vrsqrt.pop %v2742
    %v2748 = vunpack.c.l.s4 269488144
    %v2749 = vunpack.c.0.s8 %v2748
    %v2750 = vlaneseq
    %v2751 = vshrl.u32 %v2750, 7
    %v2752 = vsub.s32 %v2749, %v2751
    %v2753 = vrot.slane %v2743, %v2752
    %v2755 = vunpack.c.l.s4 842150450
    %v2756 = vunpack.c.0.s8 %v2755
    %v2757 = vlaneseq
    %v2758 = vshrl.u32 %v2757, 7
    %v2759 = vsub.s32 %v2756, %v2758
    %v2760 = vrot.slane %v2743, %v2759
    %v2762 = vunpack.c.l.s4 1414812756
    %v2763 = vunpack.c.0.s8 %v2762
    %v2764 = vlaneseq
    %v2765 = vshrl.u32 %v2764, 7
    %v2766 = vsub.s32 %v2763, %v2765
    %v2767 = vrot.slane %v2743, %v2766
    %v2769 = vunpack.c.l.s4 1987475062
    %v2770 = vunpack.c.0.s8 %v2769
    %v2771 = vlaneseq
    %v2772 = vshrl.u32 %v2771, 7
    %v2773 = vsub.s32 %v2770, %v2772
    %v2774 = vrot.slane %v2743, %v2773
    %v2776 = vunpack.c.l.s4 269488144
    %v2777 = vunpack.c.0.s8 %v2776
    %v2778 = vlaneseq
    %v2779 = vshrl.u32 %v2778, 7
    %v2780 = vsub.s32 %v2777, %v2779
    %v2781 = vrot.slane %v2744, %v2780
    %v2783 = vunpack.c.l.s4 842150450
    %v2784 = vunpack.c.0.s8 %v2783
    %v2785 = vlaneseq
    %v2786 = vshrl.u32 %v2785, 7
    %v2787 = vsub.s32 %v2784, %v2786
    %v2788 = vrot.slane %v2744, %v2787
    %v2790 = vunpack.c.l.s4 1414812756
    %v2791 = vunpack.c.0.s8 %v2790
    %v2792 = vlaneseq
    %v2793 = vshrl.u32 %v2792, 7
    %v2794 = vsub.s32 %v2791, %v2793
    %v2795 = vrot.slane %v2744, %v2794
    %v2797 = vunpack.c.l.s4 1987475062
    %v2798 = vunpack.c.0.s8 %v2797
    %v2799 = vlaneseq
    %v2800 = vshrl.u32 %v2799, 7
    %v2801 = vsub.s32 %v2798, %v2800
    %v2802 = vrot.slane %v2744, %v2801
    %v2811 = vmul.f32 %v2733, %v2753
    %v2812 = vmul.f32 %v2734, %v2760
    %v2813 = vmul.f32 %v2735, %v2767
    %v2814 = vmul.f32 %v2736, %v2774
    %v2815 = vmul.f32 %v2737, %v2781
    %v2816 = vmul.f32 %v2738, %v2788
    %v2817 = vmul.f32 %v2739, %v2795
    %v2818 = vmul.f32 %v2740, %v2802
    %v2820 = vlaneseq
    %v2821 = vshrl.u32 %v2820, 7
    %v2822 = vsub.s32 0, %v2821
    %v2823 = vrot.slane %v2548, %v2822
    %v2824 = vcombine.high %v2823, %v2823
    %v2826 = vunpack.c.l.s4 1983009808
    %v2827 = vunpack.c.0.s8 %v2826
    %v2828 = vlaneseq
    %v2829 = vshrl.u32 %v2828, 7
    %v2830 = vsub.s32 %v2827, %v2829
    %v2831 = vrot.slane %v2823, %v2830
    %v2833 = vunpack.c.l.s4 1983009808
    %v2834 = vunpack.c.0.s8 %v2833
    %v2835 = vlaneseq
    %v2836 = vshrl.u32 %v2835, 7
    %v2837 = vsub.s32 %v2834, %v2836
    %v2838 = vrot.slane %v2824, %v2837
    %v2839 = vcombine.high %v2831, %v2831
    %v2840 = vcombine.high %v2838, %v2838
    %v2845 = vmul.f32 %v2811, %v2831
    %v2846 = vmul.f32 %v2812, %v2839
    %v2847 = vmul.f32 %v2813, %v2838
    %v2848 = vmul.f32 %v2814, %v2840
    %v2849 = vmul.f32 %v2815, %v2831
    %v2850 = vmul.f32 %v2816, %v2839
    %v2851 = vmul.f32 %v2817, %v2838
    %v2852 = vmul.f32 %v2818, %v2840
    %v2854 = vlaneseq
    %v2855 = vshrl.u32 %v2854, 7
    %v2856 = vsub.s32 0, %v2855
    %v2857 = vrot.slane %v2550, %v2856
    %v2858 = vcombine.high %v2857, %v2857
    %v2860 = vunpack.c.l.s4 1983009808
    %v2861 = vunpack.c.0.s8 %v2860
    %v2862 = vlaneseq
    %v2863 = vshrl.u32 %v2862, 7
    %v2864 = vsub.s32 %v2861, %v2863
    %v2865 = vrot.slane %v2857, %v2864
    %v2867 = vunpack.c.l.s4 1983009808
    %v2868 = vunpack.c.0.s8 %v2867
    %v2869 = vlaneseq
    %v2870 = vshrl.u32 %v2869, 7
    %v2871 = vsub.s32 %v2868, %v2870
    %v2872 = vrot.slane %v2858, %v2871
    %v2873 = vcombine.high %v2865, %v2865
    %v2874 = vcombine.high %v2872, %v2872
    %v2879 = vadd.f32 %v2845, %v2865
    %v2880 = vadd.f32 %v2846, %v2873
    %v2881 = vadd.f32 %v2847, %v2872
    %v2882 = vadd.f32 %v2848, %v2874
    %v2883 = vadd.f32 %v2849, %v2865
    %v2884 = vadd.f32 %v2850, %v2873
    %v2885 = vadd.f32 %v2851, %v2872
    %v2886 = vadd.f32 %v2852, %v2874
    %v2895 = vcombine.low %v2879, %v2880
    %v2896 = vcombine.low %v2881, %v2882
    %v2898 = vunpack.c.l.s4 1983009808
    %v2899 = vunpack.c.0.s8 %v2898
    %v2900 = vlaneseq
    %v2901 = vshrl.u32 %v2900, 7
    %v2902 = vsub.s32 %v2899, %v2901
    %v2903 = vrot.slane %v2895, %v2902
    %v2905 = vunpack.c.l.s4 1983009808
    %v2906 = vunpack.c.0.s8 %v2905
    %v2907 = vlaneseq
    %v2908 = vshrl.u32 %v2907, 7
    %v2909 = vsub.s32 %v2906, %v2908
    %v2910 = vrot.slane %v2896, %v2909
    %v2911 = vcombine.low %v2903, %v2910
    %v2912 = vcombine.low %v2883, %v2884
    %v2913 = vcombine.low %v2885, %v2886
    %v2915 = vunpack.c.l.s4 1983009808
    %v2916 = vunpack.c.0.s8 %v2915
    %v2917 = vlaneseq
    %v2918 = vshrl.u32 %v2917, 7
    %v2919 = vsub.s32 %v2916, %v2918
    %v2920 = vrot.slane %v2912, %v2919
    %v2922 = vunpack.c.l.s4 1983009808
    %v2923 = vunpack.c.0.s8 %v2922
    %v2924 = vlaneseq
    %v2925 = vshrl.u32 %v2924, 7
    %v2926 = vsub.s32 %v2923, %v2925
    %v2927 = vrot.slane %v2913, %v2926
    %v2928 = vcombine.low %v2920, %v2927
    %v2931 = vpack.c.bf16 %v2928, %v2911
    %s2932 = scalar_lea.vmem %s6, 16
    %v2933 = vld [vmem:[%s2932] sm:$0xf]
    %v2934 = vld [vmem:[%s2932 + $0x4] sm:$0xf]
    %v2935 = vld [vmem:[%s2932 + $0x8] sm:$0xf]
    %v2936 = vld [vmem:[%s2932 + $0xc] sm:$0xf]
    %s2937 = scalar_lea.vmem %s7, 1
    %v2938 = vld [vmem:[%s2937] sm:$0x1]
    %v2940 = vlaneseq
    %v2941 = vshrl.u32 %v2940, 7
    %v2942 = vsub.s32 0, %v2941
    %v2943 = vrot.slane %v2938, %v2942
    %v2949 = vunpack.c.l.b16 %v2933
    %v2950 = vunpack.c.l.b16 %v2934
    %v2951 = vunpack.c.l.b16 %v2935
    %v2952 = vunpack.c.l.b16 %v2936
    %v2953 = vpack.c.b16 %v2950, %v2949
    %v2954 = vpack.c.b16 %v2952, %v2951
    %v2958 = vsel %vm155, %v2931, 0
    %2960 = vmatprep.subr.bf16.mxu0 0
    %2961 = vmatpush1.bf16.msra.mxu0 %v2953
    %2962 = vmatprep.subr.bf16.mxu0 0
    %2963 = vmatpush1.bf16.msra.mxu0 %v2954
    %2964 = vmatprep.subr.bf16.mxu0 0
    %2965 = vmatpush1.bf16.msra.mxu0 0
    %2966 = vmatprep.subr.bf16.mxu0 0
    %2967 = vmatpush1.bf16.msra.mxu0 0
    %2968 = vmatprep.subr.bf16.mxu0 0
    %2969 = vmatpush1.bf16.msra.mxu0 0
    %2970 = vmatprep.subr.bf16.mxu0 0
    %2971 = vmatpush1.bf16.msra.mxu0 0
    %2972 = vmatprep.subr.bf16.mxu0 0
    %2973 = vmatpush1.bf16.msra.mxu0 0
    %2974 = vmatprep.subr.bf16.mxu0 0
    %2975 = vmatpush1.bf16.msra.mxu0 0
    %2976 = vmatprep.subr.bf16.mxu0 0
    %2977 = vmatpush1.bf16.msra.mxu0 0
    %2978 = vmatprep.subr.bf16.mxu0 0
    %2979 = vmatpush1.bf16.msra.mxu0 0
    %2980 = vmatprep.subr.bf16.mxu0 0
    %2981 = vmatpush1.bf16.msra.mxu0 0
    %2982 = vmatprep.subr.bf16.mxu0 0
    %2983 = vmatpush1.bf16.msra.mxu0 0
    %2984 = vmatprep.subr.bf16.mxu0 0
    %2985 = vmatpush1.bf16.msra.mxu0 0
    %2986 = vmatprep.subr.bf16.mxu0 0
    %2987 = vmatpush1.bf16.msra.mxu0 0
    %2988 = vmatprep.subr.bf16.mxu0 0
    %2989 = vmatpush1.bf16.msra.mxu0 0
    %2990 = vmatprep.subr.bf16.mxu0 0
    %2991 = vmatpush1.bf16.msra.mxu0 0
    %2992 = vmatprep.mubr.bf16.mxu0 0
    %2993 = vmatmul.mubr.bf16.gmra.mrb[0].mxu0 %v2958
    %v2994 = vpop.f32.mrb[0].mxu0
    %v2995 = vadd.f32 %v2943, %v2994
    %v2996 = vpop.f32.mrb[0].mxu0
    %v2997 = vpop.f32.mrb[0].mxu0
    %v2998 = vadd.f32 %v2943, %v2997
    %v2999 = vpop.f32.mrb[0].mxu0
    %3000 = vdwg.mxu0
    %v3001 = vmax.f32 %v2995, 0.0
    %v3002 = vmax.f32 %v2998, 0.0
    %v3003 = vpack.c.bf16 %v3002, %v3001
    %s3004 = scalar_lea.vmem %s8, 32
    %v3005 = vld [vmem:[%s3004] sm:$0xf]
    %v3006 = vld [vmem:[%s3004 + $0x4] sm:$0xf]
    %v3007 = vld [vmem:[%s3004 + $0x8] sm:$0xf]
    %v3008 = vld [vmem:[%s3004 + $0xc] sm:$0xf]
    %v3009 = vld [vmem:[%s3004 + $0x10] sm:$0xf]
    %v3010 = vld [vmem:[%s3004 + $0x14] sm:$0xf]
    %v3011 = vld [vmem:[%s3004 + $0x18] sm:$0xf]
    %v3012 = vld [vmem:[%s3004 + $0x1c] sm:$0xf]
    %s3013 = scalar_lea.vmem %s9, 1
    %v3014 = vld [vmem:[%s3013] sm:$0x1]
    %v3016 = vlaneseq
    %v3017 = vshrl.u32 %v3016, 7
    %v3018 = vsub.s32 0, %v3017
    %v3019 = vrot.slane %v3014, %v3018
    %v3029 = vunpack.c.l.b16 %v3005
    %v3030 = vunpack.c.l.b16 %v3006
    %v3031 = vunpack.c.l.b16 %v3007
    %v3032 = vunpack.c.l.b16 %v3008
    %v3033 = vunpack.c.l.b16 %v3009
    %v3034 = vunpack.c.l.b16 %v3010
    %v3035 = vunpack.c.l.b16 %v3011
    %v3036 = vunpack.c.l.b16 %v3012
    %v3037 = vpack.c.b16 %v3030, %v3029
    %v3038 = vpack.c.b16 %v3032, %v3031
    %v3039 = vpack.c.b16 %v3034, %v3033
    %v3040 = vpack.c.b16 %v3036, %v3035
    %v3046 = vsel %vm1346, %v3003, 0
    %3048 = vmatprep.subr.bf16.mxu0 0
    %3049 = vmatpush1.bf16.msra.mxu0 %v3037
    %3050 = vmatprep.subr.bf16.mxu0 0
    %3051 = vmatpush1.bf16.msra.mxu0 %v3038
    %3052 = vmatprep.subr.bf16.mxu0 0
    %3053 = vmatpush1.bf16.msra.mxu0 %v3039
    %3054 = vmatprep.subr.bf16.mxu0 0
    %3055 = vmatpush1.bf16.msra.mxu0 %v3040
    %3056 = vmatprep.subr.bf16.mxu0 0
    %3057 = vmatpush1.bf16.msra.mxu0 0
    %3058 = vmatprep.subr.bf16.mxu0 0
    %3059 = vmatpush1.bf16.msra.mxu0 0
    %3060 = vmatprep.subr.bf16.mxu0 0
    %3061 = vmatpush1.bf16.msra.mxu0 0
    %3062 = vmatprep.subr.bf16.mxu0 0
    %3063 = vmatpush1.bf16.msra.mxu0 0
    %3064 = vmatprep.subr.bf16.mxu0 0
    %3065 = vmatpush1.bf16.msra.mxu0 0
    %3066 = vmatprep.subr.bf16.mxu0 0
    %3067 = vmatpush1.bf16.msra.mxu0 0
    %3068 = vmatprep.subr.bf16.mxu0 0
    %3069 = vmatpush1.bf16.msra.mxu0 0
    %3070 = vmatprep.subr.bf16.mxu0 0
    %3071 = vmatpush1.bf16.msra.mxu0 0
    %3072 = vmatprep.subr.bf16.mxu0 0
    %3073 = vmatpush1.bf16.msra.mxu0 0
    %3074 = vmatprep.subr.bf16.mxu0 0
    %3075 = vmatpush1.bf16.msra.mxu0 0
    %3076 = vmatprep.subr.bf16.mxu0 0
    %3077 = vmatpush1.bf16.msra.mxu0 0
    %3078 = vmatprep.subr.bf16.mxu0 0
    %3079 = vmatpush1.bf16.msra.mxu0 0
    %3080 = vmatprep.mubr.bf16.mxu0 0
    %3081 = vmatmul.mubr.bf16.gmra.mrb[0].mxu0 %v3046
    %v3082 = vpop.f32.mrb[0].mxu0
    %v3083 = vadd.f32 %v3019, %v3082
    %v3084 = vpop.f32.mrb[0].mxu0
    %v3085 = vpop.f32.mrb[0].mxu0
    %v3086 = vadd.f32 %v3019, %v3085
    %v3087 = vpop.f32.mrb[0].mxu0
    %3088 = vdwg.mxu0
    %v3091 = vcombine.high %v3083, %v3083
    %v3093 = vunpack.c.l.s4 1983009808
    %v3094 = vunpack.c.0.s8 %v3093
    %v3095 = vlaneseq
    %v3096 = vshrl.u32 %v3095, 7
    %v3097 = vsub.s32 %v3094, %v3096
    %v3098 = vrot.slane %v3083, %v3097
    %v3100 = vunpack.c.l.s4 1983009808
    %v3101 = vunpack.c.0.s8 %v3100
    %v3102 = vlaneseq
    %v3103 = vshrl.u32 %v3102, 7
    %v3104 = vsub.s32 %v3101, %v3103
    %v3105 = vrot.slane %v3091, %v3104
    %v3106 = vcombine.high %v3098, %v3098
    %v3107 = vcombine.high %v3105, %v3105
    %v3108 = vcombine.high %v3086, %v3086
    %v3110 = vunpack.c.l.s4 1983009808
    %v3111 = vunpack.c.0.s8 %v3110
    %v3112 = vlaneseq
    %v3113 = vshrl.u32 %v3112, 7
    %v3114 = vsub.s32 %v3111, %v3113
    %v3115 = vrot.slane %v3086, %v3114
    %v3117 = vunpack.c.l.s4 1983009808
    %v3118 = vunpack.c.0.s8 %v3117
    %v3119 = vlaneseq
    %v3120 = vshrl.u32 %v3119, 7
    %v3121 = vsub.s32 %v3118, %v3120
    %v3122 = vrot.slane %v3108, %v3121
    %v3123 = vcombine.high %v3115, %v3115
    %v3124 = vcombine.high %v3122, %v3122
    %v3133 = vadd.f32 %v2879, %v3098
    %v3134 = vadd.f32 %v2880, %v3106
    %v3135 = vadd.f32 %v2881, %v3105
    %v3136 = vadd.f32 %v2882, %v3107
    %v3137 = vadd.f32 %v2883, %v3115
    %v3138 = vadd.f32 %v2884, %v3123
    %v3139 = vadd.f32 %v2885, %v3122
    %v3140 = vadd.f32 %v2886, %v3124
    %s3141 = scalar_lea.vmem %s12, 1
    %v3142 = vld [vmem:[%s3141] sm:$0x1]
    %s3143 = scalar_lea.vmem %s13, 1
    %v3144 = vld [vmem:[%s3143] sm:$0x1]
    %v3153 = vcombine.low %v3133, %v3134
    %v3154 = vcombine.low %v3135, %v3136
    %v3156 = vunpack.c.l.s4 1983009808
    %v3157 = vunpack.c.0.s8 %v3156
    %v3158 = vlaneseq
    %v3159 = vshrl.u32 %v3158, 7
    %v3160 = vsub.s32 %v3157, %v3159
    %v3161 = vrot.slane %v3153, %v3160
    %v3163 = vunpack.c.l.s4 1983009808
    %v3164 = vunpack.c.0.s8 %v3163
    %v3165 = vlaneseq
    %v3166 = vshrl.u32 %v3165, 7
    %v3167 = vsub.s32 %v3164, %v3166
    %v3168 = vrot.slane %v3154, %v3167
    %v3169 = vcombine.low %v3161, %v3168
    %v3170 = vcombine.low %v3137, %v3138
    %v3171 = vcombine.low %v3139, %v3140
    %v3173 = vunpack.c.l.s4 1983009808
    %v3174 = vunpack.c.0.s8 %v3173
    %v3175 = vlaneseq
    %v3176 = vshrl.u32 %v3175, 7
    %v3177 = vsub.s32 %v3174, %v3176
    %v3178 = vrot.slane %v3170, %v3177
    %v3180 = vunpack.c.l.s4 1983009808
    %v3181 = vunpack.c.0.s8 %v3180
    %v3182 = vlaneseq
    %v3183 = vshrl.u32 %v3182, 7
    %v3184 = vsub.s32 %v3181, %v3183
    %v3185 = vrot.slane %v3171, %v3184
    %v3186 = vcombine.low %v3178, %v3185
    %v3189 = vsel %vm155, %v3169, 0.0
    %3190 = vadd.xlane.f32.xlu0 %v3189
    %v3191 = vpop.xlane.xlu0 %3190
    %v3192 = vsel %vm155, %v3186, 0.0
    %3193 = vadd.xlane.f32.xlu0 %v3192
    %v3194 = vpop.xlane.xlu0 %3193
    %v3195 = vmul.f32 %v3191, %v905
    %v3196 = vmul.f32 %v3194, %v905
    %v3197 = vmul.f32 %v3133, %v3133
    %v3198 = vmul.f32 %v3134, %v3134
    %v3199 = vmul.f32 %v3135, %v3135
    %v3200 = vmul.f32 %v3136, %v3136
    %v3201 = vmul.f32 %v3137, %v3137
    %v3202 = vmul.f32 %v3138, %v3138
    %v3203 = vmul.f32 %v3139, %v3139
    %v3204 = vmul.f32 %v3140, %v3140
    %v3213 = vcombine.low %v3197, %v3198
    %v3214 = vcombine.low %v3199, %v3200
    %v3216 = vunpack.c.l.s4 1983009808
    %v3217 = vunpack.c.0.s8 %v3216
    %v3218 = vlaneseq
    %v3219 = vshrl.u32 %v3218, 7
    %v3220 = vsub.s32 %v3217, %v3219
    %v3221 = vrot.slane %v3213, %v3220
    %v3223 = vunpack.c.l.s4 1983009808
    %v3224 = vunpack.c.0.s8 %v3223
    %v3225 = vlaneseq
    %v3226 = vshrl.u32 %v3225, 7
    %v3227 = vsub.s32 %v3224, %v3226
    %v3228 = vrot.slane %v3214, %v3227
    %v3229 = vcombine.low %v3221, %v3228
    %v3230 = vcombine.low %v3201, %v3202
    %v3231 = vcombine.low %v3203, %v3204
    %v3233 = vunpack.c.l.s4 1983009808
    %v3234 = vunpack.c.0.s8 %v3233
    %v3235 = vlaneseq
    %v3236 = vshrl.u32 %v3235, 7
    %v3237 = vsub.s32 %v3234, %v3236
    %v3238 = vrot.slane %v3230, %v3237
    %v3240 = vunpack.c.l.s4 1983009808
    %v3241 = vunpack.c.0.s8 %v3240
    %v3242 = vlaneseq
    %v3243 = vshrl.u32 %v3242, 7
    %v3244 = vsub.s32 %v3241, %v3243
    %v3245 = vrot.slane %v3231, %v3244
    %v3246 = vcombine.low %v3238, %v3245
    %v3249 = vsel %vm155, %v3229, 0.0
    %3250 = vadd.xlane.f32.xlu0 %v3249
    %v3251 = vpop.xlane.xlu0 %3250
    %v3252 = vsel %vm155, %v3246, 0.0
    %3253 = vadd.xlane.f32.xlu0 %v3252
    %v3254 = vpop.xlane.xlu0 %3253
    %v3255 = vmul.f32 %v3251, %v905
    %v3256 = vmul.f32 %v3254, %v905
    %v3257 = vmul.f32 %v3195, %v3195
    %v3258 = vmul.f32 %v3196, %v3196
    %v3259 = vsub.f32 %v3255, %v3257
    %v3260 = vsub.f32 %v3256, %v3258
    %v3264 = vunpack.c.l.s4 269488144
    %v3265 = vunpack.c.0.s8 %v3264
    %v3266 = vlaneseq
    %v3267 = vshrl.u32 %v3266, 7
    %v3268 = vsub.s32 %v3265, %v3267
    %v3269 = vrot.slane %v3195, %v3268
    %v3271 = vunpack.c.l.s4 842150450
    %v3272 = vunpack.c.0.s8 %v3271
    %v3273 = vlaneseq
    %v3274 = vshrl.u32 %v3273, 7
    %v3275 = vsub.s32 %v3272, %v3274
    %v3276 = vrot.slane %v3195, %v3275
    %v3278 = vunpack.c.l.s4 1414812756
    %v3279 = vunpack.c.0.s8 %v3278
    %v3280 = vlaneseq
    %v3281 = vshrl.u32 %v3280, 7
    %v3282 = vsub.s32 %v3279, %v3281
    %v3283 = vrot.slane %v3195, %v3282
    %v3285 = vunpack.c.l.s4 1987475062
    %v3286 = vunpack.c.0.s8 %v3285
    %v3287 = vlaneseq
    %v3288 = vshrl.u32 %v3287, 7
    %v3289 = vsub.s32 %v3286, %v3288
    %v3290 = vrot.slane %v3195, %v3289
    %v3292 = vunpack.c.l.s4 269488144
    %v3293 = vunpack.c.0.s8 %v3292
    %v3294 = vlaneseq
    %v3295 = vshrl.u32 %v3294, 7
    %v3296 = vsub.s32 %v3293, %v3295
    %v3297 = vrot.slane %v3196, %v3296
    %v3299 = vunpack.c.l.s4 842150450
    %v3300 = vunpack.c.0.s8 %v3299
    %v3301 = vlaneseq
    %v3302 = vshrl.u32 %v3301, 7
    %v3303 = vsub.s32 %v3300, %v3302
    %v3304 = vrot.slane %v3196, %v3303
    %v3306 = vunpack.c.l.s4 1414812756
    %v3307 = vunpack.c.0.s8 %v3306
    %v3308 = vlaneseq
    %v3309 = vshrl.u32 %v3308, 7
    %v3310 = vsub.s32 %v3307, %v3309
    %v3311 = vrot.slane %v3196, %v3310
    %v3313 = vunpack.c.l.s4 1987475062
    %v3314 = vunpack.c.0.s8 %v3313
    %v3315 = vlaneseq
    %v3316 = vshrl.u32 %v3315, 7
    %v3317 = vsub.s32 %v3314, %v3316
    %v3318 = vrot.slane %v3196, %v3317
    %v3327 = vsub.f32 %v3133, %v3269
    %v3328 = vsub.f32 %v3134, %v3276
    %v3329 = vsub.f32 %v3135, %v3283
    %v3330 = vsub.f32 %v3136, %v3290
    %v3331 = vsub.f32 %v3137, %v3297
    %v3332 = vsub.f32 %v3138, %v3304
    %v3333 = vsub.f32 %v3139, %v3311
    %v3334 = vsub.f32 %v3140, %v3318
    %v3335 = vadd.f32 %v3259, 1e-05
    %v3336 = vadd.f32 %v3260, 1e-05
    %v3337 = vrsqrt.pop %v3335
    %v3338 = vrsqrt.pop %v3336
    %v3342 = vunpack.c.l.s4 269488144
    %v3343 = vunpack.c.0.s8 %v3342
    %v3344 = vlaneseq
    %v3345 = vshrl.u32 %v3344, 7
    %v3346 = vsub.s32 %v3343, %v3345
    %v3347 = vrot.slane %v3337, %v3346
    %v3349 = vunpack.c.l.s4 842150450
    %v3350 = vunpack.c.0.s8 %v3349
    %v3351 = vlaneseq
    %v3352 = vshrl.u32 %v3351, 7
    %v3353 = vsub.s32 %v3350, %v3352
    %v3354 = vrot.slane %v3337, %v3353
    %v3356 = vunpack.c.l.s4 1414812756
    %v3357 = vunpack.c.0.s8 %v3356
    %v3358 = vlaneseq
    %v3359 = vshrl.u32 %v3358, 7
    %v3360 = vsub.s32 %v3357, %v3359
    %v3361 = vrot.slane %v3337, %v3360
    %v3363 = vunpack.c.l.s4 1987475062
    %v3364 = vunpack.c.0.s8 %v3363
    %v3365 = vlaneseq
    %v3366 = vshrl.u32 %v3365, 7
    %v3367 = vsub.s32 %v3364, %v3366
    %v3368 = vrot.slane %v3337, %v3367
    %v3370 = vunpack.c.l.s4 269488144
    %v3371 = vunpack.c.0.s8 %v3370
    %v3372 = vlaneseq
    %v3373 = vshrl.u32 %v3372, 7
    %v3374 = vsub.s32 %v3371, %v3373
    %v3375 = vrot.slane %v3338, %v3374
    %v3377 = vunpack.c.l.s4 842150450
    %v3378 = vunpack.c.0.s8 %v3377
    %v3379 = vlaneseq
    %v3380 = vshrl.u32 %v3379, 7
    %v3381 = vsub.s32 %v3378, %v3380
    %v3382 = vrot.slane %v3338, %v3381
    %v3384 = vunpack.c.l.s4 1414812756
    %v3385 = vunpack.c.0.s8 %v3384
    %v3386 = vlaneseq
    %v3387 = vshrl.u32 %v3386, 7
    %v3388 = vsub.s32 %v3385, %v3387
    %v3389 = vrot.slane %v3338, %v3388
    %v3391 = vunpack.c.l.s4 1987475062
    %v3392 = vunpack.c.0.s8 %v3391
    %v3393 = vlaneseq
    %v3394 = vshrl.u32 %v3393, 7
    %v3395 = vsub.s32 %v3392, %v3394
    %v3396 = vrot.slane %v3338, %v3395
    %v3405 = vmul.f32 %v3327, %v3347
    %v3406 = vmul.f32 %v3328, %v3354
    %v3407 = vmul.f32 %v3329, %v3361
    %v3408 = vmul.f32 %v3330, %v3368
    %v3409 = vmul.f32 %v3331, %v3375
    %v3410 = vmul.f32 %v3332, %v3382
    %v3411 = vmul.f32 %v3333, %v3389
    %v3412 = vmul.f32 %v3334, %v3396
    %v3414 = vlaneseq
    %v3415 = vshrl.u32 %v3414, 7
    %v3416 = vsub.s32 0, %v3415
    %v3417 = vrot.slane %v3142, %v3416
    %v3418 = vcombine.high %v3417, %v3417
    %v3420 = vunpack.c.l.s4 1983009808
    %v3421 = vunpack.c.0.s8 %v3420
    %v3422 = vlaneseq
    %v3423 = vshrl.u32 %v3422, 7
    %v3424 = vsub.s32 %v3421, %v3423
    %v3425 = vrot.slane %v3417, %v3424
    %v3427 = vunpack.c.l.s4 1983009808
    %v3428 = vunpack.c.0.s8 %v3427
    %v3429 = vlaneseq
    %v3430 = vshrl.u32 %v3429, 7
    %v3431 = vsub.s32 %v3428, %v3430
    %v3432 = vrot.slane %v3418, %v3431
    %v3433 = vcombine.high %v3425, %v3425
    %v3434 = vcombine.high %v3432, %v3432
    %v3439 = vmul.f32 %v3405, %v3425
    %v3440 = vmul.f32 %v3406, %v3433
    %v3441 = vmul.f32 %v3407, %v3432
    %v3442 = vmul.f32 %v3408, %v3434
    %v3443 = vmul.f32 %v3409, %v3425
    %v3444 = vmul.f32 %v3410, %v3433
    %v3445 = vmul.f32 %v3411, %v3432
    %v3446 = vmul.f32 %v3412, %v3434
    %v3448 = vlaneseq
    %v3449 = vshrl.u32 %v3448, 7
    %v3450 = vsub.s32 0, %v3449
    %v3451 = vrot.slane %v3144, %v3450
    %v3452 = vcombine.high %v3451, %v3451
    %v3454 = vunpack.c.l.s4 1983009808
    %v3455 = vunpack.c.0.s8 %v3454
    %v3456 = vlaneseq
    %v3457 = vshrl.u32 %v3456, 7
    %v3458 = vsub.s32 %v3455, %v3457
    %v3459 = vrot.slane %v3451, %v3458
    %v3461 = vunpack.c.l.s4 1983009808
    %v3462 = vunpack.c.0.s8 %v3461
    %v3463 = vlaneseq
    %v3464 = vshrl.u32 %v3463, 7
    %v3465 = vsub.s32 %v3462, %v3464
    %v3466 = vrot.slane %v3452, %v3465
    %v3467 = vcombine.high %v3459, %v3459
    %v3468 = vcombine.high %v3466, %v3466
    %v3473 = vadd.f32 %v3439, %v3459
    %v3474 = vadd.f32 %v3440, %v3467
    %v3475 = vadd.f32 %v3441, %v3466
    %v3476 = vadd.f32 %v3442, %v3468
    %v3477 = vadd.f32 %v3443, %v3459
    %v3478 = vadd.f32 %v3444, %v3467
    %v3479 = vadd.f32 %v3445, %v3466
    %v3480 = vadd.f32 %v3446, %v3468
    %vm3481 = vcmask 254976
    %3482 = vst.msk [vmem:[#allocation7] sm:$0x3] %vm3481, %v3473
    %3483 = vst.msk [vmem:[#allocation7 + $0x2] sm:$0x3] %vm3481, %v3474
    %3484 = vst.msk [vmem:[#allocation7 + $0x4] sm:$0x3] %vm3481, %v3475
    %3485 = vst.msk [vmem:[#allocation7 + $0x6] sm:$0x3] %vm3481, %v3476
    %3486 = vst.msk [vmem:[#allocation7 + $0x8] sm:$0x3] %vm3481, %v3477
    %3487 = vst.msk [vmem:[#allocation7 + $0xa] sm:$0x3] %vm3481, %v3478
    %3488 = vst.msk [vmem:[#allocation7 + $0xc] sm:$0x3] %vm3481, %v3479
    %3489 = vst.msk [vmem:[#allocation7 + $0xe] sm:$0x3] %vm3481, %v3480
    // Predicated region
    $region66: #{tpu_custom_call.1} parent=1 // pred_check
      _
    $region67: #{tpu_custom_call.1} parent=1 // pred_check_branch
      %3491 = sbr.rel (0) target = $region69
    $region68: #{tpu_custom_call.1} parent=1 // pred_region
      %s3493 = ssub.s32 256, 256
      %3494 = vsyncadd [#allocation4], %s3493
      %s3495 = sshll.u32 [#allocation7], 4
      %s3496 = int_to_ptr.vmem [resolvable:$true] %s3495
      %3501 = dma.vmem_to_hbm [thread:$0]  %s3496, 256, %s14, [#allocation4], 32, 32, 2
    $region69: #{tpu_custom_call.1} parent=1 // pred_fallthru
      _
    // Predicated region
    $region70: #{tpu_custom_call.1} parent=1 // pred_check
      _
    $region71: #{tpu_custom_call.1} parent=1 // pred_check_branch
      %3503 = sbr.rel (0) target = $region73
    $region72: #{tpu_custom_call.1} parent=1 // pred_region
      %3504 = dma.done [#allocation4], 256
    $region73: #{tpu_custom_call.1} parent=1 // pred_fallthru
      _
    %3505 = vsyncpa [#allocation3], 1
    %3506 = vsyncpa [#allocation6], 1
    %3507 = vsyncpa [#allocation4], 1

</llo_original>
